<compile_context>
chip_gen: v5e
topology: v5e:2x2
jax: 0.10.0
libtpu: 0.0.40
codegen_flags: <defaults>
</compile_context>

<pallas_src>
import math
import functools

import jax
import jax.numpy as jnp
from jax.experimental import pallas as pl
from jax.experimental.pallas import tpu as pltpu

_VMEM_LIMIT = 32 * 1024 * 1024      # safe on v5e / v6e / v7x
_MASK_VALUE = -1e30


def new_gelu(x):
    c = math.sqrt(2.0 / math.pi)
    return 0.5 * x * (1.0 + jnp.tanh(c * (x + 0.044715 * (x * x * x))))


# ---------------------------------------------------------------------------
# Kernel A: LayerNorm + QKV projection + partial RoPE (whole-width, no concat)
# ---------------------------------------------------------------------------
def _ln_qkv_rope_kernel(x_ref, lnw_ref, lnb_ref,
                        wq_ref, bq_ref, wk_ref, bk_ref, wv_ref, bv_ref,
                        rc_ref, rsp_ref, rsm_ref,
                        q_ref, k_ref, v_ref, *, eps, half):
    xb = x_ref[0]                                           # (TQ, D) f32
    mean = jnp.mean(xb, axis=-1, keepdims=True)
    var = jnp.mean(jnp.square(xb - mean), axis=-1, keepdims=True)
    xn = (xb - mean) * jax.lax.rsqrt(var + eps) * lnw_ref[...] + lnb_ref[...]
    xn_b = xn.astype(jnp.bfloat16)

    q = jnp.dot(xn_b, wq_ref[...], preferred_element_type=jnp.float32) + bq_ref[...]
    k = jnp.dot(xn_b, wk_ref[...], preferred_element_type=jnp.float32) + bk_ref[...]
    v = jnp.dot(xn_b, wv_ref[...], preferred_element_type=jnp.float32) + bv_ref[...]

    rc = rc_ref[...]                                        # (TQ, D) coefficient tables
    rsp = rsp_ref[...]
    rsm = rsm_ref[...]

    def rope(t):
        if half == 0:
            return t
        t_p = jnp.roll(t, -half, axis=-1)                   # t_p[j] = t[j + half]
        t_m = jnp.roll(t, half, axis=-1)                    # t_m[j] = t[j - half]
        return t * rc + t_p * rsp + t_m * rsm               # coeffs are 0 where invalid

    q_ref[0] = rope(q).astype(q_ref.dtype)
    k_ref[0] = rope(k).astype(k_ref.dtype)
    v_ref[0] = v.astype(v_ref.dtype)


# ---------------------------------------------------------------------------
# Kernel B: flash attention, online softmax over kv blocks, causal mask in-kernel
# ---------------------------------------------------------------------------
def _flash_attn_kernel(q_ref, k_ref, v_ref, o_ref, m_sc, l_sc, acc_sc,
                       *, scale, block_q, block_k):
    qi = pl.program_id(2)
    ki = pl.program_id(3)

    @pl.when(ki == 0)
    def _():
        m_sc[...] = jnp.full(m_sc.shape, -jnp.inf, m_sc.dtype)
        l_sc[...] = jnp.zeros(l_sc.shape, l_sc.dtype)
        acc_sc[...] = jnp.zeros(acc_sc.shape, acc_sc.dtype)

    # Skip kv blocks that lie entirely above the causal diagonal.
    @pl.when(ki * block_k <= qi * block_q + block_q - 1)
    def _():
        q = q_ref[0, 0]                                     # (TQ, hd) bf16
        k = k_ref[0, 0]                                     # (TK, hd) bf16
        v = v_ref[0, 0]                                     # (TK, hd) bf16
        s = jax.lax.dot_general(q, k, (((1,), (1,)), ((), ())),
                                preferred_element_type=jnp.float32) * scale
        row = qi * block_q + jax.lax.broadcasted_iota(jnp.int32, s.shape, 0)
        col = ki * block_k + jax.lax.broadcasted_iota(jnp.int32, s.shape, 1)
        s = jnp.where(col <= row, s, _MASK_VALUE)

        m_prev = m_sc[...]
        m_new = jnp.maximum(m_prev, jnp.max(s, axis=-1, keepdims=True))
        alpha = jnp.exp(m_prev - m_new)
        p = jnp.exp(s - m_new)
        l_sc[...] = alpha * l_sc[...] + jnp.sum(p, axis=-1, keepdims=True)
        acc_sc[...] = alpha * acc_sc[...] + jnp.dot(
            p.astype(v.dtype), v, preferred_element_type=jnp.float32)
        m_sc[...] = m_new

    @pl.when(ki == pl.num_programs(3) - 1)
    def _():
        inv_l = pl.reciprocal(l_sc[...], approx=True)
        o_ref[0, 0] = (acc_sc[...] * inv_l).astype(o_ref.dtype)


# ---------------------------------------------------------------------------
# Kernel C: attention dense projection + hidden-tiled MLP + parallel residual
# ---------------------------------------------------------------------------
def _dense_mlp_residual_kernel(x_ref, attn_ref, lnw_ref, lnb_ref,
                               wd_ref, bd_ref, w1_ref, b1_ref, w2_ref, b2_ref,
                               o_ref, acc_ref, xn_ref, *, eps):
    h = pl.program_id(2)

    @pl.when(h == 0)
    def _():
        xb = x_ref[0]                                       # (TQ, D) f32
        mean = jnp.mean(xb, axis=-1, keepdims=True)
        var = jnp.mean(jnp.square(xb - mean), axis=-1, keepdims=True)
        xn = (xb - mean) * jax.lax.rsqrt(var + eps) * lnw_ref[...] + lnb_ref[...]
        xn_ref[...] = xn.astype(xn_ref.dtype)
        dense = jnp.dot(attn_ref[0], wd_ref[...],
                        preferred_element_type=jnp.float32) + bd_ref[...]
        acc_ref[...] = dense + xb + b2_ref[...]             # attn-proj + residual + fc2 bias

    hid = jnp.dot(xn_ref[...], w1_ref[...],
                  preferred_element_type=jnp.float32) + b1_ref[...]
    hid = new_gelu(hid).astype(jnp.bfloat16)
    acc_ref[...] += jnp.dot(hid, w2_ref[...], preferred_element_type=jnp.float32)

    @pl.when(h == pl.num_programs(2) - 1)
    def _():
        o_ref[0] = acc_ref[...].astype(o_ref.dtype)


# ---------------------------------------------------------------------------
# Host-side helpers
# ---------------------------------------------------------------------------
def _rope_tables(T, num_heads, head_dim, rope_dims, base=10000.0):
    """Full-width (T, D) RoPE coefficient tables.

    rope(x)[t, j] = x[t, j]*rc[t, j] + x[t, j+half]*rsp[t, j] + x[t, j-half]*rsm[t, j]
    Partners are fetched with a full-width lane roll; coefficients are zero
    wherever a rolled partner would be invalid, so wrap-around never leaks.
    """
    half = rope_dims // 2
    rc_h = jnp.ones((T, head_dim), jnp.float32)
    rsp_h = jnp.zeros((T, head_dim), jnp.float32)
    rsm_h = jnp.zeros((T, head_dim), jnp.float32)
    if half > 0:
        pos = jnp.arange(T, dtype=jnp.float32)
        freqs = jnp.exp(-jnp.arange(half, dtype=jnp.float32) * (math.log(base) / half))
        theta = pos[:, None] * freqs[None, :]               # (T, half)
        cos, sin = jnp.cos(theta), jnp.sin(theta)
        rc_h = rc_h.at[:, :half].set(cos)
        rc_h = rc_h.at[:, half:2 * half].set(cos)
        rsp_h = rsp_h.at[:, :half].set(-sin)
        rsm_h = rsm_h.at[:, half:2 * half].set(sin)
    rc = jnp.tile(rc_h, (1, num_heads))
    rsp = jnp.tile(rsp_h, (1, num_heads))
    rsm = jnp.tile(rsm_h, (1, num_heads))
    return rc, rsp, rsm


def phi_block(x, params, *, num_heads, head_dim, rope_dims, eps,
              block_q=None, block_k=None, block_h=None, rope_base=10000.0):
    B, T, D = x.shape
    assert D == num_heads * head_dim
    assert rope_dims % 2 == 0, "partial RoPE width must be even"
    hidden = params["w1"].shape[1]

    bqt = block_q if block_q is not None else min(T, 256)
    bkt = block_k if block_k is not None else min(T, 256)
    bht = block_h if block_h is not None else min(hidden, 512)
    assert T % bqt == 0 and T % bkt == 0 and hidden % bht == 0
    nq, nk, nh = T // bqt, T // bkt, hidden // bht

    f32, bf16 = jnp.float32, jnp.bfloat16
    wq = params["wq"].astype(bf16)
    wk = params["wk"].astype(bf16)
    wv = params["wv"].astype(bf16)
    wd = params["wd"].astype(bf16)
    w1 = params["w1"].astype(bf16)
    w2 = params["w2"].astype(bf16)
    ln_w = params["ln_w"].astype(f32)
    ln_b = params["ln_b"].astype(f32)
    b_q = params["bq"].astype(f32)
    b_k = params["bk"].astype(f32)
    b_v = params["bv"].astype(f32)
    b_d = params["bd"].astype(f32)
    b_1 = params["b1"].astype(f32)
    b_2 = params["b2"].astype(f32)

    rc, rsp, rsm = _rope_tables(T, num_heads, head_dim, rope_dims, rope_base)

    # ------------------ A: LayerNorm + QKV + RoPE ---------------------------
    def const(shape):
        return pl.BlockSpec(shape, lambda b, qi, _n=len(shape): (0,) * _n)

    seq_tbl = pl.BlockSpec((bqt, D), lambda b, qi: (qi, 0))
    xspec = pl.BlockSpec((1, bqt, D), lambda b, qi: (b, qi, 0))

    q, k, v = pl.pallas_call(
        functools.partial(_ln_qkv_rope_kernel, eps=eps, half=rope_dims // 2),
        grid=(B, nq),
        in_specs=[xspec,
                  const((1, D)), const((1, D)),
                  const((D, D)), const((1, D)),
                  const((D, D)), const((1, D)),
                  const((D, D)), const((1, D)),
                  seq_tbl, seq_tbl, seq_tbl],
        out_specs=(xspec, xspec, xspec),
        out_shape=(jax.ShapeDtypeStruct((B, T, D), bf16),) * 3,
        compiler_params=pltpu.CompilerParams(
            dimension_semantics=("parallel", "parallel"),
            vmem_limit_bytes=_VMEM_LIMIT),
    )(x, ln_w, ln_b, wq, b_q, wk, b_k, wv, b_v, rc, rsp, rsm)

    # layout plumbing: split heads for the flash kernel
    def split_heads(t):
        return t.reshape(B, T, num_heads, head_dim).transpose(0, 2, 1, 3)

    qh, kh, vh = split_heads(q), split_heads(k), split_heads(v)

    # ------------------ B: flash attention ----------------------------------
    scale = math.sqrt(1.0 / head_dim)
    q_spec = pl.BlockSpec((1, 1, bqt, head_dim), lambda b, h, qi, ki: (b, h, qi, 0))
    kv_spec = pl.BlockSpec((1, 1, bkt, head_dim), lambda b, h, qi, ki: (b, h, ki, 0))

    attn_heads = pl.pallas_call(
        functools.partial(_flash_attn_kernel, scale=scale,
                          block_q=bqt, block_k=bkt),
        grid=(B, num_heads, nq, nk),
        in_specs=[q_spec, kv_spec, kv_spec],
        out_specs=q_spec,
        out_shape=jax.ShapeDtypeStruct((B, num_heads, T, head_dim), bf16),
        scratch_shapes=[pltpu.VMEM((bqt, 1), jnp.float32),
                        pltpu.VMEM((bqt, 1), jnp.float32),
                        pltpu.VMEM((bqt, head_dim), jnp.float32)],
        compiler_params=pltpu.CompilerParams(
            dimension_semantics=("parallel", "parallel", "parallel", "arbitrary"),
            vmem_limit_bytes=_VMEM_LIMIT),
    )(qh, kh, vh)

    attn = attn_heads.transpose(0, 2, 1, 3).reshape(B, T, D)

    # ------------------ C: dense proj + hidden-tiled MLP + residual ---------
    def const3(shape):
        return pl.BlockSpec(shape, lambda b, qi, h, _n=len(shape): (0,) * _n)

    xs3 = pl.BlockSpec((1, bqt, D), lambda b, qi, h: (b, qi, 0))

    out = pl.pallas_call(
        functools.partial(_dense_mlp_residual_kernel, eps=eps),
        grid=(B, nq, nh),
        in_specs=[xs3, xs3,
                  const3((1, D)), const3((1, D)),
                  const3((D, D)), const3((1, D)),
                  pl.BlockSpec((D, bht), lambda b, qi, h: (0, h)),
                  pl.BlockSpec((1, bht), lambda b, qi, h: (0, h)),
                  pl.BlockSpec((bht, D), lambda b, qi, h: (h, 0)),
                  const3((1, D))],
        out_specs=xs3,
        out_shape=jax.ShapeDtypeStruct((B, T, D), x.dtype),
        scratch_shapes=[pltpu.VMEM((bqt, D), jnp.float32),
                        pltpu.VMEM((bqt, D), jnp.bfloat16)],
        compiler_params=pltpu.CompilerParams(
            dimension_semantics=("parallel", "parallel", "arbitrary"),
            vmem_limit_bytes=_VMEM_LIMIT),
    )(x, attn, ln_w, ln_b, wd, b_d, w1, b_1, w2, b_2)

    return out


# ---------------- pure-JAX f32 reference (mirrors the PyTorch forward) ------
def phi_block_ref(x, params, mask, cos, sin, *, num_heads, head_dim, rope_dims, eps):
    B, T, D = x.shape
    mean = jnp.mean(x, axis=-1, keepdims=True)
    var = jnp.mean((x - mean) ** 2, axis=-1, keepdims=True)
    xn = (x - mean) / jnp.sqrt(var + eps) * params["ln_w"][0] + params["ln_b"][0]

    def lin(z, w, b):
        return jnp.einsum("btd,dk->btk", z, w) + b[0]

    def to_heads(z):
        return z.reshape(B, T, num_heads, head_dim).transpose(0, 2, 1, 3)

    q = to_heads(lin(xn, params["wq"], params["bq"]))
    k = to_heads(lin(xn, params["wk"], params["bk"]))
    v = to_heads(lin(xn, params["wv"], params["bv"]))

    half = rope_dims // 2

    def rope(z):
        x1 = z[..., :half]
        x2 = z[..., half:rope_dims]
        rest = z[..., rope_dims:]
        return jnp.concatenate([x1 * cos - x2 * sin, x1 * sin + x2 * cos, rest], axis=-1)

    q, k = rope(q), rope(k)
    scale = math.sqrt(1.0 / head_dim)
    scores = jnp.einsum("bhtd,bhsd->bhts", q, k) * scale + mask
    p = jax.nn.softmax(scores, axis=-1)
    out = jnp.einsum("bhts,bhsd->bhtd", p, v)
    out = out.transpose(0, 2, 1, 3).reshape(B, T, D)
    attn = lin(out, params["wd"], params["bd"])

    hid = new_gelu(lin(xn, params["w1"], params["b1"]))
    mlp = lin(hid, params["w2"], params["b2"])
    return attn + mlp + x


if __name__ == "__main__":
    # Small shapes consistent with the module: d_model=64, 4 heads (head_dim=16),
    # rotary_dim=0.4 -> rope dims = int(0.4*16) = 6, hidden = 4*d_model = 256.
    # T=32 with 16-row tiles exercises the flash kv loop and the hidden streaming.
    B, T, D = 2, 32, 64
    num_heads = 4
    head_dim = D // num_heads
    rope_dims = int(0.4 * head_dim)
    hidden = 4 * D
    eps = 1e-5

    key = jax.random.PRNGKey(0)
    ks = jax.random.split(key, 16)
    s = 0.02
    f32 = jnp.float32
    params = {
        "ln_w": (1.0 + 0.1 * jax.random.normal(ks[0], (1, D))).astype(f32),
        "ln_b": (0.1 * jax.random.normal(ks[1], (1, D))).astype(f32),
        "wq": (s * jax.random.normal(ks[2], (D, D))).astype(f32),
        "bq": (s * jax.random.normal(ks[3], (1, D))).astype(f32),
        "wk": (s * jax.random.normal(ks[4], (D, D))).astype(f32),
        "bk": (s * jax.random.normal(ks[5], (1, D))).astype(f32),
        "wv": (s * jax.random.normal(ks[6], (D, D))).astype(f32),
        "bv": (s * jax.random.normal(ks[7], (1, D))).astype(f32),
        "wd": (s * jax.random.normal(ks[8], (D, D))).astype(f32),
        "bd": (s * jax.random.normal(ks[9], (1, D))).astype(f32),
        "w1": (s * jax.random.normal(ks[10], (D, hidden))).astype(f32),
        "b1": (s * jax.random.normal(ks[11], (1, hidden))).astype(f32),
        "w2": (s * jax.random.normal(ks[12], (hidden, D))).astype(f32),
        "b2": (s * jax.random.normal(ks[13], (1, D))).astype(f32),
    }
    x = jax.random.normal(ks[14], (B, T, D), dtype=f32)

    run = jax.jit(functools.partial(
        phi_block, num_heads=num_heads, head_dim=head_dim,
        rope_dims=rope_dims, eps=eps, block_q=16, block_k=16, block_h=128))
    out = jax.block_until_ready(run(x, params))

    # reference RoPE tables (offset=0) exactly as RoPE.create_cos_sin_theta
    half = rope_dims // 2
    positions = jnp.arange(T, dtype=f32)
    freqs = jnp.exp(-jnp.arange(0.0, half, dtype=f32) * (math.log(10000.0) / half))
    theta = positions[:, None] * freqs[None, :]
    cos, sin = jnp.cos(theta), jnp.sin(theta)

    # additive causal mask (what Phi passes into the block)
    causal = jnp.tril(jnp.ones((T, T), dtype=bool))
    mask = jnp.where(causal, 0.0, -1e9).astype(f32)

    ref = jax.block_until_ready(
        phi_block_ref(x, params, mask, cos, sin, num_heads=num_heads,
                      head_dim=head_dim, rope_dims=rope_dims, eps=eps))

    assert out.shape == (B, T, D) and out.dtype == jnp.float32
    err = jnp.max(jnp.abs(out - ref))
    assert jnp.allclose(out, ref, atol=1e-2, rtol=1e-2), f"max abs err = {err}"
    print("KERNEL_OK")
</pallas_src>

<mosaic_0001>
module attributes {stable_mosaic.version = 11 : i64} {
  func.func @_flash_attn_kernel(%arg0: i32, %arg1: i32, %arg2: i32, %arg3: i32, %arg4: memref<1x1x16x16xbf16, #tpu.memory_space<vmem>>, %arg5: memref<1x1x16x16xbf16, #tpu.memory_space<vmem>>, %arg6: memref<1x1x16x16xbf16, #tpu.memory_space<vmem>>, %arg7: memref<1x1x16x16xbf16, #tpu.memory_space<vmem>>, %arg8: memref<16x1xf32, #tpu.memory_space<vmem>>, %arg9: memref<16x1xf32, #tpu.memory_space<vmem>>, %arg10: memref<16x16xf32, #tpu.memory_space<vmem>>) attributes {dimension_semantics = [#tpu.dimension_semantics<parallel>, #tpu.dimension_semantics<parallel>, #tpu.dimension_semantics<parallel>, #tpu.dimension_semantics<arbitrary>], iteration_bounds = array<i64: 2, 4, 2, 2>, scalar_prefetch = 0 : i64, scratch_operands = 3 : i64, tpu.core_type = #tpu.core_type<tc>, window_params = [{transform_indices = @transform_0, window_bounds = array<i64: 1, 1, 16, 16>}, {transform_indices = @transform_1, window_bounds = array<i64: 1, 1, 16, 16>}, {transform_indices = @transform_2, window_bounds = array<i64: 1, 1, 16, 16>}, {transform_indices = @transform_3, window_bounds = array<i64: 1, 1, 16, 16>}]} {
    %c0_i32 = arith.constant 0 : i32
    %0 = arith.cmpi eq, %arg3, %c0_i32 : i32
    %1 = arith.extui %0 : i1 to i32
    %c0_i32_0 = arith.constant 0 : i32
    %2 = arith.cmpi ne, %1, %c0_i32_0 : i32
    scf.if %2 {
      %cst = arith.constant 0xFF800000 : f32
      %13 = vector.broadcast %cst : f32 to vector<16x1xf32>
      %c0 = arith.constant 0 : index
      %c0_6 = arith.constant 0 : index
      %14 = vector.load %arg8[%c0, %c0_6] : memref<16x1xf32, #tpu.memory_space<vmem>>, vector<16x1xf32>
      tpu.vector_store %arg8[%c0, %c0_6], %13 {strides = array<i32>} : memref<16x1xf32, #tpu.memory_space<vmem>>, vector<16x1xf32>,
      %cst_7 = arith.constant 0.000000e+00 : f32
      %15 = vector.broadcast %cst_7 : f32 to vector<16x1xf32>
      %c0_8 = arith.constant 0 : index
      %c0_9 = arith.constant 0 : index
      %16 = vector.load %arg9[%c0_8, %c0_9] : memref<16x1xf32, #tpu.memory_space<vmem>>, vector<16x1xf32>
      tpu.vector_store %arg9[%c0_8, %c0_9], %15 {strides = array<i32>} : memref<16x1xf32, #tpu.memory_space<vmem>>, vector<16x1xf32>,
      %cst_10 = arith.constant 0.000000e+00 : f32
      %17 = vector.broadcast %cst_10 : f32 to vector<16x16xf32>
      %c0_11 = arith.constant 0 : index
      %c0_12 = arith.constant 0 : index
      %18 = vector.load %arg10[%c0_11, %c0_12] : memref<16x16xf32, #tpu.memory_space<vmem>>, vector<16x16xf32>
      tpu.vector_store %arg10[%c0_11, %c0_12], %17 {strides = array<i32>} : memref<16x16xf32, #tpu.memory_space<vmem>>, vector<16x16xf32>,
    } else {
    }
    %c16_i32 = arith.constant 16 : i32
    %3 = arith.muli %arg3, %c16_i32 : i32
    %c16_i32_1 = arith.constant 16 : i32
    %4 = arith.muli %arg2, %c16_i32_1 : i32
    %c16_i32_2 = arith.constant 16 : i32
    %5 = arith.addi %4, %c16_i32_2 : i32
    %c1_i32 = arith.constant 1 : i32
    %6 = arith.subi %5, %c1_i32 : i32
    %7 = arith.cmpi sle, %3, %6 : i32
    %8 = arith.extui %7 : i1 to i32
    %c0_i32_3 = arith.constant 0 : i32
    %9 = arith.cmpi ne, %8, %c0_i32_3 : i32
    scf.if %9 {
      %c0 = arith.constant 0 : index
      %c0_6 = arith.constant 0 : index
      %c0_7 = arith.constant 0 : index
      %c0_8 = arith.constant 0 : index
      %13 = vector.load %arg4[%c0, %c0_6, %c0_7, %c0_8] : memref<1x1x16x16xbf16, #tpu.memory_space<vmem>>, vector<1x1x16x16xbf16>
      %14 = vector.shape_cast %13 : vector<1x1x16x16xbf16> to vector<16x16xbf16>
      %c0_9 = arith.constant 0 : index
      %c0_10 = arith.constant 0 : index
      %c0_11 = arith.constant 0 : index
      %c0_12 = arith.constant 0 : index
      %15 = vector.load %arg5[%c0_9, %c0_10, %c0_11, %c0_12] : memref<1x1x16x16xbf16, #tpu.memory_space<vmem>>, vector<1x1x16x16xbf16>
      %16 = vector.shape_cast %15 : vector<1x1x16x16xbf16> to vector<16x16xbf16>
      %c0_13 = arith.constant 0 : index
      %c0_14 = arith.constant 0 : index
      %c0_15 = arith.constant 0 : index
      %c0_16 = arith.constant 0 : index
      %17 = vector.load %arg6[%c0_13, %c0_14, %c0_15, %c0_16] : memref<1x1x16x16xbf16, #tpu.memory_space<vmem>>, vector<1x1x16x16xbf16>
      %18 = vector.shape_cast %17 : vector<1x1x16x16xbf16> to vector<16x16xbf16>
      %cst = arith.constant dense<0.000000e+00> : vector<16x16xf32>
      %19 = tpu.matmul %14, %16, %cst {dimension_numbers = #tpu.dot_dimension_numbers<[1], [1], [0], [0], [0, 0, 1, 0], [], []>} : vector<16x16xbf16>, vector<16x16xbf16>, vector<16x16xf32> -> vector<16x16xf32>
      %cst_17 = arith.constant 2.500000e-01 : f32
      %20 = vector.broadcast %cst_17 : f32 to vector<16x16xf32>
      %21 = arith.mulf %19, %20 : vector<16x16xf32>
      %c16_i32_18 = arith.constant 16 : i32
      %22 = arith.muli %arg2, %c16_i32_18 : i32
      %23 = tpu.iota {dimensions = array<i32: 0>} : vector<16x16xi32>
      %24 = vector.broadcast %22 : i32 to vector<16x16xi32>
      %25 = arith.addi %24, %23 : vector<16x16xi32>
      %c16_i32_19 = arith.constant 16 : i32
      %26 = arith.muli %arg3, %c16_i32_19 : i32
      %27 = tpu.iota {dimensions = array<i32: 1>} : vector<16x16xi32>
      %28 = vector.broadcast %26 : i32 to vector<16x16xi32>
      %29 = arith.addi %28, %27 : vector<16x16xi32>
      %30 = arith.cmpi sle, %29, %25 : vector<16x16xi32>
      %cst_20 = arith.constant -1.000000e+30 : f32
      %31 = vector.broadcast %cst_20 : f32 to vector<16x16xf32>
      %32 = arith.select %30, %21, %31 : vector<16x16xi1>, vector<16x16xf32>
      %c0_21 = arith.constant 0 : index
      %c0_22 = arith.constant 0 : index
      %33 = vector.load %arg8[%c0_21, %c0_22] : memref<16x1xf32, #tpu.memory_space<vmem>>, vector<16x1xf32>
      %cst_23 = arith.constant dense<0xFF800000> : vector<16xf32>
      %34 = vector.multi_reduction <maximumf>, %32, %cst_23 [1] : vector<16x16xf32> to vector<16xf32>
      %35 = vector.shape_cast %34 : vector<16xf32> to vector<16x1xf32>
      %36 = arith.maximumf %33, %35 : vector<16x1xf32>
      %37 = arith.subf %33, %36 : vector<16x1xf32>
      %38 = math.exp %37 : vector<16x1xf32>
      %39 = vector.broadcast %36 : vector<16x1xf32> to vector<16x16xf32>
      %40 = arith.subf %32, %39 : vector<16x16xf32>
      %41 = math.exp %40 : vector<16x16xf32>
      %c0_24 = arith.constant 0 : index
      %c0_25 = arith.constant 0 : index
      %42 = vector.load %arg9[%c0_24, %c0_25] : memref<16x1xf32, #tpu.memory_space<vmem>>, vector<16x1xf32>
      %43 = arith.mulf %38, %42 : vector<16x1xf32>
      %cst_26 = arith.constant dense<0.000000e+00> : vector<16xf32>
      %44 = vector.multi_reduction <add>, %41, %cst_26 [1] : vector<16x16xf32> to vector<16xf32>
      %45 = vector.shape_cast %44 : vector<16xf32> to vector<16x1xf32>
      %46 = arith.addf %43, %45 : vector<16x1xf32>
      %c0_27 = arith.constant 0 : index
      %c0_28 = arith.constant 0 : index
      %47 = vector.load %arg9[%c0_27, %c0_28] : memref<16x1xf32, #tpu.memory_space<vmem>>, vector<16x1xf32>
      tpu.vector_store %arg9[%c0_27, %c0_28], %46 {strides = array<i32>} : memref<16x1xf32, #tpu.memory_space<vmem>>, vector<16x1xf32>,
      %c0_29 = arith.constant 0 : index
      %c0_30 = arith.constant 0 : index
      %48 = vector.load %arg10[%c0_29, %c0_30] : memref<16x16xf32, #tpu.memory_space<vmem>>, vector<16x16xf32>
      %49 = vector.broadcast %38 : vector<16x1xf32> to vector<16x16xf32>
      %50 = arith.mulf %49, %48 : vector<16x16xf32>
      %51 = arith.truncf %41 : vector<16x16xf32> to vector<16x16xbf16>
      %cst_31 = arith.constant dense<0.000000e+00> : vector<16x16xf32>
      %52 = tpu.matmul %51, %18, %cst_31 {dimension_numbers = #tpu.dot_dimension_numbers<[1], [0], [0], [1], [0, 0, 1, 1], [], []>} : vector<16x16xbf16>, vector<16x16xbf16>, vector<16x16xf32> -> vector<16x16xf32>
      %53 = arith.addf %50, %52 : vector<16x16xf32>
      %c0_32 = arith.constant 0 : index
      %c0_33 = arith.constant 0 : index
      %54 = vector.load %arg10[%c0_32, %c0_33] : memref<16x16xf32, #tpu.memory_space<vmem>>, vector<16x16xf32>
      tpu.vector_store %arg10[%c0_32, %c0_33], %53 {strides = array<i32>} : memref<16x16xf32, #tpu.memory_space<vmem>>, vector<16x16xf32>,
      %c0_34 = arith.constant 0 : index
      %c0_35 = arith.constant 0 : index
      %55 = vector.load %arg8[%c0_34, %c0_35] : memref<16x1xf32, #tpu.memory_space<vmem>>, vector<16x1xf32>
      tpu.vector_store %arg8[%c0_34, %c0_35], %36 {strides = array<i32>} : memref<16x1xf32, #tpu.memory_space<vmem>>, vector<16x1xf32>,
    } else {
    }
    %c1_i32_4 = arith.constant 1 : i32
    %10 = arith.cmpi eq, %arg3, %c1_i32_4 : i32
    %11 = arith.extui %10 : i1 to i32
    %c0_i32_5 = arith.constant 0 : i32
    %12 = arith.cmpi ne, %11, %c0_i32_5 : i32
    scf.if %12 {
      %c0 = arith.constant 0 : index
      %c0_6 = arith.constant 0 : index
      %13 = vector.load %arg9[%c0, %c0_6] : memref<16x1xf32, #tpu.memory_space<vmem>>, vector<16x1xf32>
      %14 = tpu.reciprocal %13 {approx = true} : vector<16x1xf32> -> vector<16x1xf32>
      %c0_7 = arith.constant 0 : index
      %c0_8 = arith.constant 0 : index
      %15 = vector.load %arg10[%c0_7, %c0_8] : memref<16x16xf32, #tpu.memory_space<vmem>>, vector<16x16xf32>
      %16 = vector.broadcast %14 : vector<16x1xf32> to vector<16x16xf32>
      %17 = arith.mulf %15, %16 : vector<16x16xf32>
      %18 = arith.truncf %17 : vector<16x16xf32> to vector<16x16xbf16>
      %c0_9 = arith.constant 0 : index
      %c0_10 = arith.constant 0 : index
      %c0_11 = arith.constant 0 : index
      %c0_12 = arith.constant 0 : index
      %19 = vector.load %arg7[%c0_9, %c0_10, %c0_11, %c0_12] : memref<1x1x16x16xbf16, #tpu.memory_space<vmem>>, vector<1x1x16x16xbf16>
      %20 = vector.shape_cast %19 : vector<1x1x16x16xbf16> to vector<16x16xbf16>
      %21 = vector.shape_cast %18 : vector<16x16xbf16> to vector<1x1x16x16xbf16>
      tpu.vector_store %arg7[%c0_9, %c0_10, %c0_11, %c0_12], %21 {strides = array<i32>} : memref<1x1x16x16xbf16, #tpu.memory_space<vmem>>, vector<1x1x16x16xbf16>,
    } else {
    }
    return
  }
  func.func @transform_0(%arg0: i32, %arg1: i32, %arg2: i32, %arg3: i32) -> (i32, i32, i32, i32) {
    %c0_i32 = arith.constant 0 : i32
    %c0_i32_0 = arith.constant 0 : i32
    return %arg0, %arg1, %arg2, %c0_i32 : i32, i32, i32, i32
  }
  func.func @transform_1(%arg0: i32, %arg1: i32, %arg2: i32, %arg3: i32) -> (i32, i32, i32, i32) {
    %c0_i32 = arith.constant 0 : i32
    %c0_i32_0 = arith.constant 0 : i32
    return %arg0, %arg1, %arg3, %c0_i32 : i32, i32, i32, i32
  }
  func.func @transform_2(%arg0: i32, %arg1: i32, %arg2: i32, %arg3: i32) -> (i32, i32, i32, i32) {
    %c0_i32 = arith.constant 0 : i32
    %c0_i32_0 = arith.constant 0 : i32
    return %arg0, %arg1, %arg3, %c0_i32 : i32, i32, i32, i32
  }
  func.func @transform_3(%arg0: i32, %arg1: i32, %arg2: i32, %arg3: i32) -> (i32, i32, i32, i32) {
    %c0_i32 = arith.constant 0 : i32
    %c0_i32_0 = arith.constant 0 : i32
    return %arg0, %arg1, %arg2, %c0_i32 : i32, i32, i32, i32
  }
}

module attributes {stable_mosaic.version = 11 : i64} {
  func.func @_ln_qkv_rope_kernel(%arg0: i32, %arg1: i32, %arg2: memref<1x16x64xf32, #tpu.memory_space<vmem>>, %arg3: memref<1x64xf32, #tpu.memory_space<vmem>>, %arg4: memref<1x64xf32, #tpu.memory_space<vmem>>, %arg5: memref<64x64xbf16, #tpu.memory_space<vmem>>, %arg6: memref<1x64xf32, #tpu.memory_space<vmem>>, %arg7: memref<64x64xbf16, #tpu.memory_space<vmem>>, %arg8: memref<1x64xf32, #tpu.memory_space<vmem>>, %arg9: memref<64x64xbf16, #tpu.memory_space<vmem>>, %arg10: memref<1x64xf32, #tpu.memory_space<vmem>>, %arg11: memref<16x64xf32, #tpu.memory_space<vmem>>, %arg12: memref<16x64xf32, #tpu.memory_space<vmem>>, %arg13: memref<16x64xf32, #tpu.memory_space<vmem>>, %arg14: memref<1x16x64xbf16, #tpu.memory_space<vmem>>, %arg15: memref<1x16x64xbf16, #tpu.memory_space<vmem>>, %arg16: memref<1x16x64xbf16, #tpu.memory_space<vmem>>) attributes {dimension_semantics = [#tpu.dimension_semantics<parallel>, #tpu.dimension_semantics<parallel>], iteration_bounds = array<i64: 2, 2>, scalar_prefetch = 0 : i64, scratch_operands = 0 : i64, tpu.core_type = #tpu.core_type<tc>, window_params = [{transform_indices = @transform_0, window_bounds = array<i64: 1, 16, 64>}, {pipeline_mode = #tpu.pipeline_mode<synchronous>, transform_indices = @transform_1, window_bounds = array<i64: 1, 64>}, {pipeline_mode = #tpu.pipeline_mode<synchronous>, transform_indices = @transform_2, window_bounds = array<i64: 1, 64>}, {pipeline_mode = #tpu.pipeline_mode<synchronous>, transform_indices = @transform_3, window_bounds = array<i64: 64, 64>}, {pipeline_mode = #tpu.pipeline_mode<synchronous>, transform_indices = @transform_4, window_bounds = array<i64: 1, 64>}, {pipeline_mode = #tpu.pipeline_mode<synchronous>, transform_indices = @transform_5, window_bounds = array<i64: 64, 64>}, {pipeline_mode = #tpu.pipeline_mode<synchronous>, transform_indices = @transform_6, window_bounds = array<i64: 1, 64>}, {pipeline_mode = #tpu.pipeline_mode<synchronous>, transform_indices = @transform_7, window_bounds = array<i64: 64, 64>}, {pipeline_mode = #tpu.pipeline_mode<synchronous>, transform_indices = @transform_8, window_bounds = array<i64: 1, 64>}, {transform_indices = @transform_9, window_bounds = array<i64: 16, 64>}, {transform_indices = @transform_10, window_bounds = array<i64: 16, 64>}, {transform_indices = @transform_11, window_bounds = array<i64: 16, 64>}, {transform_indices = @transform_12, window_bounds = array<i64: 1, 16, 64>}, {transform_indices = @transform_13, window_bounds = array<i64: 1, 16, 64>}, {transform_indices = @transform_14, window_bounds = array<i64: 1, 16, 64>}]} {
    %c0 = arith.constant 0 : index
    %c0_0 = arith.constant 0 : index
    %c0_1 = arith.constant 0 : index
    %0 = vector.load %arg2[%c0, %c0_0, %c0_1] : memref<1x16x64xf32, #tpu.memory_space<vmem>>, vector<1x16x64xf32>
    %1 = vector.shape_cast %0 : vector<1x16x64xf32> to vector<16x64xf32>
    %cst = arith.constant dense<0.000000e+00> : vector<16xf32>
    %2 = vector.multi_reduction <add>, %1, %cst [1] : vector<16x64xf32> to vector<16xf32>
    %3 = vector.shape_cast %2 : vector<16xf32> to vector<16x1xf32>
    %cst_2 = arith.constant 6.400000e+01 : f32
    %4 = vector.broadcast %cst_2 : f32 to vector<16x1xf32>
    %5 = arith.divf %3, %4 : vector<16x1xf32>
    %6 = vector.broadcast %5 : vector<16x1xf32> to vector<16x64xf32>
    %7 = arith.subf %1, %6 : vector<16x64xf32>
    %8 = arith.mulf %7, %7 : vector<16x64xf32>
    %cst_3 = arith.constant dense<0.000000e+00> : vector<16xf32>
    %9 = vector.multi_reduction <add>, %8, %cst_3 [1] : vector<16x64xf32> to vector<16xf32>
    %10 = vector.shape_cast %9 : vector<16xf32> to vector<16x1xf32>
    %cst_4 = arith.constant 6.400000e+01 : f32
    %11 = vector.broadcast %cst_4 : f32 to vector<16x1xf32>
    %12 = arith.divf %10, %11 : vector<16x1xf32>
    %13 = vector.broadcast %5 : vector<16x1xf32> to vector<16x64xf32>
    %14 = arith.subf %1, %13 : vector<16x64xf32>
    %cst_5 = arith.constant 9.99999974E-6 : f32
    %15 = vector.broadcast %cst_5 : f32 to vector<16x1xf32>
    %16 = arith.addf %12, %15 : vector<16x1xf32>
    %17 = math.rsqrt %16 : vector<16x1xf32>
    %18 = vector.broadcast %17 : vector<16x1xf32> to vector<16x64xf32>
    %19 = arith.mulf %14, %18 : vector<16x64xf32>
    %c0_6 = arith.constant 0 : index
    %c0_7 = arith.constant 0 : index
    %20 = vector.load %arg3[%c0_6, %c0_7] : memref<1x64xf32, #tpu.memory_space<vmem>>, vector<1x64xf32>
    %21 = vector.broadcast %20 : vector<1x64xf32> to vector<16x64xf32>
    %22 = arith.mulf %19, %21 : vector<16x64xf32>
    %c0_8 = arith.constant 0 : index
    %c0_9 = arith.constant 0 : index
    %23 = vector.load %arg4[%c0_8, %c0_9] : memref<1x64xf32, #tpu.memory_space<vmem>>, vector<1x64xf32>
    %24 = vector.broadcast %23 : vector<1x64xf32> to vector<16x64xf32>
    %25 = arith.addf %22, %24 : vector<16x64xf32>
    %26 = arith.truncf %25 : vector<16x64xf32> to vector<16x64xbf16>
    %c0_10 = arith.constant 0 : index
    %c0_11 = arith.constant 0 : index
    %27 = vector.load %arg5[%c0_10, %c0_11] : memref<64x64xbf16, #tpu.memory_space<vmem>>, vector<64x64xbf16>
    %cst_12 = arith.constant dense<0.000000e+00> : vector<16x64xf32>
    %28 = tpu.matmul %26, %27, %cst_12 {dimension_numbers = #tpu.dot_dimension_numbers<[1], [0], [0], [1], [0, 0, 1, 1], [], []>} : vector<16x64xbf16>, vector<64x64xbf16>, vector<16x64xf32> -> vector<16x64xf32>
    %c0_13 = arith.constant 0 : index
    %c0_14 = arith.constant 0 : index
    %29 = vector.load %arg6[%c0_13, %c0_14] : memref<1x64xf32, #tpu.memory_space<vmem>>, vector<1x64xf32>
    %30 = vector.broadcast %29 : vector<1x64xf32> to vector<16x64xf32>
    %31 = arith.addf %28, %30 : vector<16x64xf32>
    %c0_15 = arith.constant 0 : index
    %c0_16 = arith.constant 0 : index
    %32 = vector.load %arg7[%c0_15, %c0_16] : memref<64x64xbf16, #tpu.memory_space<vmem>>, vector<64x64xbf16>
    %cst_17 = arith.constant dense<0.000000e+00> : vector<16x64xf32>
    %33 = tpu.matmul %26, %32, %cst_17 {dimension_numbers = #tpu.dot_dimension_numbers<[1], [0], [0], [1], [0, 0, 1, 1], [], []>} : vector<16x64xbf16>, vector<64x64xbf16>, vector<16x64xf32> -> vector<16x64xf32>
    %c0_18 = arith.constant 0 : index
    %c0_19 = arith.constant 0 : index
    %34 = vector.load %arg8[%c0_18, %c0_19] : memref<1x64xf32, #tpu.memory_space<vmem>>, vector<1x64xf32>
    %35 = vector.broadcast %34 : vector<1x64xf32> to vector<16x64xf32>
    %36 = arith.addf %33, %35 : vector<16x64xf32>
    %c0_20 = arith.constant 0 : index
    %c0_21 = arith.constant 0 : index
    %37 = vector.load %arg9[%c0_20, %c0_21] : memref<64x64xbf16, #tpu.memory_space<vmem>>, vector<64x64xbf16>
    %cst_22 = arith.constant dense<0.000000e+00> : vector<16x64xf32>
    %38 = tpu.matmul %26, %37, %cst_22 {dimension_numbers = #tpu.dot_dimension_numbers<[1], [0], [0], [1], [0, 0, 1, 1], [], []>} : vector<16x64xbf16>, vector<64x64xbf16>, vector<16x64xf32> -> vector<16x64xf32>
    %c0_23 = arith.constant 0 : index
    %c0_24 = arith.constant 0 : index
    %39 = vector.load %arg10[%c0_23, %c0_24] : memref<1x64xf32, #tpu.memory_space<vmem>>, vector<1x64xf32>
    %40 = vector.broadcast %39 : vector<1x64xf32> to vector<16x64xf32>
    %41 = arith.addf %38, %40 : vector<16x64xf32>
    %c0_25 = arith.constant 0 : index
    %c0_26 = arith.constant 0 : index
    %42 = vector.load %arg11[%c0_25, %c0_26] : memref<16x64xf32, #tpu.memory_space<vmem>>, vector<16x64xf32>
    %c0_27 = arith.constant 0 : index
    %c0_28 = arith.constant 0 : index
    %43 = vector.load %arg12[%c0_27, %c0_28] : memref<16x64xf32, #tpu.memory_space<vmem>>, vector<16x64xf32>
    %c0_29 = arith.constant 0 : index
    %c0_30 = arith.constant 0 : index
    %44 = vector.load %arg13[%c0_29, %c0_30] : memref<16x64xf32, #tpu.memory_space<vmem>>, vector<16x64xf32>
    %45 = vector.extract_strided_slice %31 {offsets = [0, 3], sizes = [16, 61], strides = [1, 1]} : vector<16x64xf32> to vector<16x61xf32>
    %46 = vector.extract_strided_slice %31 {offsets = [0, 0], sizes = [16, 3], strides = [1, 1]} : vector<16x64xf32> to vector<16x3xf32>
    %47 = tpu.concatenate %45, %46 in 1 : vector<16x61xf32>, vector<16x3xf32> -> vector<16x64xf32>
    %48 = vector.extract_strided_slice %31 {offsets = [0, 61], sizes = [16, 3], strides = [1, 1]} : vector<16x64xf32> to vector<16x3xf32>
    %49 = vector.extract_strided_slice %31 {offsets = [0, 0], sizes = [16, 61], strides = [1, 1]} : vector<16x64xf32> to vector<16x61xf32>
    %50 = tpu.concatenate %48, %49 in 1 : vector<16x3xf32>, vector<16x61xf32> -> vector<16x64xf32>
    %51 = arith.mulf %31, %42 : vector<16x64xf32>
    %52 = arith.mulf %47, %43 : vector<16x64xf32>
    %53 = arith.addf %51, %52 : vector<16x64xf32>
    %54 = arith.mulf %50, %44 : vector<16x64xf32>
    %55 = arith.addf %53, %54 : vector<16x64xf32>
    %56 = arith.truncf %55 : vector<16x64xf32> to vector<16x64xbf16>
    %c0_31 = arith.constant 0 : index
    %c0_32 = arith.constant 0 : index
    %c0_33 = arith.constant 0 : index
    %57 = vector.load %arg14[%c0_31, %c0_32, %c0_33] : memref<1x16x64xbf16, #tpu.memory_space<vmem>>, vector<1x16x64xbf16>
    %58 = vector.shape_cast %57 : vector<1x16x64xbf16> to vector<16x64xbf16>
    %59 = vector.shape_cast %56 : vector<16x64xbf16> to vector<1x16x64xbf16>
    tpu.vector_store %arg14[%c0_31, %c0_32, %c0_33], %59 {strides = array<i32>} : memref<1x16x64xbf16, #tpu.memory_space<vmem>>, vector<1x16x64xbf16>,
    %60 = vector.extract_strided_slice %36 {offsets = [0, 3], sizes = [16, 61], strides = [1, 1]} : vector<16x64xf32> to vector<16x61xf32>
    %61 = vector.extract_strided_slice %36 {offsets = [0, 0], sizes = [16, 3], strides = [1, 1]} : vector<16x64xf32> to vector<16x3xf32>
    %62 = tpu.concatenate %60, %61 in 1 : vector<16x61xf32>, vector<16x3xf32> -> vector<16x64xf32>
    %63 = vector.extract_strided_slice %36 {offsets = [0, 61], sizes = [16, 3], strides = [1, 1]} : vector<16x64xf32> to vector<16x3xf32>
    %64 = vector.extract_strided_slice %36 {offsets = [0, 0], sizes = [16, 61], strides = [1, 1]} : vector<16x64xf32> to vector<16x61xf32>
    %65 = tpu.concatenate %63, %64 in 1 : vector<16x3xf32>, vector<16x61xf32> -> vector<16x64xf32>
    %66 = arith.mulf %36, %42 : vector<16x64xf32>
    %67 = arith.mulf %62, %43 : vector<16x64xf32>
    %68 = arith.addf %66, %67 : vector<16x64xf32>
    %69 = arith.mulf %65, %44 : vector<16x64xf32>
    %70 = arith.addf %68, %69 : vector<16x64xf32>
    %71 = arith.truncf %70 : vector<16x64xf32> to vector<16x64xbf16>
    %c0_34 = arith.constant 0 : index
    %c0_35 = arith.constant 0 : index
    %c0_36 = arith.constant 0 : index
    %72 = vector.load %arg15[%c0_34, %c0_35, %c0_36] : memref<1x16x64xbf16, #tpu.memory_space<vmem>>, vector<1x16x64xbf16>
    %73 = vector.shape_cast %72 : vector<1x16x64xbf16> to vector<16x64xbf16>
    %74 = vector.shape_cast %71 : vector<16x64xbf16> to vector<1x16x64xbf16>
    tpu.vector_store %arg15[%c0_34, %c0_35, %c0_36], %74 {strides = array<i32>} : memref<1x16x64xbf16, #tpu.memory_space<vmem>>, vector<1x16x64xbf16>,
    %75 = arith.truncf %41 : vector<16x64xf32> to vector<16x64xbf16>
    %c0_37 = arith.constant 0 : index
    %c0_38 = arith.constant 0 : index
    %c0_39 = arith.constant 0 : index
    %76 = vector.load %arg16[%c0_37, %c0_38, %c0_39] : memref<1x16x64xbf16, #tpu.memory_space<vmem>>, vector<1x16x64xbf16>
    %77 = vector.shape_cast %76 : vector<1x16x64xbf16> to vector<16x64xbf16>
    %78 = vector.shape_cast %75 : vector<16x64xbf16> to vector<1x16x64xbf16>
    tpu.vector_store %arg16[%c0_37, %c0_38, %c0_39], %78 {strides = array<i32>} : memref<1x16x64xbf16, #tpu.memory_space<vmem>>, vector<1x16x64xbf16>,
    return
  }
  func.func @transform_0(%arg0: i32, %arg1: i32) -> (i32, i32, i32) {
    %c0_i32 = arith.constant 0 : i32
    %c0_i32_0 = arith.constant 0 : i32
    return %arg0, %arg1, %c0_i32 : i32, i32, i32
  }
  func.func @transform_1(%arg0: i32, %arg1: i32) -> (i32, i32) {
    %c0_i32 = arith.constant 0 : i32
    %c0_i32_0 = arith.constant 0 : i32
    %c0_i32_1 = arith.constant 0 : i32
    return %c0_i32, %c0_i32_0 : i32, i32
  }
  func.func @transform_2(%arg0: i32, %arg1: i32) -> (i32, i32) {
    %c0_i32 = arith.constant 0 : i32
    %c0_i32_0 = arith.constant 0 : i32
    %c0_i32_1 = arith.constant 0 : i32
    return %c0_i32, %c0_i32_0 : i32, i32
  }
  func.func @transform_3(%arg0: i32, %arg1: i32) -> (i32, i32) {
    %c0_i32 = arith.constant 0 : i32
    %c0_i32_0 = arith.constant 0 : i32
    %c0_i32_1 = arith.constant 0 : i32
    return %c0_i32, %c0_i32_0 : i32, i32
  }
  func.func @transform_4(%arg0: i32, %arg1: i32) -> (i32, i32) {
    %c0_i32 = arith.constant 0 : i32
    %c0_i32_0 = arith.constant 0 : i32
    %c0_i32_1 = arith.constant 0 : i32
    return %c0_i32, %c0_i32_0 : i32, i32
  }
  func.func @transform_5(%arg0: i32, %arg1: i32) -> (i32, i32) {
    %c0_i32 = arith.constant 0 : i32
    %c0_i32_0 = arith.constant 0 : i32
    %c0_i32_1 = arith.constant 0 : i32
    return %c0_i32, %c0_i32_0 : i32, i32
  }
  func.func @transform_6(%arg0: i32, %arg1: i32) -> (i32, i32) {
    %c0_i32 = arith.constant 0 : i32
    %c0_i32_0 = arith.constant 0 : i32
    %c0_i32_1 = arith.constant 0 : i32
    return %c0_i32, %c0_i32_0 : i32, i32
  }
  func.func @transform_7(%arg0: i32, %arg1: i32) -> (i32, i32) {
    %c0_i32 = arith.constant 0 : i32
    %c0_i32_0 = arith.constant 0 : i32
    %c0_i32_1 = arith.constant 0 : i32
    return %c0_i32, %c0_i32_0 : i32, i32
  }
  func.func @transform_8(%arg0: i32, %arg1: i32) -> (i32, i32) {
    %c0_i32 = arith.constant 0 : i32
    %c0_i32_0 = arith.constant 0 : i32
    %c0_i32_1 = arith.constant 0 : i32
    return %c0_i32, %c0_i32_0 : i32, i32
  }
  func.func @transform_9(%arg0: i32, %arg1: i32) -> (i32, i32) {
    %c0_i32 = arith.constant 0 : i32
    %c0_i32_0 = arith.constant 0 : i32
    return %arg1, %c0_i32 : i32, i32
  }
  func.func @transform_10(%arg0: i32, %arg1: i32) -> (i32, i32) {
    %c0_i32 = arith.constant 0 : i32
    %c0_i32_0 = arith.constant 0 : i32
    return %arg1, %c0_i32 : i32, i32
  }
  func.func @transform_11(%arg0: i32, %arg1: i32) -> (i32, i32) {
    %c0_i32 = arith.constant 0 : i32
    %c0_i32_0 = arith.constant 0 : i32
    return %arg1, %c0_i32 : i32, i32
  }
  func.func @transform_12(%arg0: i32, %arg1: i32) -> (i32, i32, i32) {
    %c0_i32 = arith.constant 0 : i32
    %c0_i32_0 = arith.constant 0 : i32
    return %arg0, %arg1, %c0_i32 : i32, i32, i32
  }
  func.func @transform_13(%arg0: i32, %arg1: i32) -> (i32, i32, i32) {
    %c0_i32 = arith.constant 0 : i32
    %c0_i32_0 = arith.constant 0 : i32
    return %arg0, %arg1, %c0_i32 : i32, i32, i32
  }
  func.func @transform_14(%arg0: i32, %arg1: i32) -> (i32, i32, i32) {
    %c0_i32 = arith.constant 0 : i32
    %c0_i32_0 = arith.constant 0 : i32
    return %arg0, %arg1, %c0_i32 : i32, i32, i32
  }
}

module attributes {stable_mosaic.version = 11 : i64} {
  func.func @_dense_mlp_residual_kernel(%arg0: i32, %arg1: i32, %arg2: i32, %arg3: memref<1x16x64xf32, #tpu.memory_space<vmem>>, %arg4: memref<1x16x64xbf16, #tpu.memory_space<vmem>>, %arg5: memref<1x64xf32, #tpu.memory_space<vmem>>, %arg6: memref<1x64xf32, #tpu.memory_space<vmem>>, %arg7: memref<64x64xbf16, #tpu.memory_space<vmem>>, %arg8: memref<1x64xf32, #tpu.memory_space<vmem>>, %arg9: memref<64x128xbf16, #tpu.memory_space<vmem>>, %arg10: memref<1x128xf32, #tpu.memory_space<vmem>>, %arg11: memref<128x64xbf16, #tpu.memory_space<vmem>>, %arg12: memref<1x64xf32, #tpu.memory_space<vmem>>, %arg13: memref<1x16x64xf32, #tpu.memory_space<vmem>>, %arg14: memref<16x64xf32, #tpu.memory_space<vmem>>, %arg15: memref<16x64xbf16, #tpu.memory_space<vmem>>) attributes {dimension_semantics = [#tpu.dimension_semantics<parallel>, #tpu.dimension_semantics<parallel>, #tpu.dimension_semantics<arbitrary>], iteration_bounds = array<i64: 2, 2, 2>, scalar_prefetch = 0 : i64, scratch_operands = 2 : i64, tpu.core_type = #tpu.core_type<tc>, window_params = [{transform_indices = @transform_0, window_bounds = array<i64: 1, 16, 64>}, {transform_indices = @transform_1, window_bounds = array<i64: 1, 16, 64>}, {pipeline_mode = #tpu.pipeline_mode<synchronous>, transform_indices = @transform_2, window_bounds = array<i64: 1, 64>}, {pipeline_mode = #tpu.pipeline_mode<synchronous>, transform_indices = @transform_3, window_bounds = array<i64: 1, 64>}, {pipeline_mode = #tpu.pipeline_mode<synchronous>, transform_indices = @transform_4, window_bounds = array<i64: 64, 64>}, {pipeline_mode = #tpu.pipeline_mode<synchronous>, transform_indices = @transform_5, window_bounds = array<i64: 1, 64>}, {transform_indices = @transform_6, window_bounds = array<i64: 64, 128>}, {transform_indices = @transform_7, window_bounds = array<i64: 1, 128>}, {transform_indices = @transform_8, window_bounds = array<i64: 128, 64>}, {pipeline_mode = #tpu.pipeline_mode<synchronous>, transform_indices = @transform_9, window_bounds = array<i64: 1, 64>}, {transform_indices = @transform_10, window_bounds = array<i64: 1, 16, 64>}]} {
    %c0_i32 = arith.constant 0 : i32
    %0 = arith.cmpi eq, %arg2, %c0_i32 : i32
    %1 = arith.extui %0 : i1 to i32
    %c0_i32_0 = arith.constant 0 : i32
    %2 = arith.cmpi ne, %1, %c0_i32_0 : i32
    scf.if %2 {
      %c0_18 = arith.constant 0 : index
      %c0_19 = arith.constant 0 : index
      %c0_20 = arith.constant 0 : index
      %31 = vector.load %arg3[%c0_18, %c0_19, %c0_20] : memref<1x16x64xf32, #tpu.memory_space<vmem>>, vector<1x16x64xf32>
      %32 = vector.shape_cast %31 : vector<1x16x64xf32> to vector<16x64xf32>
      %cst_21 = arith.constant dense<0.000000e+00> : vector<16xf32>
      %33 = vector.multi_reduction <add>, %32, %cst_21 [1] : vector<16x64xf32> to vector<16xf32>
      %34 = vector.shape_cast %33 : vector<16xf32> to vector<16x1xf32>
      %cst_22 = arith.constant 6.400000e+01 : f32
      %35 = vector.broadcast %cst_22 : f32 to vector<16x1xf32>
      %36 = arith.divf %34, %35 : vector<16x1xf32>
      %37 = vector.broadcast %36 : vector<16x1xf32> to vector<16x64xf32>
      %38 = arith.subf %32, %37 : vector<16x64xf32>
      %39 = arith.mulf %38, %38 : vector<16x64xf32>
      %cst_23 = arith.constant dense<0.000000e+00> : vector<16xf32>
      %40 = vector.multi_reduction <add>, %39, %cst_23 [1] : vector<16x64xf32> to vector<16xf32>
      %41 = vector.shape_cast %40 : vector<16xf32> to vector<16x1xf32>
      %cst_24 = arith.constant 6.400000e+01 : f32
      %42 = vector.broadcast %cst_24 : f32 to vector<16x1xf32>
      %43 = arith.divf %41, %42 : vector<16x1xf32>
      %44 = vector.broadcast %36 : vector<16x1xf32> to vector<16x64xf32>
      %45 = arith.subf %32, %44 : vector<16x64xf32>
      %cst_25 = arith.constant 9.99999974E-6 : f32
      %46 = vector.broadcast %cst_25 : f32 to vector<16x1xf32>
      %47 = arith.addf %43, %46 : vector<16x1xf32>
      %48 = math.rsqrt %47 : vector<16x1xf32>
      %49 = vector.broadcast %48 : vector<16x1xf32> to vector<16x64xf32>
      %50 = arith.mulf %45, %49 : vector<16x64xf32>
      %c0_26 = arith.constant 0 : index
      %c0_27 = arith.constant 0 : index
      %51 = vector.load %arg5[%c0_26, %c0_27] : memref<1x64xf32, #tpu.memory_space<vmem>>, vector<1x64xf32>
      %52 = vector.broadcast %51 : vector<1x64xf32> to vector<16x64xf32>
      %53 = arith.mulf %50, %52 : vector<16x64xf32>
      %c0_28 = arith.constant 0 : index
      %c0_29 = arith.constant 0 : index
      %54 = vector.load %arg6[%c0_28, %c0_29] : memref<1x64xf32, #tpu.memory_space<vmem>>, vector<1x64xf32>
      %55 = vector.broadcast %54 : vector<1x64xf32> to vector<16x64xf32>
      %56 = arith.addf %53, %55 : vector<16x64xf32>
      %57 = arith.truncf %56 : vector<16x64xf32> to vector<16x64xbf16>
      %c0_30 = arith.constant 0 : index
      %c0_31 = arith.constant 0 : index
      %58 = vector.load %arg15[%c0_30, %c0_31] : memref<16x64xbf16, #tpu.memory_space<vmem>>, vector<16x64xbf16>
      tpu.vector_store %arg15[%c0_30, %c0_31], %57 {strides = array<i32>} : memref<16x64xbf16, #tpu.memory_space<vmem>>, vector<16x64xbf16>,
      %c0_32 = arith.constant 0 : index
      %c0_33 = arith.constant 0 : index
      %c0_34 = arith.constant 0 : index
      %59 = vector.load %arg4[%c0_32, %c0_33, %c0_34] : memref<1x16x64xbf16, #tpu.memory_space<vmem>>, vector<1x16x64xbf16>
      %60 = vector.shape_cast %59 : vector<1x16x64xbf16> to vector<16x64xbf16>
      %c0_35 = arith.constant 0 : index
      %c0_36 = arith.constant 0 : index
      %61 = vector.load %arg7[%c0_35, %c0_36] : memref<64x64xbf16, #tpu.memory_space<vmem>>, vector<64x64xbf16>
      %cst_37 = arith.constant dense<0.000000e+00> : vector<16x64xf32>
      %62 = tpu.matmul %60, %61, %cst_37 {dimension_numbers = #tpu.dot_dimension_numbers<[1], [0], [0], [1], [0, 0, 1, 1], [], []>} : vector<16x64xbf16>, vector<64x64xbf16>, vector<16x64xf32> -> vector<16x64xf32>
      %c0_38 = arith.constant 0 : index
      %c0_39 = arith.constant 0 : index
      %63 = vector.load %arg8[%c0_38, %c0_39] : memref<1x64xf32, #tpu.memory_space<vmem>>, vector<1x64xf32>
      %64 = vector.broadcast %63 : vector<1x64xf32> to vector<16x64xf32>
      %65 = arith.addf %62, %64 : vector<16x64xf32>
      %66 = arith.addf %65, %32 : vector<16x64xf32>
      %c0_40 = arith.constant 0 : index
      %c0_41 = arith.constant 0 : index
      %67 = vector.load %arg12[%c0_40, %c0_41] : memref<1x64xf32, #tpu.memory_space<vmem>>, vector<1x64xf32>
      %68 = vector.broadcast %67 : vector<1x64xf32> to vector<16x64xf32>
      %69 = arith.addf %66, %68 : vector<16x64xf32>
      %c0_42 = arith.constant 0 : index
      %c0_43 = arith.constant 0 : index
      %70 = vector.load %arg14[%c0_42, %c0_43] : memref<16x64xf32, #tpu.memory_space<vmem>>, vector<16x64xf32>
      tpu.vector_store %arg14[%c0_42, %c0_43], %69 {strides = array<i32>} : memref<16x64xf32, #tpu.memory_space<vmem>>, vector<16x64xf32>,
    } else {
    }
    %c0 = arith.constant 0 : index
    %c0_1 = arith.constant 0 : index
    %3 = vector.load %arg15[%c0, %c0_1] : memref<16x64xbf16, #tpu.memory_space<vmem>>, vector<16x64xbf16>
    %c0_2 = arith.constant 0 : index
    %c0_3 = arith.constant 0 : index
    %4 = vector.load %arg9[%c0_2, %c0_3] : memref<64x128xbf16, #tpu.memory_space<vmem>>, vector<64x128xbf16>
    %cst = arith.constant dense<0.000000e+00> : vector<16x128xf32>
    %5 = tpu.matmul %3, %4, %cst {dimension_numbers = #tpu.dot_dimension_numbers<[1], [0], [0], [1], [0, 0, 1, 1], [], []>} : vector<16x64xbf16>, vector<64x128xbf16>, vector<16x128xf32> -> vector<16x128xf32>
    %c0_4 = arith.constant 0 : index
    %c0_5 = arith.constant 0 : index
    %6 = vector.load %arg10[%c0_4, %c0_5] : memref<1x128xf32, #tpu.memory_space<vmem>>, vector<1x128xf32>
    %7 = vector.broadcast %6 : vector<1x128xf32> to vector<16x128xf32>
    %8 = arith.addf %5, %7 : vector<16x128xf32>
    %cst_6 = arith.constant 5.000000e-01 : f32
    %9 = vector.broadcast %cst_6 : f32 to vector<16x128xf32>
    %10 = arith.mulf %9, %8 : vector<16x128xf32>
    %11 = arith.mulf %8, %8 : vector<16x128xf32>
    %12 = arith.mulf %11, %8 : vector<16x128xf32>
    %cst_7 = arith.constant 4.471500e-02 : f32
    %13 = vector.broadcast %cst_7 : f32 to vector<16x128xf32>
    %14 = arith.mulf %13, %12 : vector<16x128xf32>
    %15 = arith.addf %8, %14 : vector<16x128xf32>
    %cst_8 = arith.constant 0.797884583 : f32
    %16 = vector.broadcast %cst_8 : f32 to vector<16x128xf32>
    %17 = arith.mulf %16, %15 : vector<16x128xf32>
    %18 = math.tanh %17 : vector<16x128xf32>
    %cst_9 = arith.constant 1.000000e+00 : f32
    %19 = vector.broadcast %cst_9 : f32 to vector<16x128xf32>
    %20 = arith.addf %19, %18 : vector<16x128xf32>
    %21 = arith.mulf %10, %20 : vector<16x128xf32>
    %22 = arith.truncf %21 : vector<16x128xf32> to vector<16x128xbf16>
    %c0_10 = arith.constant 0 : index
    %c0_11 = arith.constant 0 : index
    %23 = vector.load %arg14[%c0_10, %c0_11] : memref<16x64xf32, #tpu.memory_space<vmem>>, vector<16x64xf32>
    %c0_12 = arith.constant 0 : index
    %c0_13 = arith.constant 0 : index
    %24 = vector.load %arg11[%c0_12, %c0_13] : memref<128x64xbf16, #tpu.memory_space<vmem>>, vector<128x64xbf16>
    %cst_14 = arith.constant dense<0.000000e+00> : vector<16x64xf32>
    %25 = tpu.matmul %22, %24, %cst_14 {dimension_numbers = #tpu.dot_dimension_numbers<[1], [0], [0], [1], [0, 0, 1, 1], [], []>} : vector<16x128xbf16>, vector<128x64xbf16>, vector<16x64xf32> -> vector<16x64xf32>
    %26 = arith.addf %23, %25 : vector<16x64xf32>
    %c0_15 = arith.constant 0 : index
    %c0_16 = arith.constant 0 : index
    %27 = vector.load %arg14[%c0_15, %c0_16] : memref<16x64xf32, #tpu.memory_space<vmem>>, vector<16x64xf32>
    tpu.vector_store %arg14[%c0_15, %c0_16], %26 {strides = array<i32>} : memref<16x64xf32, #tpu.memory_space<vmem>>, vector<16x64xf32>,
    %c1_i32 = arith.constant 1 : i32
    %28 = arith.cmpi eq, %arg2, %c1_i32 : i32
    %29 = arith.extui %28 : i1 to i32
    %c0_i32_17 = arith.constant 0 : i32
    %30 = arith.cmpi ne, %29, %c0_i32_17 : i32
    scf.if %30 {
      %c0_18 = arith.constant 0 : index
      %c0_19 = arith.constant 0 : index
      %31 = vector.load %arg14[%c0_18, %c0_19] : memref<16x64xf32, #tpu.memory_space<vmem>>, vector<16x64xf32>
      %c0_20 = arith.constant 0 : index
      %c0_21 = arith.constant 0 : index
      %c0_22 = arith.constant 0 : index
      %32 = vector.load %arg13[%c0_20, %c0_21, %c0_22] : memref<1x16x64xf32, #tpu.memory_space<vmem>>, vector<1x16x64xf32>
      %33 = vector.shape_cast %32 : vector<1x16x64xf32> to vector<16x64xf32>
      %34 = vector.shape_cast %31 : vector<16x64xf32> to vector<1x16x64xf32>
      tpu.vector_store %arg13[%c0_20, %c0_21, %c0_22], %34 {strides = array<i32>} : memref<1x16x64xf32, #tpu.memory_space<vmem>>, vector<1x16x64xf32>,
    } else {
    }
    return
  }
  func.func @transform_0(%arg0: i32, %arg1: i32, %arg2: i32) -> (i32, i32, i32) {
    %c0_i32 = arith.constant 0 : i32
    %c0_i32_0 = arith.constant 0 : i32
    return %arg0, %arg1, %c0_i32 : i32, i32, i32
  }
  func.func @transform_1(%arg0: i32, %arg1: i32, %arg2: i32) -> (i32, i32, i32) {
    %c0_i32 = arith.constant 0 : i32
    %c0_i32_0 = arith.constant 0 : i32
    return %arg0, %arg1, %c0_i32 : i32, i32, i32
  }
  func.func @transform_2(%arg0: i32, %arg1: i32, %arg2: i32) -> (i32, i32) {
    %c0_i32 = arith.constant 0 : i32
    %c0_i32_0 = arith.constant 0 : i32
    %c0_i32_1 = arith.constant 0 : i32
    return %c0_i32, %c0_i32_0 : i32, i32
  }
  func.func @transform_3(%arg0: i32, %arg1: i32, %arg2: i32) -> (i32, i32) {
    %c0_i32 = arith.constant 0 : i32
    %c0_i32_0 = arith.constant 0 : i32
    %c0_i32_1 = arith.constant 0 : i32
    return %c0_i32, %c0_i32_0 : i32, i32
  }
  func.func @transform_4(%arg0: i32, %arg1: i32, %arg2: i32) -> (i32, i32) {
    %c0_i32 = arith.constant 0 : i32
    %c0_i32_0 = arith.constant 0 : i32
    %c0_i32_1 = arith.constant 0 : i32
    return %c0_i32, %c0_i32_0 : i32, i32
  }
  func.func @transform_5(%arg0: i32, %arg1: i32, %arg2: i32) -> (i32, i32) {
    %c0_i32 = arith.constant 0 : i32
    %c0_i32_0 = arith.constant 0 : i32
    %c0_i32_1 = arith.constant 0 : i32
    return %c0_i32, %c0_i32_0 : i32, i32
  }
  func.func @transform_6(%arg0: i32, %arg1: i32, %arg2: i32) -> (i32, i32) {
    %c0_i32 = arith.constant 0 : i32
    %c0_i32_0 = arith.constant 0 : i32
    return %c0_i32, %arg2 : i32, i32
  }
  func.func @transform_7(%arg0: i32, %arg1: i32, %arg2: i32) -> (i32, i32) {
    %c0_i32 = arith.constant 0 : i32
    %c0_i32_0 = arith.constant 0 : i32
    return %c0_i32, %arg2 : i32, i32
  }
  func.func @transform_8(%arg0: i32, %arg1: i32, %arg2: i32) -> (i32, i32) {
    %c0_i32 = arith.constant 0 : i32
    %c0_i32_0 = arith.constant 0 : i32
    return %arg2, %c0_i32 : i32, i32
  }
  func.func @transform_9(%arg0: i32, %arg1: i32, %arg2: i32) -> (i32, i32) {
    %c0_i32 = arith.constant 0 : i32
    %c0_i32_0 = arith.constant 0 : i32
    %c0_i32_1 = arith.constant 0 : i32
    return %c0_i32, %c0_i32_0 : i32, i32
  }
  func.func @transform_10(%arg0: i32, %arg1: i32, %arg2: i32) -> (i32, i32, i32) {
    %c0_i32 = arith.constant 0 : i32
    %c0_i32_0 = arith.constant 0 : i32
    return %arg0, %arg1, %c0_i32 : i32, i32, i32
  }
}

</mosaic_0001>

<llo_original>
// kernel: phi_block.4
$region0: #{phi_block.4}
  #allocation0 [shape = 'u32[]', space=smem, size = 0x4, offset = 0x4, fixed_abs, tag = 'smem constant byte address 0x4 - core index']
  #allocation1 [shape = 'u32[72,128]{1,0:T(1,128)}', space=vmem, size = 0x9000, scoped, tag = 'internal scratch']
  #allocation2 [shape = 'f32[16,1]{1,0:T(8,128)}', space=vmem, size = 0x2000, scoped, tag = 'scratch operand']
  #allocation3 [shape = 'f32[16,1]{1,0:T(8,128)}', space=vmem, size = 0x2000, scoped, tag = 'scratch operand']
  #allocation4 [shape = 'f32[16,16]{1,0:T(8,128)}', space=vmem, size = 0x2000, scoped, tag = 'scratch operand']
  %s0 = inlined_call_operand.vmem [shape: bf16[2,4,32,16], index: 0, kind: input, shape index: {}]
  %s1 = inlined_call_operand.vmem [shape: bf16[2,4,32,16], index: 1, kind: input, shape index: {}]
  %s2 = inlined_call_operand.vmem [shape: bf16[2,4,32,16], index: 2, kind: input, shape index: {}]
  %s3 = inlined_call_operand.vmem [shape: bf16[2,4,32,16], index: 3, kind: output, shape index: {}]
  %s4 = sld [smem:[#allocation0]]
  $region57: #{phi_block.4} parent=0
    _
  %s6 = ssub.s32 1, %s4
  %s7 = scalar_select 0, %s6, %s4
  loop: start=0, step=1, limit=34
  $region2: #{phi_block.4} parent=0 // loop_pre_header
    _
  $region3: #{phi_block.4} parent=0 // loop_header
    %s9 = sphi 0, %s13
    %p10 = scmp.ge.s32.totalorder %s9, 34
    %s16 = sphi 0, %s42
    %s17 = sphi 0, %s38
    %s18 = sphi 0, %s34
    %s19 = sphi 0, %s30
    %s20 = sphi 0, %s16
    %s21 = sphi 0, %s17
    %s22 = sphi 0, %s18
    %s23 = sphi 0, %s19
    %s24 = sphi 0, %s20
    %s25 = sphi 0, %s21
    %s26 = sphi 0, %s22
    %s27 = sphi 0, %s23
    %s49 = sphi 0, %s51
    %s52 = sphi 0, %s49
    %s53 = sphi 0, %s52
    %s69 = sphi 0, %s53
    %s79 = sphi 0, %s81
    %s82 = sphi 0, %s79
    %s83 = sphi 0, %s82
    %s99 = sphi 0, %s83
    %s109 = sphi 0, %s111
    %s112 = sphi 0, %s109
    %s113 = sphi 0, %s112
    %s129 = sphi 0, %s113
    %s139 = sphi 0, %s141
    %s142 = sphi 0, %s139
    %s143 = sphi 0, %s142
    %s159 = sphi 0, %s143
  $region4: #{phi_block.4} parent=0 // loop_header_branch
    %12 = sbr.rel (%p10) target = $region8
  $region5: #{phi_block.4} parent=0 // loop_body
    %s14 = ssub.s32 %s9, 1
    %s15 = ssub.s32 %s9, 2
    %s28 = sadd.s32 1, %s19
    %p29 = scmp.ge.s32.totalorder %s28, 2
    %s30 = scalar_select %p29, 0, %s28
    %s31 = sadd.s32 1, %s18
    %s32 = scalar_select %p29, %s31, %s18
    %p33 = scmp.ge.s32.totalorder %s32, 2
    %s34 = scalar_select %p33, 0, %s32
    %s35 = sadd.s32 1, %s17
    %s36 = scalar_select %p33, %s35, %s17
    %p37 = scmp.ge.s32.totalorder %s36, 4
    %s38 = scalar_select %p37, 0, %s36
    %s39 = sadd.s32 1, %s16
    %s40 = scalar_select %p37, %s39, %s16
    %p41 = scmp.ge.s32.totalorder %s40, 2
    %s42 = scalar_select %p41, 0, %s40
    %s43 = ssub.s32 %s16, %s42
    %s44 = ssub.s32 %s17, %s38
    %s45 = sor.u32 %s43, %s44
    %s46 = ssub.s32 %s18, %s34
    %s47 = sor.u32 %s45, %s46
    %p48 = scmp.eq.s32.totalorder %s47, 0
    %s50 = sadd.s32 %s49, 1
    %s51 = scalar_select %p48, %s49, %s50
    %p54 = pneg %p48
    %p55 = scmp.eq.s32.totalorder %s9, 31
    %p56 = por %p54, %p55
    %p57 = scmp.ne.s32.totalorder %s49, %s52
    %p58 = scmp.eq.s32.totalorder %s9, 0
    %p59 = por %p57, %p58
    %p60 = scmp.ne.s32.totalorder %s49, %s52
    %p61 = scmp.eq.s32.totalorder %s14, 31
    %p62 = por %p60, %p61
    %p63 = scmp.ne.s32.totalorder %s52, %s53
    %p64 = scmp.eq.s32.totalorder %s14, 0
    %p65 = por %p63, %p64
    %p66 = scmp.ne.s32.totalorder %s52, %s53
    %p67 = scmp.eq.s32.totalorder %s15, 31
    %p68 = por %p66, %p67
    %p70 = scmp.ne.s32.totalorder %s53, %s69
    %p71 = scmp.eq.s32.totalorder %s15, 0
    %p72 = por %p70, %p71
    %s73 = ssub.s32 %s16, %s42
    %s74 = ssub.s32 %s17, %s38
    %s75 = sor.u32 %s73, %s74
    %s76 = ssub.s32 %s19, %s30
    %s77 = sor.u32 %s75, %s76
    %p78 = scmp.eq.s32.totalorder %s77, 0
    %s80 = sadd.s32 %s79, 1
    %s81 = scalar_select %p78, %s79, %s80
    %p84 = pneg %p78
    %p85 = scmp.eq.s32.totalorder %s9, 31
    %p86 = por %p84, %p85
    %p87 = scmp.ne.s32.totalorder %s79, %s82
    %p88 = scmp.eq.s32.totalorder %s9, 0
    %p89 = por %p87, %p88
    %p90 = scmp.ne.s32.totalorder %s79, %s82
    %p91 = scmp.eq.s32.totalorder %s14, 31
    %p92 = por %p90, %p91
    %p93 = scmp.ne.s32.totalorder %s82, %s83
    %p94 = scmp.eq.s32.totalorder %s14, 0
    %p95 = por %p93, %p94
    %p96 = scmp.ne.s32.totalorder %s82, %s83
    %p97 = scmp.eq.s32.totalorder %s15, 31
    %p98 = por %p96, %p97
    %p100 = scmp.ne.s32.totalorder %s83, %s99
    %p101 = scmp.eq.s32.totalorder %s15, 0
    %p102 = por %p100, %p101
    %s103 = ssub.s32 %s16, %s42
    %s104 = ssub.s32 %s17, %s38
    %s105 = sor.u32 %s103, %s104
    %s106 = ssub.s32 %s19, %s30
    %s107 = sor.u32 %s105, %s106
    %p108 = scmp.eq.s32.totalorder %s107, 0
    %s110 = sadd.s32 %s109, 1
    %s111 = scalar_select %p108, %s109, %s110
    %p114 = pneg %p108
    %p115 = scmp.eq.s32.totalorder %s9, 31
    %p116 = por %p114, %p115
    %p117 = scmp.ne.s32.totalorder %s109, %s112
    %p118 = scmp.eq.s32.totalorder %s9, 0
    %p119 = por %p117, %p118
    %p120 = scmp.ne.s32.totalorder %s109, %s112
    %p121 = scmp.eq.s32.totalorder %s14, 31
    %p122 = por %p120, %p121
    %p123 = scmp.ne.s32.totalorder %s112, %s113
    %p124 = scmp.eq.s32.totalorder %s14, 0
    %p125 = por %p123, %p124
    %p126 = scmp.ne.s32.totalorder %s112, %s113
    %p127 = scmp.eq.s32.totalorder %s15, 31
    %p128 = por %p126, %p127
    %p130 = scmp.ne.s32.totalorder %s113, %s129
    %p131 = scmp.eq.s32.totalorder %s15, 0
    %p132 = por %p130, %p131
    %s133 = ssub.s32 %s16, %s42
    %s134 = ssub.s32 %s17, %s38
    %s135 = sor.u32 %s133, %s134
    %s136 = ssub.s32 %s18, %s34
    %s137 = sor.u32 %s135, %s136
    %p138 = scmp.eq.s32.totalorder %s137, 0
    %s140 = sadd.s32 %s139, 1
    %s141 = scalar_select %p138, %s139, %s140
    %p144 = pneg %p138
    %p145 = scmp.eq.s32.totalorder %s9, 31
    %p146 = por %p144, %p145
    %p147 = scmp.ne.s32.totalorder %s139, %s142
    %p148 = scmp.eq.s32.totalorder %s9, 0
    %p149 = por %p147, %p148
    %p150 = scmp.ne.s32.totalorder %s139, %s142
    %p151 = scmp.eq.s32.totalorder %s14, 31
    %p152 = por %p150, %p151
    %p153 = scmp.ne.s32.totalorder %s142, %s143
    %p154 = scmp.eq.s32.totalorder %s14, 0
    %p155 = por %p153, %p154
    %p156 = scmp.ne.s32.totalorder %s142, %s143
    %p157 = scmp.eq.s32.totalorder %s15, 31
    %p158 = por %p156, %p157
    %p160 = scmp.ne.s32.totalorder %s143, %s159
    %p161 = scmp.eq.s32.totalorder %s15, 0
    %p162 = por %p160, %p161
    %p163 = scmp.le.s32.totalorder 1, %s9
    %p164 = scmp.lt.s32.totalorder %s9, 33
    %p165 = pnand %p163, %p164
    %p166 = pneg %p165
    // Predicated region
    $region9: #{phi_block.4} parent=5 // pred_check
      _
    $region10: #{phi_block.4} parent=5 // pred_check_branch
      %168 = sbr.rel (%p165) target = $region12
    $region11: #{phi_block.4} parent=5 // pred_region
      %s169 = ssub.s32 %s9, 1
    $region12: #{phi_block.4} parent=5 // pred_fallthru
      _
    %p170 = scmp.lt.s32.totalorder %s9, 32
    // Predicated region
    $region13: #{phi_block.4} parent=5 // pred_check
      %p171 = pneg %p170
    $region14: #{phi_block.4} parent=5 // pred_check_branch
      %173 = sbr.rel (%p171) target = $region16
    $region15: #{phi_block.4} parent=5 // pred_region
      // Predicated region
      $region17: #{phi_block.4} parent=15 // pred_check
        %p174 = pneg %p59
      $region18: #{phi_block.4} parent=15 // pred_check_branch
        %176 = sbr.rel (%p174) target = $region20
      $region19: #{phi_block.4} parent=15 // pred_region
        %s177 = smul.u32 2, %s18
        %p178 = scmp.lt.s32.totalorder %s16, 1
        %s179 = scalar_select %p178, %s16, 1
        %p180 = scmp.lt.s32.totalorder %s17, 3
        %s181 = scalar_select %p180, %s17, 3
        %p182 = scmp.lt.s32.totalorder %s177, 3
        %s183 = scalar_select %p182, %s177, 3
        %s184 = smul.addr %s181, 4
        %s185 = sadd.s32 %s183, %s184
        %s186 = smul.addr %s179, 16
        %s187 = sadd.s32 %s185, %s186
        %s188 = smul.addr %s187, 4
        %s189 = scalar_lea.vmem %s0, %s188
        %s190 = smul.u32 2, %s18
      $region20: #{phi_block.4} parent=15 // pred_fallthru
        _
      // Predicated region
      $region21: #{phi_block.4} parent=15 // pred_check
        %p191 = pneg %p89
      $region22: #{phi_block.4} parent=15 // pred_check_branch
        %193 = sbr.rel (%p191) target = $region24
      $region23: #{phi_block.4} parent=15 // pred_region
        %s194 = smul.u32 2, %s19
        %p195 = scmp.lt.s32.totalorder %s16, 1
        %s196 = scalar_select %p195, %s16, 1
        %p197 = scmp.lt.s32.totalorder %s17, 3
        %s198 = scalar_select %p197, %s17, 3
        %p199 = scmp.lt.s32.totalorder %s194, 3
        %s200 = scalar_select %p199, %s194, 3
        %s201 = smul.addr %s198, 4
        %s202 = sadd.s32 %s200, %s201
        %s203 = smul.addr %s196, 16
        %s204 = sadd.s32 %s202, %s203
        %s205 = smul.addr %s204, 4
        %s206 = scalar_lea.vmem %s1, %s205
        %s207 = smul.u32 2, %s19
      $region24: #{phi_block.4} parent=15 // pred_fallthru
        _
      // Predicated region
      $region25: #{phi_block.4} parent=15 // pred_check
        %p208 = pneg %p119
      $region26: #{phi_block.4} parent=15 // pred_check_branch
        %210 = sbr.rel (%p208) target = $region28
      $region27: #{phi_block.4} parent=15 // pred_region
        %s211 = smul.u32 2, %s19
        %p212 = scmp.lt.s32.totalorder %s16, 1
        %s213 = scalar_select %p212, %s16, 1
        %p214 = scmp.lt.s32.totalorder %s17, 3
        %s215 = scalar_select %p214, %s17, 3
        %p216 = scmp.lt.s32.totalorder %s211, 3
        %s217 = scalar_select %p216, %s211, 3
        %s218 = smul.addr %s215, 4
        %s219 = sadd.s32 %s217, %s218
        %s220 = smul.addr %s213, 16
        %s221 = sadd.s32 %s219, %s220
        %s222 = smul.addr %s221, 4
        %s223 = scalar_lea.vmem %s2, %s222
        %s224 = smul.u32 2, %s19
      $region28: #{phi_block.4} parent=15 // pred_fallthru
        _
    $region16: #{phi_block.4} parent=5 // pred_fallthru
      _
    %p225 = scmp.le.s32.totalorder 1, %s9
    %p226 = scmp.lt.s32.totalorder %s9, 33
    %p227 = pnand %p225, %p226
    %p228 = pneg %p227
    // Predicated region
    $region29: #{phi_block.4} parent=5 // pred_check
      _
    $region30: #{phi_block.4} parent=5 // pred_check_branch
      %230 = sbr.rel (%p227) target = $region32
    $region31: #{phi_block.4} parent=5 // pred_region
      %s231 = ssub.s32 %s9, 1
      %s232 = smul.u32 2, %s22
      %p233 = scmp.lt.s32.totalorder %s20, 1
      %s234 = scalar_select %p233, %s20, 1
      %p235 = scmp.lt.s32.totalorder %s21, 3
      %s236 = scalar_select %p235, %s21, 3
      %p237 = scmp.lt.s32.totalorder %s232, 3
      %s238 = scalar_select %p237, %s232, 3
      %s239 = smul.addr %s236, 4
      %s240 = sadd.s32 %s238, %s239
      %s241 = smul.addr %s234, 16
      %s242 = sadd.s32 %s240, %s241
      %s243 = smul.addr %s242, 4
      %s244 = scalar_lea.vmem %s0, %s243
      %p245 = pneg %p65
      %p246 = pneg %p62
      %s247 = smul.u32 2, %s23
      %p248 = scmp.lt.s32.totalorder %s20, 1
      %s249 = scalar_select %p248, %s20, 1
      %p250 = scmp.lt.s32.totalorder %s21, 3
      %s251 = scalar_select %p250, %s21, 3
      %p252 = scmp.lt.s32.totalorder %s247, 3
      %s253 = scalar_select %p252, %s247, 3
      %s254 = smul.addr %s251, 4
      %s255 = sadd.s32 %s253, %s254
      %s256 = smul.addr %s249, 16
      %s257 = sadd.s32 %s255, %s256
      %s258 = smul.addr %s257, 4
      %s259 = scalar_lea.vmem %s1, %s258
      %p260 = pneg %p95
      %p261 = pneg %p92
      %s262 = smul.u32 2, %s23
      %p263 = scmp.lt.s32.totalorder %s20, 1
      %s264 = scalar_select %p263, %s20, 1
      %p265 = scmp.lt.s32.totalorder %s21, 3
      %s266 = scalar_select %p265, %s21, 3
      %p267 = scmp.lt.s32.totalorder %s262, 3
      %s268 = scalar_select %p267, %s262, 3
      %s269 = smul.addr %s266, 4
      %s270 = sadd.s32 %s268, %s269
      %s271 = smul.addr %s264, 16
      %s272 = sadd.s32 %s270, %s271
      %s273 = smul.addr %s272, 4
      %s274 = scalar_lea.vmem %s2, %s273
      %p275 = pneg %p125
      %p276 = pneg %p122
      %p277 = pneg %p155
      %p278 = pneg %p152
      %s279 = smul.u32 2, %s22
      %p280 = scmp.lt.s32.totalorder %s20, 1
      %s281 = scalar_select %p280, %s20, 1
      %p282 = scmp.lt.s32.totalorder %s21, 3
      %s283 = scalar_select %p282, %s21, 3
      %p284 = scmp.lt.s32.totalorder %s279, 3
      %s285 = scalar_select %p284, %s279, 3
      %s286 = smul.addr %s283, 4
      %s287 = sadd.s32 %s285, %s286
      %s288 = smul.addr %s281, 16
      %s289 = sadd.s32 %s287, %s288
      %s290 = smul.addr %s289, 4
      %s291 = scalar_lea.vmem %s3, %s290
      %s292 = smul.u32 2, %s22
      %p293 = scmp.lt.s32.totalorder %s20, 1
      %s294 = scalar_select %p293, %s20, 1
      %p295 = scmp.lt.s32.totalorder %s21, 3
      %s296 = scalar_select %p295, %s21, 3
      %p297 = scmp.lt.s32.totalorder %s292, 3
      %s298 = scalar_select %p297, %s292, 3
      %s299 = smul.addr %s296, 4
      %s300 = sadd.s32 %s298, %s299
      %s301 = smul.addr %s294, 16
      %s302 = sadd.s32 %s300, %s301
      %s303 = smul.addr %s302, 4
      %s304 = scalar_lea.vmem %s0, %s303
      %s305 = smul.u32 2, %s22
      %s306 = smul.u32 2, %s23
      %p307 = scmp.lt.s32.totalorder %s20, 1
      %s308 = scalar_select %p307, %s20, 1
      %p309 = scmp.lt.s32.totalorder %s21, 3
      %s310 = scalar_select %p309, %s21, 3
      %p311 = scmp.lt.s32.totalorder %s306, 3
      %s312 = scalar_select %p311, %s306, 3
      %s313 = smul.addr %s310, 4
      %s314 = sadd.s32 %s312, %s313
      %s315 = smul.addr %s308, 16
      %s316 = sadd.s32 %s314, %s315
      %s317 = smul.addr %s316, 4
      %s318 = scalar_lea.vmem %s1, %s317
      %s319 = smul.u32 2, %s23
      %s320 = smul.u32 2, %s23
      %p321 = scmp.lt.s32.totalorder %s20, 1
      %s322 = scalar_select %p321, %s20, 1
      %p323 = scmp.lt.s32.totalorder %s21, 3
      %s324 = scalar_select %p323, %s21, 3
      %p325 = scmp.lt.s32.totalorder %s320, 3
      %s326 = scalar_select %p325, %s320, 3
      %s327 = smul.addr %s324, 4
      %s328 = sadd.s32 %s326, %s327
      %s329 = smul.addr %s322, 16
      %s330 = sadd.s32 %s328, %s329
      %s331 = smul.addr %s330, 4
      %s332 = scalar_lea.vmem %s2, %s331
      %s333 = smul.u32 2, %s23
      %s334 = smul.u32 2, %s22
      %p335 = scmp.lt.s32.totalorder %s20, 1
      %s336 = scalar_select %p335, %s20, 1
      %p337 = scmp.lt.s32.totalorder %s21, 3
      %s338 = scalar_select %p337, %s21, 3
      %p339 = scmp.lt.s32.totalorder %s334, 3
      %s340 = scalar_select %p339, %s334, 3
      %s341 = smul.addr %s338, 4
      %s342 = sadd.s32 %s340, %s341
      %s343 = smul.addr %s336, 16
      %s344 = sadd.s32 %s342, %s343
      %s345 = smul.addr %s344, 4
      %s346 = scalar_lea.vmem %s3, %s345
      %s347 = smul.u32 2, %s22
      %p349 = scmp.eq.s32.totalorder %s23, 0
      // Predicated region
      $region33: #{phi_block.4} parent=31 // pred_check
        %p350 = pneg %p349
      $region34: #{phi_block.4} parent=31 // pred_check_branch
        %352 = sbr.rel (%p350) target = $region36
      $region35: #{phi_block.4} parent=31 // pred_region
        %vm353 = vcmask 7168
        %354 = vst.msk [vmem:[#allocation2] sm:$0xff] %vm353, -inf
        %355 = vst.msk [vmem:[#allocation2 + $0x8] sm:$0xff] %vm353, -inf
        %356 = vst.msk [vmem:[#allocation3] sm:$0xff] %vm353, 0.0
        %357 = vst.msk [vmem:[#allocation3 + $0x8] sm:$0xff] %vm353, 0.0
        %vm358 = vcmask 130048
        %359 = vst.msk [vmem:[#allocation4] sm:$0xff] %vm358, 0.0
        %360 = vst.msk [vmem:[#allocation4 + $0x8] sm:$0xff] %vm358, 0.0
      $region36: #{phi_block.4} parent=31 // pred_fallthru
        _
      %s361 = smul.u32 %s23, 16
      %s362 = smul.u32 %s22, 16
      %s363 = sadd.s32 %s362, 15
      %p364 = scmp.le.s32.totalorder %s361, %s363
      // Predicated region
      $region37: #{phi_block.4} parent=31 // pred_check
        %p365 = pneg %p364
      $region38: #{phi_block.4} parent=31 // pred_check_branch
        %367 = sbr.rel (%p365) target = $region40
      $region39: #{phi_block.4} parent=31 // pred_region
        %v368 = vld [vmem:[%s304] sm:$0xf]
        %v369 = vld [vmem:[%s304 + $0x4] sm:$0xf]
        %v370 = vld [vmem:[%s318] sm:$0xf]
        %v371 = vld [vmem:[%s318 + $0x4] sm:$0xf]
        %v372 = vld [vmem:[%s332] sm:$0xf]
        %v373 = vld [vmem:[%s332 + $0x4] sm:$0xf]
        %v376 = vunpack.c.l.b16 %v368
        %v377 = vunpack.c.l.b16 %v369
        %v378 = vpack.c.b16 %v377, %v376
        %v381 = vunpack.c.l.b16 %v370
        %v382 = vunpack.c.l.b16 %v371
        %v383 = vpack.c.b16 %v382, %v381
        %vm384 = vcmask 130048
        %v386 = vsel %vm384, %v378, 0
        %v389 = vsel %vm384, %v383, 0
        %391 = vmatpush.bf16.xpose.msra.mxu0 0
        %392 = vmatpush.bf16.xpose.msra.mxu0 0
        %393 = vmatpush.bf16.xpose.msra.mxu0 0
        %394 = vmatpush.bf16.xpose.msra.mxu0 0
        %395 = vmatpush.bf16.xpose.msra.mxu0 0
        %396 = vmatpush.bf16.xpose.msra.mxu0 0
        %397 = vmatpush.bf16.xpose.msra.mxu0 0
        %398 = vmatpush.bf16.xpose.msra.mxu0 %v389
        %399 = vmatmul.bf16.gmra.mxu0 %v386
        %v400 = vpop.f32.mrf.mxu0
        %v401 = vadd.f32 0.0, %v400
        %v402 = vpop.f32.mrf.mxu0
        %v403 = vadd.f32 0.0, %v402
        %404 = vdwg.mxu0
        %v405 = vmul.f32 %v401, 0.25
        %v406 = vmul.f32 %v403, 0.25
        %v407 = vlaneseq
        %v408 = vshrl.u32 %v407, 7
        %v409 = vadd.s32 %v408, 8
        %v410 = vstv %s362
        %v411 = vadd.s32 %v410, %v408
        %v412 = vadd.s32 %v410, %v409
        %v413 = vlaneseq
        %v414 = vand.u32 %v413, 127
        %v415 = vstv %s361
        %v416 = vadd.s32 %v415, %v414
        %vm417 = vcmp.le.s32.totalorder %v416, %v411
        %vm418 = vcmp.le.s32.totalorder %v416, %v412
        %v419 = vsel %vm417, %v405, -1e+30
        %v420 = vsel %vm418, %v406, -1e+30
        %v421 = vld [vmem:[#allocation2] sm:$0xff]
        %v422 = vld [vmem:[#allocation2 + $0x8] sm:$0xff]
        %v423 = vsel %vm384, %v419, -inf
        %424 = vmax.xlane.f32.xlu0 %v423
        %v425 = vpop.xlane.xlu0 %424
        %v426 = vsel %vm384, %v420, -inf
        %427 = vmax.xlane.f32.xlu0 %v426
        %v428 = vpop.xlane.xlu0 %427
        %v429 = vmax.f32 %v421, %v425
        %v430 = vmax.f32 %v422, %v428
        %v431 = vsub.f32 %v421, %v429
        %v432 = vsub.f32 %v422, %v430
        %v433 = vmul.f32 %v431, 1.442695
        %v434 = vpow.pop %v433
        %v435 = vmul.f32 %v432, 1.442695
        %v436 = vpow.pop %v435
        %438 = vset.pattern.permute.xlu0 0
        %439 = vperm.xlu0 %438, %v429
        %v440 = vpop.permute.xlu0 %439
        %443 = vset.pattern.permute.xlu0 0
        %444 = vperm.xlu0 %443, %v430
        %v445 = vpop.permute.xlu0 %444
        %v447 = vsub.f32 %v419, %v440
        %v448 = vsub.f32 %v420, %v445
        %v449 = vmul.f32 %v447, 1.442695
        %v450 = vpow.pop %v449
        %v451 = vmul.f32 %v448, 1.442695
        %v452 = vpow.pop %v451
        %v453 = vld [vmem:[#allocation3] sm:$0xff]
        %v454 = vld [vmem:[#allocation3 + $0x8] sm:$0xff]
        %v455 = vmul.f32 %v434, %v453
        %v456 = vmul.f32 %v436, %v454
        %v457 = vsel %vm384, %v450, 0.0
        %458 = vadd.xlane.f32.xlu0 %v457
        %v459 = vpop.xlane.xlu0 %458
        %v460 = vsel %vm384, %v452, 0.0
        %461 = vadd.xlane.f32.xlu0 %v460
        %v462 = vpop.xlane.xlu0 %461
        %v463 = vadd.f32 %v455, %v459
        %v464 = vadd.f32 %v456, %v462
        %vm465 = vcmask 7168
        %466 = vst.msk [vmem:[#allocation3] sm:$0xff] %vm465, %v463
        %467 = vst.msk [vmem:[#allocation3 + $0x8] sm:$0xff] %vm465, %v464
        %v468 = vld [vmem:[#allocation4] sm:$0xff]
        %v469 = vld [vmem:[#allocation4 + $0x8] sm:$0xff]
        %471 = vset.pattern.permute.xlu0 0
        %472 = vperm.xlu0 %471, %v434
        %v473 = vpop.permute.xlu0 %472
        %476 = vset.pattern.permute.xlu0 0
        %477 = vperm.xlu0 %476, %v436
        %v478 = vpop.permute.xlu0 %477
        %v480 = vmul.f32 %v473, %v468
        %v481 = vmul.f32 %v478, %v469
        %v482 = vpack.c.bf16 %v452, %v450
        %v485 = vunpack.c.l.b16 %v372
        %v486 = vunpack.c.l.b16 %v373
        %v487 = vpack.c.b16 %v486, %v485
        %v490 = vsel %vm384, %v482, 0
        %492 = vmatpush.bf16.msra.mxu0 0
        %493 = vmatpush.bf16.msra.mxu0 0
        %494 = vmatpush.bf16.msra.mxu0 0
        %495 = vmatpush.bf16.msra.mxu0 0
        %496 = vmatpush.bf16.msra.mxu0 0
        %497 = vmatpush.bf16.msra.mxu0 0
        %498 = vmatpush.bf16.msra.mxu0 0
        %499 = vmatpush.bf16.msra.mxu0 %v487
        %500 = vmatmul.bf16.gmra.mxu0 %v490
        %v501 = vpop.f32.mrf.mxu0
        %v502 = vadd.f32 0.0, %v501
        %v503 = vpop.f32.mrf.mxu0
        %v504 = vadd.f32 0.0, %v503
        %505 = vdwg.mxu0
        %v506 = vadd.f32 %v480, %v502
        %v507 = vadd.f32 %v481, %v504
        %508 = vst.msk [vmem:[#allocation4] sm:$0xff] %vm384, %v506
        %509 = vst.msk [vmem:[#allocation4 + $0x8] sm:$0xff] %vm384, %v507
        %510 = vst.msk [vmem:[#allocation2] sm:$0xff] %vm465, %v429
        %511 = vst.msk [vmem:[#allocation2 + $0x8] sm:$0xff] %vm465, %v430
      $region40: #{phi_block.4} parent=31 // pred_fallthru
        _
      %p512 = scmp.eq.s32.totalorder %s23, 1
      // Predicated region
      $region41: #{phi_block.4} parent=31 // pred_check
        %p513 = pneg %p512
      $region42: #{phi_block.4} parent=31 // pred_check_branch
        %515 = sbr.rel (%p513) target = $region44
      $region43: #{phi_block.4} parent=31 // pred_region
        %v516 = vld [vmem:[#allocation3] sm:$0xff]
        %v517 = vld [vmem:[#allocation3 + $0x8] sm:$0xff]
        %v518 = vrcp.pop %v516
        %v519 = vrcp.pop %v517
        %v520 = vld [vmem:[#allocation4] sm:$0xff]
        %v521 = vld [vmem:[#allocation4 + $0x8] sm:$0xff]
        %523 = vset.pattern.permute.xlu0 0
        %524 = vperm.xlu0 %523, %v518
        %v525 = vpop.permute.xlu0 %524
        %528 = vset.pattern.permute.xlu0 0
        %529 = vperm.xlu0 %528, %v519
        %v530 = vpop.permute.xlu0 %529
        %v532 = vmul.f32 %v520, %v525
        %v533 = vmul.f32 %v521, %v530
        %v534 = vpack.c.bf16 %v532, %v532
        %v535 = vpack.c.bf16 %v533, %v533
        %vm536 = vcmask 125952
        %537 = vst.msk [vmem:[%s346] sm:$0xf] %vm536, %v534
        %538 = vst.msk [vmem:[%s346 + $0x4] sm:$0xf] %vm536, %v535
      $region44: #{phi_block.4} parent=31 // pred_fallthru
        _
      %s539 = smul.u32 2, %s22
      %p540 = scmp.lt.s32.totalorder %s20, 1
      %s541 = scalar_select %p540, %s20, 1
      %p542 = scmp.lt.s32.totalorder %s21, 3
      %s543 = scalar_select %p542, %s21, 3
      %p544 = scmp.lt.s32.totalorder %s539, 3
      %s545 = scalar_select %p544, %s539, 3
      %s546 = smul.addr %s543, 4
      %s547 = sadd.s32 %s545, %s546
      %s548 = smul.addr %s541, 16
      %s549 = sadd.s32 %s547, %s548
      %s550 = smul.addr %s549, 4
      %s551 = scalar_lea.vmem %s3, %s550
      // Predicated region
      $region45: #{phi_block.4} parent=31 // pred_check
        %p552 = pneg %p152
      $region46: #{phi_block.4} parent=31 // pred_check_branch
        %554 = sbr.rel (%p552) target = $region48
      $region47: #{phi_block.4} parent=31 // pred_region
        %s555 = smul.u32 2, %s22
      $region48: #{phi_block.4} parent=31 // pred_fallthru
        _
    $region32: #{phi_block.4} parent=5 // pred_fallthru
      _
    %p556 = scmp.le.s32.totalorder 2, %s9
    // Predicated region
    $region49: #{phi_block.4} parent=5 // pred_check
      %p557 = pneg %p556
    $region50: #{phi_block.4} parent=5 // pred_check_branch
      %559 = sbr.rel (%p557) target = $region52
    $region51: #{phi_block.4} parent=5 // pred_region
      %s560 = ssub.s32 %s9, 2
      // Predicated region
      $region53: #{phi_block.4} parent=51 // pred_check
        %p561 = pneg %p158
      $region54: #{phi_block.4} parent=51 // pred_check_branch
        %563 = sbr.rel (%p561) target = $region56
      $region55: #{phi_block.4} parent=51 // pred_region
        %s564 = smul.u32 2, %s26
        %p565 = scmp.lt.s32.totalorder %s24, 1
        %s566 = scalar_select %p565, %s24, 1
        %p567 = scmp.lt.s32.totalorder %s25, 3
        %s568 = scalar_select %p567, %s25, 3
        %p569 = scmp.lt.s32.totalorder %s564, 3
        %s570 = scalar_select %p569, %s564, 3
        %s571 = smul.addr %s568, 4
        %s572 = sadd.s32 %s570, %s571
        %s573 = smul.addr %s566, 16
        %s574 = sadd.s32 %s572, %s573
        %s575 = smul.addr %s574, 4
        %s576 = scalar_lea.vmem %s3, %s575
      $region56: #{phi_block.4} parent=51 // pred_fallthru
        _
    $region52: #{phi_block.4} parent=5 // pred_fallthru
      _
  $region6: #{phi_block.4} parent=0 // loop_footer
    %s13 = sadd.s32 1, %s9
  $region7: #{phi_block.4} parent=0 // loop_footer_branch
    %8 = sbr.rel target = $region3
  $region8: #{phi_block.4} parent=0 // loop_exit
    _

// kernel: phi_block.3
$region0: #{phi_block.3}
  #allocation0 [shape = 'u32[]', space=smem, size = 0x4, offset = 0x4, fixed_abs, tag = 'smem constant byte address 0x4 - core index']
  #allocation1 [shape = 'u32[72,128]{1,0:T(1,128)}', space=vmem, size = 0x9000, scoped, tag = 'internal scratch']
  %s0 = inlined_call_operand.vmem [shape: f32[2,32,64], index: 0, kind: input, shape index: {}]
  %s1 = inlined_call_operand.vmem [shape: f32[1,64], index: 1, kind: input, shape index: {}]
  %s2 = inlined_call_operand.vmem [shape: f32[1,64], index: 2, kind: input, shape index: {}]
  %s3 = inlined_call_operand.vmem [shape: bf16[64,64], index: 3, kind: input, shape index: {}]
  %s4 = inlined_call_operand.vmem [shape: f32[1,64], index: 4, kind: input, shape index: {}]
  %s5 = inlined_call_operand.vmem [shape: bf16[64,64], index: 5, kind: input, shape index: {}]
  %s6 = inlined_call_operand.vmem [shape: f32[1,64], index: 6, kind: input, shape index: {}]
  %s7 = inlined_call_operand.vmem [shape: bf16[64,64], index: 7, kind: input, shape index: {}]
  %s8 = inlined_call_operand.vmem [shape: f32[1,64], index: 8, kind: input, shape index: {}]
  %s9 = inlined_call_operand.vmem [shape: f32[32,64], index: 9, kind: input, shape index: {}]
  %s10 = inlined_call_operand.vmem [shape: f32[32,64], index: 10, kind: input, shape index: {}]
  %s11 = inlined_call_operand.vmem [shape: f32[32,64], index: 11, kind: input, shape index: {}]
  %s12 = inlined_call_operand.vmem [shape: bf16[2,32,64], index: 12, kind: output, shape index: {0}]
  %s13 = inlined_call_operand.vmem [shape: bf16[2,32,64], index: 13, kind: output, shape index: {1}]
  %s14 = inlined_call_operand.vmem [shape: bf16[2,32,64], index: 14, kind: output, shape index: {2}]
  %15 = xla_tuple %s12, %s13, %s14
  %s16 = sld [smem:[#allocation0]]
  $region97: #{phi_block.3} parent=0
    _
  %s18 = ssub.s32 1, %s16
  %s19 = scalar_select 0, %s18, %s16
  loop: start=0, step=1, limit=6
  $region2: #{phi_block.3} parent=0 // loop_pre_header
    _
  $region3: #{phi_block.3} parent=0 // loop_header
    %s21 = sphi 0, %s25
    %p22 = scmp.ge.s32.totalorder %s21, 6
    %s28 = sphi 0, %s40
    %s29 = sphi 0, %s36
    %s30 = sphi 0, %s28
    %s31 = sphi 0, %s29
    %s32 = sphi 0, %s30
    %s33 = sphi 0, %s31
    %s45 = sphi 0, %s47
    %s48 = sphi 0, %s45
    %s49 = sphi 0, %s48
    %s65 = sphi 0, %s49
    %s69 = sphi 0, %s69
    %s71 = sphi 0, %s69
    %s72 = sphi 0, %s71
    %s86 = sphi 0, %s72
    %s90 = sphi 0, %s90
    %s92 = sphi 0, %s90
    %s93 = sphi 0, %s92
    %s107 = sphi 0, %s93
    %s111 = sphi 0, %s111
    %s113 = sphi 0, %s111
    %s114 = sphi 0, %s113
    %s128 = sphi 0, %s114
    %s132 = sphi 0, %s132
    %s134 = sphi 0, %s132
    %s135 = sphi 0, %s134
    %s149 = sphi 0, %s135
    %s153 = sphi 0, %s153
    %s155 = sphi 0, %s153
    %s156 = sphi 0, %s155
    %s170 = sphi 0, %s156
    %s174 = sphi 0, %s174
    %s176 = sphi 0, %s174
    %s177 = sphi 0, %s176
    %s191 = sphi 0, %s177
    %s195 = sphi 0, %s195
    %s197 = sphi 0, %s195
    %s198 = sphi 0, %s197
    %s212 = sphi 0, %s198
    %s216 = sphi 0, %s216
    %s218 = sphi 0, %s216
    %s219 = sphi 0, %s218
    %s233 = sphi 0, %s219
    %s239 = sphi 0, %s241
    %s242 = sphi 0, %s239
    %s243 = sphi 0, %s242
    %s259 = sphi 0, %s243
    %s265 = sphi 0, %s267
    %s268 = sphi 0, %s265
    %s269 = sphi 0, %s268
    %s285 = sphi 0, %s269
    %s291 = sphi 0, %s293
    %s294 = sphi 0, %s291
    %s295 = sphi 0, %s294
    %s311 = sphi 0, %s295
    %s319 = sphi 0, %s321
    %s322 = sphi 0, %s319
    %s323 = sphi 0, %s322
    %s339 = sphi 0, %s323
    %s347 = sphi 0, %s349
    %s350 = sphi 0, %s347
    %s351 = sphi 0, %s350
    %s367 = sphi 0, %s351
    %s375 = sphi 0, %s377
    %s378 = sphi 0, %s375
    %s379 = sphi 0, %s378
    %s395 = sphi 0, %s379
  $region4: #{phi_block.3} parent=0 // loop_header_branch
    %24 = sbr.rel (%p22) target = $region8
  $region5: #{phi_block.3} parent=0 // loop_body
    %s26 = ssub.s32 %s21, 1
    %s27 = ssub.s32 %s21, 2
    %s34 = sadd.s32 1, %s29
    %p35 = scmp.ge.s32.totalorder %s34, 2
    %s36 = scalar_select %p35, 0, %s34
    %s37 = sadd.s32 1, %s28
    %s38 = scalar_select %p35, %s37, %s28
    %p39 = scmp.ge.s32.totalorder %s38, 2
    %s40 = scalar_select %p39, 0, %s38
    %s41 = ssub.s32 %s28, %s40
    %s42 = ssub.s32 %s29, %s36
    %s43 = sor.u32 %s41, %s42
    %p44 = scmp.eq.s32.totalorder %s43, 0
    %s46 = sadd.s32 %s45, 1
    %s47 = scalar_select %p44, %s45, %s46
    %p50 = pneg %p44
    %p51 = scmp.eq.s32.totalorder %s21, 3
    %p52 = por %p50, %p51
    %p53 = scmp.ne.s32.totalorder %s45, %s48
    %p54 = scmp.eq.s32.totalorder %s21, 0
    %p55 = por %p53, %p54
    %p56 = scmp.ne.s32.totalorder %s45, %s48
    %p57 = scmp.eq.s32.totalorder %s26, 3
    %p58 = por %p56, %p57
    %p59 = scmp.ne.s32.totalorder %s48, %s49
    %p60 = scmp.eq.s32.totalorder %s26, 0
    %p61 = por %p59, %p60
    %p62 = scmp.ne.s32.totalorder %s48, %s49
    %p63 = scmp.eq.s32.totalorder %s27, 3
    %p64 = por %p62, %p63
    %p66 = scmp.ne.s32.totalorder %s49, %s65
    %p67 = scmp.eq.s32.totalorder %s27, 0
    %p68 = por %p66, %p67
    %s70 = sadd.s32 %s69, 1
    %p73 = scmp.eq.s32.totalorder %s21, 3
    %p74 = scmp.ne.s32.totalorder %s69, %s71
    %p75 = scmp.eq.s32.totalorder %s21, 0
    %p76 = por %p74, %p75
    %p77 = scmp.ne.s32.totalorder %s69, %s71
    %p78 = scmp.eq.s32.totalorder %s26, 3
    %p79 = por %p77, %p78
    %p80 = scmp.ne.s32.totalorder %s71, %s72
    %p81 = scmp.eq.s32.totalorder %s26, 0
    %p82 = por %p80, %p81
    %p83 = scmp.ne.s32.totalorder %s71, %s72
    %p84 = scmp.eq.s32.totalorder %s27, 3
    %p85 = por %p83, %p84
    %p87 = scmp.ne.s32.totalorder %s72, %s86
    %p88 = scmp.eq.s32.totalorder %s27, 0
    %p89 = por %p87, %p88
    %s91 = sadd.s32 %s90, 1
    %p94 = scmp.eq.s32.totalorder %s21, 3
    %p95 = scmp.ne.s32.totalorder %s90, %s92
    %p96 = scmp.eq.s32.totalorder %s21, 0
    %p97 = por %p95, %p96
    %p98 = scmp.ne.s32.totalorder %s90, %s92
    %p99 = scmp.eq.s32.totalorder %s26, 3
    %p100 = por %p98, %p99
    %p101 = scmp.ne.s32.totalorder %s92, %s93
    %p102 = scmp.eq.s32.totalorder %s26, 0
    %p103 = por %p101, %p102
    %p104 = scmp.ne.s32.totalorder %s92, %s93
    %p105 = scmp.eq.s32.totalorder %s27, 3
    %p106 = por %p104, %p105
    %p108 = scmp.ne.s32.totalorder %s93, %s107
    %p109 = scmp.eq.s32.totalorder %s27, 0
    %p110 = por %p108, %p109
    %s112 = sadd.s32 %s111, 1
    %p115 = scmp.eq.s32.totalorder %s21, 3
    %p116 = scmp.ne.s32.totalorder %s111, %s113
    %p117 = scmp.eq.s32.totalorder %s21, 0
    %p118 = por %p116, %p117
    %p119 = scmp.ne.s32.totalorder %s111, %s113
    %p120 = scmp.eq.s32.totalorder %s26, 3
    %p121 = por %p119, %p120
    %p122 = scmp.ne.s32.totalorder %s113, %s114
    %p123 = scmp.eq.s32.totalorder %s26, 0
    %p124 = por %p122, %p123
    %p125 = scmp.ne.s32.totalorder %s113, %s114
    %p126 = scmp.eq.s32.totalorder %s27, 3
    %p127 = por %p125, %p126
    %p129 = scmp.ne.s32.totalorder %s114, %s128
    %p130 = scmp.eq.s32.totalorder %s27, 0
    %p131 = por %p129, %p130
    %s133 = sadd.s32 %s132, 1
    %p136 = scmp.eq.s32.totalorder %s21, 3
    %p137 = scmp.ne.s32.totalorder %s132, %s134
    %p138 = scmp.eq.s32.totalorder %s21, 0
    %p139 = por %p137, %p138
    %p140 = scmp.ne.s32.totalorder %s132, %s134
    %p141 = scmp.eq.s32.totalorder %s26, 3
    %p142 = por %p140, %p141
    %p143 = scmp.ne.s32.totalorder %s134, %s135
    %p144 = scmp.eq.s32.totalorder %s26, 0
    %p145 = por %p143, %p144
    %p146 = scmp.ne.s32.totalorder %s134, %s135
    %p147 = scmp.eq.s32.totalorder %s27, 3
    %p148 = por %p146, %p147
    %p150 = scmp.ne.s32.totalorder %s135, %s149
    %p151 = scmp.eq.s32.totalorder %s27, 0
    %p152 = por %p150, %p151
    %s154 = sadd.s32 %s153, 1
    %p157 = scmp.eq.s32.totalorder %s21, 3
    %p158 = scmp.ne.s32.totalorder %s153, %s155
    %p159 = scmp.eq.s32.totalorder %s21, 0
    %p160 = por %p158, %p159
    %p161 = scmp.ne.s32.totalorder %s153, %s155
    %p162 = scmp.eq.s32.totalorder %s26, 3
    %p163 = por %p161, %p162
    %p164 = scmp.ne.s32.totalorder %s155, %s156
    %p165 = scmp.eq.s32.totalorder %s26, 0
    %p166 = por %p164, %p165
    %p167 = scmp.ne.s32.totalorder %s155, %s156
    %p168 = scmp.eq.s32.totalorder %s27, 3
    %p169 = por %p167, %p168
    %p171 = scmp.ne.s32.totalorder %s156, %s170
    %p172 = scmp.eq.s32.totalorder %s27, 0
    %p173 = por %p171, %p172
    %s175 = sadd.s32 %s174, 1
    %p178 = scmp.eq.s32.totalorder %s21, 3
    %p179 = scmp.ne.s32.totalorder %s174, %s176
    %p180 = scmp.eq.s32.totalorder %s21, 0
    %p181 = por %p179, %p180
    %p182 = scmp.ne.s32.totalorder %s174, %s176
    %p183 = scmp.eq.s32.totalorder %s26, 3
    %p184 = por %p182, %p183
    %p185 = scmp.ne.s32.totalorder %s176, %s177
    %p186 = scmp.eq.s32.totalorder %s26, 0
    %p187 = por %p185, %p186
    %p188 = scmp.ne.s32.totalorder %s176, %s177
    %p189 = scmp.eq.s32.totalorder %s27, 3
    %p190 = por %p188, %p189
    %p192 = scmp.ne.s32.totalorder %s177, %s191
    %p193 = scmp.eq.s32.totalorder %s27, 0
    %p194 = por %p192, %p193
    %s196 = sadd.s32 %s195, 1
    %p199 = scmp.eq.s32.totalorder %s21, 3
    %p200 = scmp.ne.s32.totalorder %s195, %s197
    %p201 = scmp.eq.s32.totalorder %s21, 0
    %p202 = por %p200, %p201
    %p203 = scmp.ne.s32.totalorder %s195, %s197
    %p204 = scmp.eq.s32.totalorder %s26, 3
    %p205 = por %p203, %p204
    %p206 = scmp.ne.s32.totalorder %s197, %s198
    %p207 = scmp.eq.s32.totalorder %s26, 0
    %p208 = por %p206, %p207
    %p209 = scmp.ne.s32.totalorder %s197, %s198
    %p210 = scmp.eq.s32.totalorder %s27, 3
    %p211 = por %p209, %p210
    %p213 = scmp.ne.s32.totalorder %s198, %s212
    %p214 = scmp.eq.s32.totalorder %s27, 0
    %p215 = por %p213, %p214
    %s217 = sadd.s32 %s216, 1
    %p220 = scmp.eq.s32.totalorder %s21, 3
    %p221 = scmp.ne.s32.totalorder %s216, %s218
    %p222 = scmp.eq.s32.totalorder %s21, 0
    %p223 = por %p221, %p222
    %p224 = scmp.ne.s32.totalorder %s216, %s218
    %p225 = scmp.eq.s32.totalorder %s26, 3
    %p226 = por %p224, %p225
    %p227 = scmp.ne.s32.totalorder %s218, %s219
    %p228 = scmp.eq.s32.totalorder %s26, 0
    %p229 = por %p227, %p228
    %p230 = scmp.ne.s32.totalorder %s218, %s219
    %p231 = scmp.eq.s32.totalorder %s27, 3
    %p232 = por %p230, %p231
    %p234 = scmp.ne.s32.totalorder %s219, %s233
    %p235 = scmp.eq.s32.totalorder %s27, 0
    %p236 = por %p234, %p235
    %s237 = ssub.s32 %s29, %s36
    %p238 = scmp.eq.s32.totalorder %s237, 0
    %s240 = sadd.s32 %s239, 1
    %s241 = scalar_select %p238, %s239, %s240
    %p244 = pneg %p238
    %p245 = scmp.eq.s32.totalorder %s21, 3
    %p246 = por %p244, %p245
    %p247 = scmp.ne.s32.totalorder %s239, %s242
    %p248 = scmp.eq.s32.totalorder %s21, 0
    %p249 = por %p247, %p248
    %p250 = scmp.ne.s32.totalorder %s239, %s242
    %p251 = scmp.eq.s32.totalorder %s26, 3
    %p252 = por %p250, %p251
    %p253 = scmp.ne.s32.totalorder %s242, %s243
    %p254 = scmp.eq.s32.totalorder %s26, 0
    %p255 = por %p253, %p254
    %p256 = scmp.ne.s32.totalorder %s242, %s243
    %p257 = scmp.eq.s32.totalorder %s27, 3
    %p258 = por %p256, %p257
    %p260 = scmp.ne.s32.totalorder %s243, %s259
    %p261 = scmp.eq.s32.totalorder %s27, 0
    %p262 = por %p260, %p261
    %s263 = ssub.s32 %s29, %s36
    %p264 = scmp.eq.s32.totalorder %s263, 0
    %s266 = sadd.s32 %s265, 1
    %s267 = scalar_select %p264, %s265, %s266
    %p270 = pneg %p264
    %p271 = scmp.eq.s32.totalorder %s21, 3
    %p272 = por %p270, %p271
    %p273 = scmp.ne.s32.totalorder %s265, %s268
    %p274 = scmp.eq.s32.totalorder %s21, 0
    %p275 = por %p273, %p274
    %p276 = scmp.ne.s32.totalorder %s265, %s268
    %p277 = scmp.eq.s32.totalorder %s26, 3
    %p278 = por %p276, %p277
    %p279 = scmp.ne.s32.totalorder %s268, %s269
    %p280 = scmp.eq.s32.totalorder %s26, 0
    %p281 = por %p279, %p280
    %p282 = scmp.ne.s32.totalorder %s268, %s269
    %p283 = scmp.eq.s32.totalorder %s27, 3
    %p284 = por %p282, %p283
    %p286 = scmp.ne.s32.totalorder %s269, %s285
    %p287 = scmp.eq.s32.totalorder %s27, 0
    %p288 = por %p286, %p287
    %s289 = ssub.s32 %s29, %s36
    %p290 = scmp.eq.s32.totalorder %s289, 0
    %s292 = sadd.s32 %s291, 1
    %s293 = scalar_select %p290, %s291, %s292
    %p296 = pneg %p290
    %p297 = scmp.eq.s32.totalorder %s21, 3
    %p298 = por %p296, %p297
    %p299 = scmp.ne.s32.totalorder %s291, %s294
    %p300 = scmp.eq.s32.totalorder %s21, 0
    %p301 = por %p299, %p300
    %p302 = scmp.ne.s32.totalorder %s291, %s294
    %p303 = scmp.eq.s32.totalorder %s26, 3
    %p304 = por %p302, %p303
    %p305 = scmp.ne.s32.totalorder %s294, %s295
    %p306 = scmp.eq.s32.totalorder %s26, 0
    %p307 = por %p305, %p306
    %p308 = scmp.ne.s32.totalorder %s294, %s295
    %p309 = scmp.eq.s32.totalorder %s27, 3
    %p310 = por %p308, %p309
    %p312 = scmp.ne.s32.totalorder %s295, %s311
    %p313 = scmp.eq.s32.totalorder %s27, 0
    %p314 = por %p312, %p313
    %s315 = ssub.s32 %s28, %s40
    %s316 = ssub.s32 %s29, %s36
    %s317 = sor.u32 %s315, %s316
    %p318 = scmp.eq.s32.totalorder %s317, 0
    %s320 = sadd.s32 %s319, 1
    %s321 = scalar_select %p318, %s319, %s320
    %p324 = pneg %p318
    %p325 = scmp.eq.s32.totalorder %s21, 3
    %p326 = por %p324, %p325
    %p327 = scmp.ne.s32.totalorder %s319, %s322
    %p328 = scmp.eq.s32.totalorder %s21, 0
    %p329 = por %p327, %p328
    %p330 = scmp.ne.s32.totalorder %s319, %s322
    %p331 = scmp.eq.s32.totalorder %s26, 3
    %p332 = por %p330, %p331
    %p333 = scmp.ne.s32.totalorder %s322, %s323
    %p334 = scmp.eq.s32.totalorder %s26, 0
    %p335 = por %p333, %p334
    %p336 = scmp.ne.s32.totalorder %s322, %s323
    %p337 = scmp.eq.s32.totalorder %s27, 3
    %p338 = por %p336, %p337
    %p340 = scmp.ne.s32.totalorder %s323, %s339
    %p341 = scmp.eq.s32.totalorder %s27, 0
    %p342 = por %p340, %p341
    %s343 = ssub.s32 %s28, %s40
    %s344 = ssub.s32 %s29, %s36
    %s345 = sor.u32 %s343, %s344
    %p346 = scmp.eq.s32.totalorder %s345, 0
    %s348 = sadd.s32 %s347, 1
    %s349 = scalar_select %p346, %s347, %s348
    %p352 = pneg %p346
    %p353 = scmp.eq.s32.totalorder %s21, 3
    %p354 = por %p352, %p353
    %p355 = scmp.ne.s32.totalorder %s347, %s350
    %p356 = scmp.eq.s32.totalorder %s21, 0
    %p357 = por %p355, %p356
    %p358 = scmp.ne.s32.totalorder %s347, %s350
    %p359 = scmp.eq.s32.totalorder %s26, 3
    %p360 = por %p358, %p359
    %p361 = scmp.ne.s32.totalorder %s350, %s351
    %p362 = scmp.eq.s32.totalorder %s26, 0
    %p363 = por %p361, %p362
    %p364 = scmp.ne.s32.totalorder %s350, %s351
    %p365 = scmp.eq.s32.totalorder %s27, 3
    %p366 = por %p364, %p365
    %p368 = scmp.ne.s32.totalorder %s351, %s367
    %p369 = scmp.eq.s32.totalorder %s27, 0
    %p370 = por %p368, %p369
    %s371 = ssub.s32 %s28, %s40
    %s372 = ssub.s32 %s29, %s36
    %s373 = sor.u32 %s371, %s372
    %p374 = scmp.eq.s32.totalorder %s373, 0
    %s376 = sadd.s32 %s375, 1
    %s377 = scalar_select %p374, %s375, %s376
    %p380 = pneg %p374
    %p381 = scmp.eq.s32.totalorder %s21, 3
    %p382 = por %p380, %p381
    %p383 = scmp.ne.s32.totalorder %s375, %s378
    %p384 = scmp.eq.s32.totalorder %s21, 0
    %p385 = por %p383, %p384
    %p386 = scmp.ne.s32.totalorder %s375, %s378
    %p387 = scmp.eq.s32.totalorder %s26, 3
    %p388 = por %p386, %p387
    %p389 = scmp.ne.s32.totalorder %s378, %s379
    %p390 = scmp.eq.s32.totalorder %s26, 0
    %p391 = por %p389, %p390
    %p392 = scmp.ne.s32.totalorder %s378, %s379
    %p393 = scmp.eq.s32.totalorder %s27, 3
    %p394 = por %p392, %p393
    %p396 = scmp.ne.s32.totalorder %s379, %s395
    %p397 = scmp.eq.s32.totalorder %s27, 0
    %p398 = por %p396, %p397
    %p399 = scmp.le.s32.totalorder 1, %s21
    %p400 = scmp.lt.s32.totalorder %s21, 5
    %p401 = pnand %p399, %p400
    %p402 = pneg %p401
    // Predicated region
    $region9: #{phi_block.3} parent=5 // pred_check
      _
    $region10: #{phi_block.3} parent=5 // pred_check_branch
      %404 = sbr.rel (%p401) target = $region12
    $region11: #{phi_block.3} parent=5 // pred_region
      %s405 = ssub.s32 %s21, 1
      // Predicated region
      $region13: #{phi_block.3} parent=11 // pred_check
        %p406 = pneg %p82
      $region14: #{phi_block.3} parent=11 // pred_check_branch
        %408 = sbr.rel (%p406) target = $region16
      $region15: #{phi_block.3} parent=11 // pred_region
        _
      $region16: #{phi_block.3} parent=11 // pred_fallthru
        _
      // Predicated region
      $region17: #{phi_block.3} parent=11 // pred_check
        %p409 = pneg %p103
      $region18: #{phi_block.3} parent=11 // pred_check_branch
        %411 = sbr.rel (%p409) target = $region20
      $region19: #{phi_block.3} parent=11 // pred_region
        _
      $region20: #{phi_block.3} parent=11 // pred_fallthru
        _
      // Predicated region
      $region21: #{phi_block.3} parent=11 // pred_check
        %p412 = pneg %p124
      $region22: #{phi_block.3} parent=11 // pred_check_branch
        %414 = sbr.rel (%p412) target = $region24
      $region23: #{phi_block.3} parent=11 // pred_region
        _
      $region24: #{phi_block.3} parent=11 // pred_fallthru
        _
      // Predicated region
      $region25: #{phi_block.3} parent=11 // pred_check
        %p415 = pneg %p145
      $region26: #{phi_block.3} parent=11 // pred_check_branch
        %417 = sbr.rel (%p415) target = $region28
      $region27: #{phi_block.3} parent=11 // pred_region
        _
      $region28: #{phi_block.3} parent=11 // pred_fallthru
        _
      // Predicated region
      $region29: #{phi_block.3} parent=11 // pred_check
        %p418 = pneg %p166
      $region30: #{phi_block.3} parent=11 // pred_check_branch
        %420 = sbr.rel (%p418) target = $region32
      $region31: #{phi_block.3} parent=11 // pred_region
        _
      $region32: #{phi_block.3} parent=11 // pred_fallthru
        _
      // Predicated region
      $region33: #{phi_block.3} parent=11 // pred_check
        %p421 = pneg %p187
      $region34: #{phi_block.3} parent=11 // pred_check_branch
        %423 = sbr.rel (%p421) target = $region36
      $region35: #{phi_block.3} parent=11 // pred_region
        _
      $region36: #{phi_block.3} parent=11 // pred_fallthru
        _
      // Predicated region
      $region37: #{phi_block.3} parent=11 // pred_check
        %p424 = pneg %p208
      $region38: #{phi_block.3} parent=11 // pred_check_branch
        %426 = sbr.rel (%p424) target = $region40
      $region39: #{phi_block.3} parent=11 // pred_region
        _
      $region40: #{phi_block.3} parent=11 // pred_fallthru
        _
      // Predicated region
      $region41: #{phi_block.3} parent=11 // pred_check
        %p427 = pneg %p229
      $region42: #{phi_block.3} parent=11 // pred_check_branch
        %429 = sbr.rel (%p427) target = $region44
      $region43: #{phi_block.3} parent=11 // pred_region
        _
      $region44: #{phi_block.3} parent=11 // pred_fallthru
        _
    $region12: #{phi_block.3} parent=5 // pred_fallthru
      _
    %p430 = scmp.lt.s32.totalorder %s21, 4
    // Predicated region
    $region45: #{phi_block.3} parent=5 // pred_check
      %p431 = pneg %p430
    $region46: #{phi_block.3} parent=5 // pred_check_branch
      %433 = sbr.rel (%p431) target = $region48
    $region47: #{phi_block.3} parent=5 // pred_region
      // Predicated region
      $region49: #{phi_block.3} parent=47 // pred_check
        %p434 = pneg %p55
      $region50: #{phi_block.3} parent=47 // pred_check_branch
        %436 = sbr.rel (%p434) target = $region52
      $region51: #{phi_block.3} parent=47 // pred_region
        %s437 = smul.u32 2, %s29
        %p438 = scmp.lt.s32.totalorder %s28, 1
        %s439 = scalar_select %p438, %s28, 1
        %p440 = scmp.lt.s32.totalorder %s437, 3
        %s441 = scalar_select %p440, %s437, 3
        %s442 = smul.addr %s439, 4
        %s443 = sadd.s32 %s441, %s442
        %s444 = smul.addr %s443, 8
        %s445 = scalar_lea.vmem %s0, %s444
        %s446 = smul.u32 2, %s29
      $region52: #{phi_block.3} parent=47 // pred_fallthru
        _
      // Predicated region
      $region53: #{phi_block.3} parent=47 // pred_check
        %p447 = pneg %p249
      $region54: #{phi_block.3} parent=47 // pred_check_branch
        %449 = sbr.rel (%p447) target = $region56
      $region55: #{phi_block.3} parent=47 // pred_region
        %s450 = smul.u32 2, %s29
        %p451 = scmp.lt.s32.totalorder %s450, 3
        %s452 = scalar_select %p451, %s450, 3
        %s453 = smul.addr %s452, 8
        %s454 = scalar_lea.vmem %s9, %s453
        %s455 = smul.u32 2, %s29
      $region56: #{phi_block.3} parent=47 // pred_fallthru
        _
      // Predicated region
      $region57: #{phi_block.3} parent=47 // pred_check
        %p456 = pneg %p275
      $region58: #{phi_block.3} parent=47 // pred_check_branch
        %458 = sbr.rel (%p456) target = $region60
      $region59: #{phi_block.3} parent=47 // pred_region
        %s459 = smul.u32 2, %s29
        %p460 = scmp.lt.s32.totalorder %s459, 3
        %s461 = scalar_select %p460, %s459, 3
        %s462 = smul.addr %s461, 8
        %s463 = scalar_lea.vmem %s10, %s462
        %s464 = smul.u32 2, %s29
      $region60: #{phi_block.3} parent=47 // pred_fallthru
        _
      // Predicated region
      $region61: #{phi_block.3} parent=47 // pred_check
        %p465 = pneg %p301
      $region62: #{phi_block.3} parent=47 // pred_check_branch
        %467 = sbr.rel (%p465) target = $region64
      $region63: #{phi_block.3} parent=47 // pred_region
        %s468 = smul.u32 2, %s29
        %p469 = scmp.lt.s32.totalorder %s468, 3
        %s470 = scalar_select %p469, %s468, 3
        %s471 = smul.addr %s470, 8
        %s472 = scalar_lea.vmem %s11, %s471
        %s473 = smul.u32 2, %s29
      $region64: #{phi_block.3} parent=47 // pred_fallthru
        _
    $region48: #{phi_block.3} parent=5 // pred_fallthru
      _
    %p474 = scmp.le.s32.totalorder 1, %s21
    %p475 = scmp.lt.s32.totalorder %s21, 5
    %p476 = pnand %p474, %p475
    %p477 = pneg %p476
    // Predicated region
    $region65: #{phi_block.3} parent=5 // pred_check
      _
    $region66: #{phi_block.3} parent=5 // pred_check_branch
      %479 = sbr.rel (%p476) target = $region68
    $region67: #{phi_block.3} parent=5 // pred_region
      %s480 = ssub.s32 %s21, 1
      %s481 = smul.u32 2, %s31
      %p482 = scmp.lt.s32.totalorder %s30, 1
      %s483 = scalar_select %p482, %s30, 1
      %p484 = scmp.lt.s32.totalorder %s481, 3
      %s485 = scalar_select %p484, %s481, 3
      %s486 = smul.addr %s483, 4
      %s487 = sadd.s32 %s485, %s486
      %s488 = smul.addr %s487, 8
      %s489 = scalar_lea.vmem %s0, %s488
      %p490 = pneg %p61
      %p491 = pneg %p58
      %p492 = pneg %p82
      %p493 = pneg %p79
      %p494 = pneg %p103
      %p495 = pneg %p100
      %p496 = pneg %p124
      %p497 = pneg %p121
      %p498 = pneg %p145
      %p499 = pneg %p142
      %p500 = pneg %p166
      %p501 = pneg %p163
      %p502 = pneg %p187
      %p503 = pneg %p184
      %p504 = pneg %p208
      %p505 = pneg %p205
      %p506 = pneg %p229
      %p507 = pneg %p226
      %s508 = smul.u32 2, %s31
      %p509 = scmp.lt.s32.totalorder %s508, 3
      %s510 = scalar_select %p509, %s508, 3
      %s511 = smul.addr %s510, 8
      %s512 = scalar_lea.vmem %s9, %s511
      %p513 = pneg %p255
      %p514 = pneg %p252
      %s515 = smul.u32 2, %s31
      %p516 = scmp.lt.s32.totalorder %s515, 3
      %s517 = scalar_select %p516, %s515, 3
      %s518 = smul.addr %s517, 8
      %s519 = scalar_lea.vmem %s10, %s518
      %p520 = pneg %p281
      %p521 = pneg %p278
      %s522 = smul.u32 2, %s31
      %p523 = scmp.lt.s32.totalorder %s522, 3
      %s524 = scalar_select %p523, %s522, 3
      %s525 = smul.addr %s524, 8
      %s526 = scalar_lea.vmem %s11, %s525
      %p527 = pneg %p307
      %p528 = pneg %p304
      %p529 = pneg %p335
      %p530 = pneg %p332
      %s531 = smul.u32 2, %s31
      %p532 = scmp.lt.s32.totalorder %s30, 1
      %s533 = scalar_select %p532, %s30, 1
      %p534 = scmp.lt.s32.totalorder %s531, 3
      %s535 = scalar_select %p534, %s531, 3
      %s536 = smul.addr %s533, 4
      %s537 = sadd.s32 %s535, %s536
      %s538 = smul.addr %s537, 4
      %s539 = scalar_lea.vmem %s12, %s538
      %p540 = pneg %p363
      %p541 = pneg %p360
      %s542 = smul.u32 2, %s31
      %p543 = scmp.lt.s32.totalorder %s30, 1
      %s544 = scalar_select %p543, %s30, 1
      %p545 = scmp.lt.s32.totalorder %s542, 3
      %s546 = scalar_select %p545, %s542, 3
      %s547 = smul.addr %s544, 4
      %s548 = sadd.s32 %s546, %s547
      %s549 = smul.addr %s548, 4
      %s550 = scalar_lea.vmem %s13, %s549
      %p551 = pneg %p391
      %p552 = pneg %p388
      %s553 = smul.u32 2, %s31
      %p554 = scmp.lt.s32.totalorder %s30, 1
      %s555 = scalar_select %p554, %s30, 1
      %p556 = scmp.lt.s32.totalorder %s553, 3
      %s557 = scalar_select %p556, %s553, 3
      %s558 = smul.addr %s555, 4
      %s559 = sadd.s32 %s557, %s558
      %s560 = smul.addr %s559, 4
      %s561 = scalar_lea.vmem %s14, %s560
      %s562 = smul.u32 2, %s31
      %p563 = scmp.lt.s32.totalorder %s30, 1
      %s564 = scalar_select %p563, %s30, 1
      %p565 = scmp.lt.s32.totalorder %s562, 3
      %s566 = scalar_select %p565, %s562, 3
      %s567 = smul.addr %s564, 4
      %s568 = sadd.s32 %s566, %s567
      %s569 = smul.addr %s568, 8
      %s570 = scalar_lea.vmem %s0, %s569
      %s571 = smul.u32 2, %s31
      %s572 = smul.u32 2, %s31
      %p573 = scmp.lt.s32.totalorder %s572, 3
      %s574 = scalar_select %p573, %s572, 3
      %s575 = smul.addr %s574, 8
      %s576 = scalar_lea.vmem %s9, %s575
      %s577 = smul.u32 2, %s31
      %s578 = smul.u32 2, %s31
      %p579 = scmp.lt.s32.totalorder %s578, 3
      %s580 = scalar_select %p579, %s578, 3
      %s581 = smul.addr %s580, 8
      %s582 = scalar_lea.vmem %s10, %s581
      %s583 = smul.u32 2, %s31
      %s584 = smul.u32 2, %s31
      %p585 = scmp.lt.s32.totalorder %s584, 3
      %s586 = scalar_select %p585, %s584, 3
      %s587 = smul.addr %s586, 8
      %s588 = scalar_lea.vmem %s11, %s587
      %s589 = smul.u32 2, %s31
      %s590 = smul.u32 2, %s31
      %p591 = scmp.lt.s32.totalorder %s30, 1
      %s592 = scalar_select %p591, %s30, 1
      %p593 = scmp.lt.s32.totalorder %s590, 3
      %s594 = scalar_select %p593, %s590, 3
      %s595 = smul.addr %s592, 4
      %s596 = sadd.s32 %s594, %s595
      %s597 = smul.addr %s596, 4
      %s598 = scalar_lea.vmem %s12, %s597
      %s599 = smul.u32 2, %s31
      %s600 = smul.u32 2, %s31
      %p601 = scmp.lt.s32.totalorder %s30, 1
      %s602 = scalar_select %p601, %s30, 1
      %p603 = scmp.lt.s32.totalorder %s600, 3
      %s604 = scalar_select %p603, %s600, 3
      %s605 = smul.addr %s602, 4
      %s606 = sadd.s32 %s604, %s605
      %s607 = smul.addr %s606, 4
      %s608 = scalar_lea.vmem %s13, %s607
      %s609 = smul.u32 2, %s31
      %s610 = smul.u32 2, %s31
      %p611 = scmp.lt.s32.totalorder %s30, 1
      %s612 = scalar_select %p611, %s30, 1
      %p613 = scmp.lt.s32.totalorder %s610, 3
      %s614 = scalar_select %p613, %s610, 3
      %s615 = smul.addr %s612, 4
      %s616 = sadd.s32 %s614, %s615
      %s617 = smul.addr %s616, 4
      %s618 = scalar_lea.vmem %s14, %s617
      %s619 = smul.u32 2, %s31
      %v621 = vld [vmem:[%s570] sm:$0xff]
      %v622 = vld [vmem:[%s570 + $0x8] sm:$0xff]
      %vm623 = vcmask 523264
      %v624 = vsel %vm623, %v621, 0.0
      %625 = vadd.xlane.f32.xlu0 %v624
      %v626 = vpop.xlane.xlu0 %625
      %v627 = vsel %vm623, %v622, 0.0
      %628 = vadd.xlane.f32.xlu0 %v627
      %v629 = vpop.xlane.xlu0 %628
      %v630 = vrcp.pop 64.0
      %v631 = vmul.f32 64.0, %v630
      %v632 = vsub.f32 1.0, %v631
      %v633 = vmul.f32 %v630, %v632
      %v634 = vadd.f32 %v630, %v633
      %vm635 = vweird.f32 %v630
      %v636 = vsel %vm635, %v630, %v634
      %v637 = vmul.f32 %v626, %v636
      %v638 = vmul.f32 %v629, %v636
      %v639 = vsub.f32 %v621, %v637
      %v640 = vsub.f32 %v622, %v638
      %v641 = vmul.f32 %v639, %v639
      %v642 = vmul.f32 %v640, %v640
      %v643 = vsel %vm623, %v641, 0.0
      %644 = vadd.xlane.f32.xlu0 %v643
      %v645 = vpop.xlane.xlu0 %644
      %v646 = vsel %vm623, %v642, 0.0
      %647 = vadd.xlane.f32.xlu0 %v646
      %v648 = vpop.xlane.xlu0 %647
      %v649 = vmul.f32 %v645, %v636
      %v650 = vmul.f32 %v648, %v636
      %v651 = vadd.f32 %v649, 1e-05
      %v652 = vadd.f32 %v650, 1e-05
      %v653 = vrsqrt.pop %v651
      %v654 = vmul.f32 %v653, %v651
      %v655 = vmul.f32 %v654, %v653
      %v656 = vmul.f32 0.5, %v655
      %v657 = vsub.f32 1.5, %v656
      %v658 = vmul.f32 %v653, %v657
      %vm659 = vweird.f32 %v651
      %vm660 = vweird.f32 %v653
      %vm661 = vmor %vm659, %vm660
      %v662 = vsel %vm661, %v653, %v658
      %v663 = vrsqrt.pop %v652
      %v664 = vmul.f32 %v663, %v652
      %v665 = vmul.f32 %v664, %v663
      %v666 = vmul.f32 0.5, %v665
      %v667 = vsub.f32 1.5, %v666
      %v668 = vmul.f32 %v663, %v667
      %vm669 = vweird.f32 %v652
      %vm670 = vweird.f32 %v663
      %vm671 = vmor %vm669, %vm670
      %v672 = vsel %vm671, %v663, %v668
      %v673 = vmul.f32 %v639, %v662
      %v674 = vmul.f32 %v640, %v672
      %v675 = vld [vmem:[%s1] sm:$0x1]
      %v677 = vperm.slane %v675, 0
      %v679 = vmul.f32 %v673, %v677
      %v680 = vmul.f32 %v674, %v677
      %v681 = vld [vmem:[%s2] sm:$0x1]
      %v683 = vperm.slane %v681, 0
      %v685 = vadd.f32 %v679, %v683
      %v686 = vadd.f32 %v680, %v683
      %v687 = vpack.c.bf16 %v686, %v685
      %v688 = vld [vmem:[%s3] sm:$0xf]
      %v689 = vld [vmem:[%s3 + $0x4] sm:$0xf]
      %v690 = vld [vmem:[%s3 + $0x8] sm:$0xf]
      %v691 = vld [vmem:[%s3 + $0xc] sm:$0xf]
      %v692 = vld [vmem:[%s3 + $0x10] sm:$0xf]
      %v693 = vld [vmem:[%s3 + $0x14] sm:$0xf]
      %v694 = vld [vmem:[%s3 + $0x18] sm:$0xf]
      %v695 = vld [vmem:[%s3 + $0x1c] sm:$0xf]
      %v696 = vld [vmem:[%s4] sm:$0x1]
      %v698 = vperm.slane %v696, 0
      %v708 = vunpack.c.l.b16 %v688
      %v709 = vunpack.c.l.b16 %v689
      %v710 = vunpack.c.l.b16 %v690
      %v711 = vunpack.c.l.b16 %v691
      %v712 = vunpack.c.l.b16 %v692
      %v713 = vunpack.c.l.b16 %v693
      %v714 = vunpack.c.l.b16 %v694
      %v715 = vunpack.c.l.b16 %v695
      %v716 = vpack.c.b16 %v709, %v708
      %v717 = vpack.c.b16 %v711, %v710
      %v718 = vpack.c.b16 %v713, %v712
      %v719 = vpack.c.b16 %v715, %v714
      %v725 = vsel %vm623, %v687, 0
      %727 = vmatpush.bf16.msra.mxu0 0
      %728 = vmatpush.bf16.msra.mxu0 0
      %729 = vmatpush.bf16.msra.mxu0 0
      %730 = vmatpush.bf16.msra.mxu0 0
      %731 = vmatpush.bf16.msra.mxu0 %v719
      %732 = vmatpush.bf16.msra.mxu0 %v718
      %733 = vmatpush.bf16.msra.mxu0 %v717
      %734 = vmatpush.bf16.msra.mxu0 %v716
      %735 = vmatmul.bf16.gmra.mxu0 %v725
      %v736 = vpop.f32.mrf.mxu0
      %v737 = vadd.f32 %v698, %v736
      %v738 = vpop.f32.mrf.mxu0
      %v739 = vadd.f32 %v698, %v738
      %740 = vdwg.mxu0
      %v741 = vld [vmem:[%s5] sm:$0xf]
      %v742 = vld [vmem:[%s5 + $0x4] sm:$0xf]
      %v743 = vld [vmem:[%s5 + $0x8] sm:$0xf]
      %v744 = vld [vmem:[%s5 + $0xc] sm:$0xf]
      %v745 = vld [vmem:[%s5 + $0x10] sm:$0xf]
      %v746 = vld [vmem:[%s5 + $0x14] sm:$0xf]
      %v747 = vld [vmem:[%s5 + $0x18] sm:$0xf]
      %v748 = vld [vmem:[%s5 + $0x1c] sm:$0xf]
      %v749 = vld [vmem:[%s6] sm:$0x1]
      %v751 = vperm.slane %v749, 0
      %v761 = vunpack.c.l.b16 %v741
      %v762 = vunpack.c.l.b16 %v742
      %v763 = vunpack.c.l.b16 %v743
      %v764 = vunpack.c.l.b16 %v744
      %v765 = vunpack.c.l.b16 %v745
      %v766 = vunpack.c.l.b16 %v746
      %v767 = vunpack.c.l.b16 %v747
      %v768 = vunpack.c.l.b16 %v748
      %v769 = vpack.c.b16 %v762, %v761
      %v770 = vpack.c.b16 %v764, %v763
      %v771 = vpack.c.b16 %v766, %v765
      %v772 = vpack.c.b16 %v768, %v767
      %777 = vmatpush.bf16.msra.mxu0 0
      %778 = vmatpush.bf16.msra.mxu0 0
      %779 = vmatpush.bf16.msra.mxu0 0
      %780 = vmatpush.bf16.msra.mxu0 0
      %781 = vmatpush.bf16.msra.mxu0 %v772
      %782 = vmatpush.bf16.msra.mxu0 %v771
      %783 = vmatpush.bf16.msra.mxu0 %v770
      %784 = vmatpush.bf16.msra.mxu0 %v769
      %785 = vmatmul.bf16.gmra.mxu0 %v725
      %v786 = vpop.f32.mrf.mxu0
      %v787 = vadd.f32 %v751, %v786
      %v788 = vpop.f32.mrf.mxu0
      %v789 = vadd.f32 %v751, %v788
      %790 = vdwg.mxu0
      %v791 = vld [vmem:[%s7] sm:$0xf]
      %v792 = vld [vmem:[%s7 + $0x4] sm:$0xf]
      %v793 = vld [vmem:[%s7 + $0x8] sm:$0xf]
      %v794 = vld [vmem:[%s7 + $0xc] sm:$0xf]
      %v795 = vld [vmem:[%s7 + $0x10] sm:$0xf]
      %v796 = vld [vmem:[%s7 + $0x14] sm:$0xf]
      %v797 = vld [vmem:[%s7 + $0x18] sm:$0xf]
      %v798 = vld [vmem:[%s7 + $0x1c] sm:$0xf]
      %v799 = vld [vmem:[%s8] sm:$0x1]
      %v801 = vperm.slane %v799, 0
      %v811 = vunpack.c.l.b16 %v791
      %v812 = vunpack.c.l.b16 %v792
      %v813 = vunpack.c.l.b16 %v793
      %v814 = vunpack.c.l.b16 %v794
      %v815 = vunpack.c.l.b16 %v795
      %v816 = vunpack.c.l.b16 %v796
      %v817 = vunpack.c.l.b16 %v797
      %v818 = vunpack.c.l.b16 %v798
      %v819 = vpack.c.b16 %v812, %v811
      %v820 = vpack.c.b16 %v814, %v813
      %v821 = vpack.c.b16 %v816, %v815
      %v822 = vpack.c.b16 %v818, %v817
      %827 = vmatpush.bf16.msra.mxu0 0
      %828 = vmatpush.bf16.msra.mxu0 0
      %829 = vmatpush.bf16.msra.mxu0 0
      %830 = vmatpush.bf16.msra.mxu0 0
      %831 = vmatpush.bf16.msra.mxu0 %v822
      %832 = vmatpush.bf16.msra.mxu0 %v821
      %833 = vmatpush.bf16.msra.mxu0 %v820
      %834 = vmatpush.bf16.msra.mxu0 %v819
      %835 = vmatmul.bf16.gmra.mxu0 %v725
      %v836 = vpop.f32.mrf.mxu0
      %v837 = vadd.f32 %v801, %v836
      %v838 = vpop.f32.mrf.mxu0
      %v839 = vadd.f32 %v801, %v838
      %840 = vdwg.mxu0
      %v841 = vld [vmem:[%s576] sm:$0xff]
      %v842 = vld [vmem:[%s576 + $0x8] sm:$0xff]
      %v843 = vld [vmem:[%s582] sm:$0xff]
      %v844 = vld [vmem:[%s582 + $0x8] sm:$0xff]
      %v845 = vld [vmem:[%s588] sm:$0xff]
      %v846 = vld [vmem:[%s588 + $0x8] sm:$0xff]
      %849 = vrot.lane.b32.xlu0 %v737, 125
      %v850 = vpop.permute.xlu0 %849
      %851 = vrot.lane.b32.xlu0 %v739, 125
      %v852 = vpop.permute.xlu0 %851
      %855 = vrot.lane.b32.xlu0 %v737, 61
      %v856 = vpop.permute.xlu0 %855
      %857 = vrot.lane.b32.xlu0 %v739, 61
      %v858 = vpop.permute.xlu0 %857
      %vm861 = vcmask 498688
      %v862 = vsel %vm861, %v850, %v856
      %v863 = vsel %vm861, %v852, %v858
      %864 = vrot.lane.b32.xlu0 %v737, 67
      %v865 = vpop.permute.xlu0 %864
      %866 = vrot.lane.b32.xlu0 %v739, 67
      %v867 = vpop.permute.xlu0 %866
      %870 = vrot.lane.b32.xlu0 %v737, 3
      %v871 = vpop.permute.xlu0 %870
      %872 = vrot.lane.b32.xlu0 %v739, 3
      %v873 = vpop.permute.xlu0 %872
      %vm876 = vcmask 23552
      %v877 = vsel %vm876, %v865, %v871
      %v878 = vsel %vm876, %v867, %v873
      %v879 = vmul.f32 %v737, %v841
      %v880 = vmul.f32 %v739, %v842
      %v881 = vmul.f32 %v862, %v843
      %v882 = vmul.f32 %v863, %v844
      %v883 = vadd.f32 %v879, %v881
      %v884 = vadd.f32 %v880, %v882
      %v885 = vmul.f32 %v877, %v845
      %v886 = vmul.f32 %v878, %v846
      %v887 = vadd.f32 %v883, %v885
      %v888 = vadd.f32 %v884, %v886
      %v889 = vpack.c.bf16 %v887, %v887
      %v890 = vpack.c.bf16 %v888, %v888
      %vm891 = vcmask 519168
      %892 = vst.msk [vmem:[%s598] sm:$0xf] %vm891, %v889
      %893 = vst.msk [vmem:[%s598 + $0x4] sm:$0xf] %vm891, %v890
      %896 = vrot.lane.b32.xlu0 %v787, 125
      %v897 = vpop.permute.xlu0 %896
      %898 = vrot.lane.b32.xlu0 %v789, 125
      %v899 = vpop.permute.xlu0 %898
      %902 = vrot.lane.b32.xlu0 %v787, 61
      %v903 = vpop.permute.xlu0 %902
      %904 = vrot.lane.b32.xlu0 %v789, 61
      %v905 = vpop.permute.xlu0 %904
      %v908 = vsel %vm861, %v897, %v903
      %v909 = vsel %vm861, %v899, %v905
      %910 = vrot.lane.b32.xlu0 %v787, 67
      %v911 = vpop.permute.xlu0 %910
      %912 = vrot.lane.b32.xlu0 %v789, 67
      %v913 = vpop.permute.xlu0 %912
      %916 = vrot.lane.b32.xlu0 %v787, 3
      %v917 = vpop.permute.xlu0 %916
      %918 = vrot.lane.b32.xlu0 %v789, 3
      %v919 = vpop.permute.xlu0 %918
      %v922 = vsel %vm876, %v911, %v917
      %v923 = vsel %vm876, %v913, %v919
      %v924 = vmul.f32 %v787, %v841
      %v925 = vmul.f32 %v789, %v842
      %v926 = vmul.f32 %v908, %v843
      %v927 = vmul.f32 %v909, %v844
      %v928 = vadd.f32 %v924, %v926
      %v929 = vadd.f32 %v925, %v927
      %v930 = vmul.f32 %v922, %v845
      %v931 = vmul.f32 %v923, %v846
      %v932 = vadd.f32 %v928, %v930
      %v933 = vadd.f32 %v929, %v931
      %v934 = vpack.c.bf16 %v932, %v932
      %v935 = vpack.c.bf16 %v933, %v933
      %936 = vst.msk [vmem:[%s608] sm:$0xf] %vm891, %v934
      %937 = vst.msk [vmem:[%s608 + $0x4] sm:$0xf] %vm891, %v935
      %v938 = vpack.c.bf16 %v837, %v837
      %v939 = vpack.c.bf16 %v839, %v839
      %940 = vst.msk [vmem:[%s618] sm:$0xf] %vm891, %v938
      %941 = vst.msk [vmem:[%s618 + $0x4] sm:$0xf] %vm891, %v939
      %s942 = smul.u32 2, %s31
      %p943 = scmp.lt.s32.totalorder %s30, 1
      %s944 = scalar_select %p943, %s30, 1
      %p945 = scmp.lt.s32.totalorder %s942, 3
      %s946 = scalar_select %p945, %s942, 3
      %s947 = smul.addr %s944, 4
      %s948 = sadd.s32 %s946, %s947
      %s949 = smul.addr %s948, 4
      %s950 = scalar_lea.vmem %s12, %s949
      %s951 = smul.u32 2, %s31
      %p952 = scmp.lt.s32.totalorder %s30, 1
      %s953 = scalar_select %p952, %s30, 1
      %p954 = scmp.lt.s32.totalorder %s951, 3
      %s955 = scalar_select %p954, %s951, 3
      %s956 = smul.addr %s953, 4
      %s957 = sadd.s32 %s955, %s956
      %s958 = smul.addr %s957, 4
      %s959 = scalar_lea.vmem %s13, %s958
      %s960 = smul.u32 2, %s31
      %p961 = scmp.lt.s32.totalorder %s30, 1
      %s962 = scalar_select %p961, %s30, 1
      %p963 = scmp.lt.s32.totalorder %s960, 3
      %s964 = scalar_select %p963, %s960, 3
      %s965 = smul.addr %s962, 4
      %s966 = sadd.s32 %s964, %s965
      %s967 = smul.addr %s966, 4
      %s968 = scalar_lea.vmem %s14, %s967
      // Predicated region
      $region69: #{phi_block.3} parent=67 // pred_check
        %p969 = pneg %p332
      $region70: #{phi_block.3} parent=67 // pred_check_branch
        %971 = sbr.rel (%p969) target = $region72
      $region71: #{phi_block.3} parent=67 // pred_region
        %s972 = smul.u32 2, %s31
      $region72: #{phi_block.3} parent=67 // pred_fallthru
        _
      // Predicated region
      $region73: #{phi_block.3} parent=67 // pred_check
        %p973 = pneg %p360
      $region74: #{phi_block.3} parent=67 // pred_check_branch
        %975 = sbr.rel (%p973) target = $region76
      $region75: #{phi_block.3} parent=67 // pred_region
        %s976 = smul.u32 2, %s31
      $region76: #{phi_block.3} parent=67 // pred_fallthru
        _
      // Predicated region
      $region77: #{phi_block.3} parent=67 // pred_check
        %p977 = pneg %p388
      $region78: #{phi_block.3} parent=67 // pred_check_branch
        %979 = sbr.rel (%p977) target = $region80
      $region79: #{phi_block.3} parent=67 // pred_region
        %s980 = smul.u32 2, %s31
      $region80: #{phi_block.3} parent=67 // pred_fallthru
        _
    $region68: #{phi_block.3} parent=5 // pred_fallthru
      _
    %p981 = scmp.le.s32.totalorder 2, %s21
    // Predicated region
    $region81: #{phi_block.3} parent=5 // pred_check
      %p982 = pneg %p981
    $region82: #{phi_block.3} parent=5 // pred_check_branch
      %984 = sbr.rel (%p982) target = $region84
    $region83: #{phi_block.3} parent=5 // pred_region
      %s985 = ssub.s32 %s21, 2
      // Predicated region
      $region85: #{phi_block.3} parent=83 // pred_check
        %p986 = pneg %p338
      $region86: #{phi_block.3} parent=83 // pred_check_branch
        %988 = sbr.rel (%p986) target = $region88
      $region87: #{phi_block.3} parent=83 // pred_region
        %s989 = smul.u32 2, %s33
        %p990 = scmp.lt.s32.totalorder %s32, 1
        %s991 = scalar_select %p990, %s32, 1
        %p992 = scmp.lt.s32.totalorder %s989, 3
        %s993 = scalar_select %p992, %s989, 3
        %s994 = smul.addr %s991, 4
        %s995 = sadd.s32 %s993, %s994
        %s996 = smul.addr %s995, 4
        %s997 = scalar_lea.vmem %s12, %s996
      $region88: #{phi_block.3} parent=83 // pred_fallthru
        _
      // Predicated region
      $region89: #{phi_block.3} parent=83 // pred_check
        %p998 = pneg %p366
      $region90: #{phi_block.3} parent=83 // pred_check_branch
        %1000 = sbr.rel (%p998) target = $region92
      $region91: #{phi_block.3} parent=83 // pred_region
        %s1001 = smul.u32 2, %s33
        %p1002 = scmp.lt.s32.totalorder %s32, 1
        %s1003 = scalar_select %p1002, %s32, 1
        %p1004 = scmp.lt.s32.totalorder %s1001, 3
        %s1005 = scalar_select %p1004, %s1001, 3
        %s1006 = smul.addr %s1003, 4
        %s1007 = sadd.s32 %s1005, %s1006
        %s1008 = smul.addr %s1007, 4
        %s1009 = scalar_lea.vmem %s13, %s1008
      $region92: #{phi_block.3} parent=83 // pred_fallthru
        _
      // Predicated region
      $region93: #{phi_block.3} parent=83 // pred_check
        %p1010 = pneg %p394
      $region94: #{phi_block.3} parent=83 // pred_check_branch
        %1012 = sbr.rel (%p1010) target = $region96
      $region95: #{phi_block.3} parent=83 // pred_region
        %s1013 = smul.u32 2, %s33
        %p1014 = scmp.lt.s32.totalorder %s32, 1
        %s1015 = scalar_select %p1014, %s32, 1
        %p1016 = scmp.lt.s32.totalorder %s1013, 3
        %s1017 = scalar_select %p1016, %s1013, 3
        %s1018 = smul.addr %s1015, 4
        %s1019 = sadd.s32 %s1017, %s1018
        %s1020 = smul.addr %s1019, 4
        %s1021 = scalar_lea.vmem %s14, %s1020
      $region96: #{phi_block.3} parent=83 // pred_fallthru
        _
    $region84: #{phi_block.3} parent=5 // pred_fallthru
      _
  $region6: #{phi_block.3} parent=0 // loop_footer
    %s25 = sadd.s32 1, %s21
  $region7: #{phi_block.3} parent=0 // loop_footer_branch
    %20 = sbr.rel target = $region3
  $region8: #{phi_block.3} parent=0 // loop_exit
    _

// kernel: phi_block.5
$region0: #{phi_block.5}
  #allocation0 [shape = 'u32[]', space=smem, size = 0x4, offset = 0x4, fixed_abs, tag = 'smem constant byte address 0x4 - core index']
  #allocation1 [shape = 'u32[72,128]{1,0:T(1,128)}', space=vmem, size = 0x9000, scoped, tag = 'internal scratch']
  #allocation2 [shape = 'f32[16,64]{1,0:T(8,128)}', space=vmem, size = 0x2000, scoped, tag = 'scratch operand']
  #allocation3 [shape = 'bf16[16,64]{1,0:T(8,128)(2,1)}', space=vmem, size = 0x1000, scoped, tag = 'scratch operand']
  %s0 = inlined_call_operand.vmem [shape: f32[2,32,64], index: 0, kind: input, shape index: {}]
  %s1 = inlined_call_operand.vmem [shape: bf16[2,32,64], index: 1, kind: input, shape index: {}]
  %s2 = inlined_call_operand.vmem [shape: f32[1,64], index: 2, kind: input, shape index: {}]
  %s3 = inlined_call_operand.vmem [shape: f32[1,64], index: 3, kind: input, shape index: {}]
  %s4 = inlined_call_operand.vmem [shape: bf16[64,64], index: 4, kind: input, shape index: {}]
  %s5 = inlined_call_operand.vmem [shape: f32[1,64], index: 5, kind: input, shape index: {}]
  %s6 = inlined_call_operand.vmem [shape: bf16[64,256], index: 6, kind: input, shape index: {}]
  %s7 = inlined_call_operand.vmem [shape: f32[1,256], index: 7, kind: input, shape index: {}]
  %s8 = inlined_call_operand.vmem [shape: bf16[256,64], index: 8, kind: input, shape index: {}]
  %s9 = inlined_call_operand.vmem [shape: f32[1,64], index: 9, kind: input, shape index: {}]
  %s10 = inlined_call_operand.hbm [shape: f32[2,32,64], index: 10, kind: output, shape index: {}]
  %s11 = sld [smem:[#allocation0]]
  $region122: #{phi_block.5} parent=0
    _
  %s13 = ssub.s32 1, %s11
  %s14 = scalar_select 0, %s13, %s11
  $region1: #{phi_block.5} parent=0
    #allocation4 [shape = 'u8[32768]{0}', space=vmem, size = 0x8000, scoped, tag = 'input window, operand 6']
    #allocation5 [shape = 'u8[16384]{0}', space=vmem, size = 0x4000, scoped, tag = 'output window, operand 0']
    #allocation6 [shape = 's32[2]{0}', space=sflag, size = 0x8, scoped, tag = 'scoped memory for phi_block.5']
    %15 = vsyncpa [#allocation6], 0
    %s16 = scalar_lea.sflag [#allocation6], 1
    %17 = vsyncpa %s16, 0
    loop: start=0, step=1, limit=10
    $region2: #{phi_block.5} parent=1 // loop_pre_header
      _
    $region3: #{phi_block.5} parent=1 // loop_header
      %s19 = sphi 0, %s23
      %p20 = scmp.ge.s32.totalorder %s19, 10
      %s26 = sphi 0, %s45
      %s27 = sphi 0, %s41
      %s28 = sphi 0, %s37
      %s29 = sphi 0, %s26
      %s30 = sphi 0, %s27
      %s31 = sphi 0, %s28
      %s32 = sphi 0, %s29
      %s33 = sphi 0, %s30
      %s34 = sphi 0, %s31
      %s50 = sphi 0, %s52
      %s53 = sphi 0, %s50
      %s54 = sphi 0, %s53
      %s70 = sphi 0, %s54
      %s78 = sphi 0, %s80
      %s81 = sphi 0, %s78
      %s82 = sphi 0, %s81
      %s98 = sphi 0, %s82
      %s102 = sphi 0, %s102
      %s104 = sphi 0, %s102
      %s105 = sphi 0, %s104
      %s119 = sphi 0, %s105
      %s123 = sphi 0, %s123
      %s125 = sphi 0, %s123
      %s126 = sphi 0, %s125
      %s140 = sphi 0, %s126
      %s144 = sphi 0, %s144
      %s146 = sphi 0, %s144
      %s147 = sphi 0, %s146
      %s161 = sphi 0, %s147
      %s165 = sphi 0, %s165
      %s167 = sphi 0, %s165
      %s168 = sphi 0, %s167
      %s182 = sphi 0, %s168
      %s188 = sphi 0, %s190
      %s191 = sphi 0, %s188
      %s192 = sphi 0, %s191
      %s208 = sphi 0, %s192
      %s214 = sphi 0, %s216
      %s217 = sphi 0, %s214
      %s218 = sphi 0, %s217
      %s234 = sphi 0, %s218
      %s240 = sphi 0, %s242
      %s243 = sphi 0, %s240
      %s244 = sphi 0, %s243
      %s260 = sphi 0, %s244
      %s264 = sphi 0, %s264
      %s266 = sphi 0, %s264
      %s267 = sphi 0, %s266
      %s281 = sphi 0, %s267
      %s289 = sphi 0, %s291
      %s292 = sphi 0, %s289
      %s293 = sphi 0, %s292
      %s309 = sphi 0, %s293
    $region4: #{phi_block.5} parent=1 // loop_header_branch
      %22 = sbr.rel (%p20) target = $region8
    $region5: #{phi_block.5} parent=1 // loop_body
      %s24 = ssub.s32 %s19, 1
      %s25 = ssub.s32 %s19, 2
      %s35 = sadd.s32 1, %s28
      %p36 = scmp.ge.s32.totalorder %s35, 2
      %s37 = scalar_select %p36, 0, %s35
      %s38 = sadd.s32 1, %s27
      %s39 = scalar_select %p36, %s38, %s27
      %p40 = scmp.ge.s32.totalorder %s39, 2
      %s41 = scalar_select %p40, 0, %s39
      %s42 = sadd.s32 1, %s26
      %s43 = scalar_select %p40, %s42, %s26
      %p44 = scmp.ge.s32.totalorder %s43, 2
      %s45 = scalar_select %p44, 0, %s43
      %s46 = ssub.s32 %s26, %s45
      %s47 = ssub.s32 %s27, %s41
      %s48 = sor.u32 %s46, %s47
      %p49 = scmp.eq.s32.totalorder %s48, 0
      %s51 = sadd.s32 %s50, 1
      %s52 = scalar_select %p49, %s50, %s51
      %p55 = pneg %p49
      %p56 = scmp.eq.s32.totalorder %s19, 7
      %p57 = por %p55, %p56
      %p58 = scmp.ne.s32.totalorder %s50, %s53
      %p59 = scmp.eq.s32.totalorder %s19, 0
      %p60 = por %p58, %p59
      %p61 = scmp.ne.s32.totalorder %s50, %s53
      %p62 = scmp.eq.s32.totalorder %s24, 7
      %p63 = por %p61, %p62
      %p64 = scmp.ne.s32.totalorder %s53, %s54
      %p65 = scmp.eq.s32.totalorder %s24, 0
      %p66 = por %p64, %p65
      %p67 = scmp.ne.s32.totalorder %s53, %s54
      %p68 = scmp.eq.s32.totalorder %s25, 7
      %p69 = por %p67, %p68
      %p71 = scmp.ne.s32.totalorder %s54, %s70
      %p72 = scmp.eq.s32.totalorder %s25, 0
      %p73 = por %p71, %p72
      %s74 = ssub.s32 %s26, %s45
      %s75 = ssub.s32 %s27, %s41
      %s76 = sor.u32 %s74, %s75
      %p77 = scmp.eq.s32.totalorder %s76, 0
      %s79 = sadd.s32 %s78, 1
      %s80 = scalar_select %p77, %s78, %s79
      %p83 = pneg %p77
      %p84 = scmp.eq.s32.totalorder %s19, 7
      %p85 = por %p83, %p84
      %p86 = scmp.ne.s32.totalorder %s78, %s81
      %p87 = scmp.eq.s32.totalorder %s19, 0
      %p88 = por %p86, %p87
      %p89 = scmp.ne.s32.totalorder %s78, %s81
      %p90 = scmp.eq.s32.totalorder %s24, 7
      %p91 = por %p89, %p90
      %p92 = scmp.ne.s32.totalorder %s81, %s82
      %p93 = scmp.eq.s32.totalorder %s24, 0
      %p94 = por %p92, %p93
      %p95 = scmp.ne.s32.totalorder %s81, %s82
      %p96 = scmp.eq.s32.totalorder %s25, 7
      %p97 = por %p95, %p96
      %p99 = scmp.ne.s32.totalorder %s82, %s98
      %p100 = scmp.eq.s32.totalorder %s25, 0
      %p101 = por %p99, %p100
      %s103 = sadd.s32 %s102, 1
      %p106 = scmp.eq.s32.totalorder %s19, 7
      %p107 = scmp.ne.s32.totalorder %s102, %s104
      %p108 = scmp.eq.s32.totalorder %s19, 0
      %p109 = por %p107, %p108
      %p110 = scmp.ne.s32.totalorder %s102, %s104
      %p111 = scmp.eq.s32.totalorder %s24, 7
      %p112 = por %p110, %p111
      %p113 = scmp.ne.s32.totalorder %s104, %s105
      %p114 = scmp.eq.s32.totalorder %s24, 0
      %p115 = por %p113, %p114
      %p116 = scmp.ne.s32.totalorder %s104, %s105
      %p117 = scmp.eq.s32.totalorder %s25, 7
      %p118 = por %p116, %p117
      %p120 = scmp.ne.s32.totalorder %s105, %s119
      %p121 = scmp.eq.s32.totalorder %s25, 0
      %p122 = por %p120, %p121
      %s124 = sadd.s32 %s123, 1
      %p127 = scmp.eq.s32.totalorder %s19, 7
      %p128 = scmp.ne.s32.totalorder %s123, %s125
      %p129 = scmp.eq.s32.totalorder %s19, 0
      %p130 = por %p128, %p129
      %p131 = scmp.ne.s32.totalorder %s123, %s125
      %p132 = scmp.eq.s32.totalorder %s24, 7
      %p133 = por %p131, %p132
      %p134 = scmp.ne.s32.totalorder %s125, %s126
      %p135 = scmp.eq.s32.totalorder %s24, 0
      %p136 = por %p134, %p135
      %p137 = scmp.ne.s32.totalorder %s125, %s126
      %p138 = scmp.eq.s32.totalorder %s25, 7
      %p139 = por %p137, %p138
      %p141 = scmp.ne.s32.totalorder %s126, %s140
      %p142 = scmp.eq.s32.totalorder %s25, 0
      %p143 = por %p141, %p142
      %s145 = sadd.s32 %s144, 1
      %p148 = scmp.eq.s32.totalorder %s19, 7
      %p149 = scmp.ne.s32.totalorder %s144, %s146
      %p150 = scmp.eq.s32.totalorder %s19, 0
      %p151 = por %p149, %p150
      %p152 = scmp.ne.s32.totalorder %s144, %s146
      %p153 = scmp.eq.s32.totalorder %s24, 7
      %p154 = por %p152, %p153
      %p155 = scmp.ne.s32.totalorder %s146, %s147
      %p156 = scmp.eq.s32.totalorder %s24, 0
      %p157 = por %p155, %p156
      %p158 = scmp.ne.s32.totalorder %s146, %s147
      %p159 = scmp.eq.s32.totalorder %s25, 7
      %p160 = por %p158, %p159
      %p162 = scmp.ne.s32.totalorder %s147, %s161
      %p163 = scmp.eq.s32.totalorder %s25, 0
      %p164 = por %p162, %p163
      %s166 = sadd.s32 %s165, 1
      %p169 = scmp.eq.s32.totalorder %s19, 7
      %p170 = scmp.ne.s32.totalorder %s165, %s167
      %p171 = scmp.eq.s32.totalorder %s19, 0
      %p172 = por %p170, %p171
      %p173 = scmp.ne.s32.totalorder %s165, %s167
      %p174 = scmp.eq.s32.totalorder %s24, 7
      %p175 = por %p173, %p174
      %p176 = scmp.ne.s32.totalorder %s167, %s168
      %p177 = scmp.eq.s32.totalorder %s24, 0
      %p178 = por %p176, %p177
      %p179 = scmp.ne.s32.totalorder %s167, %s168
      %p180 = scmp.eq.s32.totalorder %s25, 7
      %p181 = por %p179, %p180
      %p183 = scmp.ne.s32.totalorder %s168, %s182
      %p184 = scmp.eq.s32.totalorder %s25, 0
      %p185 = por %p183, %p184
      %s186 = ssub.s32 %s28, %s37
      %p187 = scmp.eq.s32.totalorder %s186, 0
      %s189 = sadd.s32 %s188, 1
      %s190 = scalar_select %p187, %s188, %s189
      %p193 = pneg %p187
      %p194 = scmp.eq.s32.totalorder %s19, 7
      %p195 = por %p193, %p194
      %p196 = scmp.ne.s32.totalorder %s188, %s191
      %p197 = scmp.eq.s32.totalorder %s19, 0
      %p198 = por %p196, %p197
      %p199 = scmp.ne.s32.totalorder %s188, %s191
      %p200 = scmp.eq.s32.totalorder %s24, 7
      %p201 = por %p199, %p200
      %p202 = scmp.ne.s32.totalorder %s191, %s192
      %p203 = scmp.eq.s32.totalorder %s24, 0
      %p204 = por %p202, %p203
      %p205 = scmp.ne.s32.totalorder %s191, %s192
      %p206 = scmp.eq.s32.totalorder %s25, 7
      %p207 = por %p205, %p206
      %p209 = scmp.ne.s32.totalorder %s192, %s208
      %p210 = scmp.eq.s32.totalorder %s25, 0
      %p211 = por %p209, %p210
      %s212 = ssub.s32 %s28, %s37
      %p213 = scmp.eq.s32.totalorder %s212, 0
      %s215 = sadd.s32 %s214, 1
      %s216 = scalar_select %p213, %s214, %s215
      %p219 = pneg %p213
      %p220 = scmp.eq.s32.totalorder %s19, 7
      %p221 = por %p219, %p220
      %p222 = scmp.ne.s32.totalorder %s214, %s217
      %p223 = scmp.eq.s32.totalorder %s19, 0
      %p224 = por %p222, %p223
      %p225 = scmp.ne.s32.totalorder %s214, %s217
      %p226 = scmp.eq.s32.totalorder %s24, 7
      %p227 = por %p225, %p226
      %p228 = scmp.ne.s32.totalorder %s217, %s218
      %p229 = scmp.eq.s32.totalorder %s24, 0
      %p230 = por %p228, %p229
      %p231 = scmp.ne.s32.totalorder %s217, %s218
      %p232 = scmp.eq.s32.totalorder %s25, 7
      %p233 = por %p231, %p232
      %p235 = scmp.ne.s32.totalorder %s218, %s234
      %p236 = scmp.eq.s32.totalorder %s25, 0
      %p237 = por %p235, %p236
      %s238 = ssub.s32 %s28, %s37
      %p239 = scmp.eq.s32.totalorder %s238, 0
      %s241 = sadd.s32 %s240, 1
      %s242 = scalar_select %p239, %s240, %s241
      %p245 = pneg %p239
      %p246 = scmp.eq.s32.totalorder %s19, 7
      %p247 = por %p245, %p246
      %p248 = scmp.ne.s32.totalorder %s240, %s243
      %p249 = scmp.eq.s32.totalorder %s19, 0
      %p250 = por %p248, %p249
      %p251 = scmp.ne.s32.totalorder %s240, %s243
      %p252 = scmp.eq.s32.totalorder %s24, 7
      %p253 = por %p251, %p252
      %p254 = scmp.ne.s32.totalorder %s243, %s244
      %p255 = scmp.eq.s32.totalorder %s24, 0
      %p256 = por %p254, %p255
      %p257 = scmp.ne.s32.totalorder %s243, %s244
      %p258 = scmp.eq.s32.totalorder %s25, 7
      %p259 = por %p257, %p258
      %p261 = scmp.ne.s32.totalorder %s244, %s260
      %p262 = scmp.eq.s32.totalorder %s25, 0
      %p263 = por %p261, %p262
      %s265 = sadd.s32 %s264, 1
      %p268 = scmp.eq.s32.totalorder %s19, 7
      %p269 = scmp.ne.s32.totalorder %s264, %s266
      %p270 = scmp.eq.s32.totalorder %s19, 0
      %p271 = por %p269, %p270
      %p272 = scmp.ne.s32.totalorder %s264, %s266
      %p273 = scmp.eq.s32.totalorder %s24, 7
      %p274 = por %p272, %p273
      %p275 = scmp.ne.s32.totalorder %s266, %s267
      %p276 = scmp.eq.s32.totalorder %s24, 0
      %p277 = por %p275, %p276
      %p278 = scmp.ne.s32.totalorder %s266, %s267
      %p279 = scmp.eq.s32.totalorder %s25, 7
      %p280 = por %p278, %p279
      %p282 = scmp.ne.s32.totalorder %s267, %s281
      %p283 = scmp.eq.s32.totalorder %s25, 0
      %p284 = por %p282, %p283
      %s285 = ssub.s32 %s26, %s45
      %s286 = ssub.s32 %s27, %s41
      %s287 = sor.u32 %s285, %s286
      %p288 = scmp.eq.s32.totalorder %s287, 0
      %s290 = sadd.s32 %s289, 1
      %s291 = scalar_select %p288, %s289, %s290
      %p294 = pneg %p288
      %p295 = scmp.eq.s32.totalorder %s19, 7
      %p296 = por %p294, %p295
      %p297 = scmp.ne.s32.totalorder %s289, %s292
      %p298 = scmp.eq.s32.totalorder %s19, 0
      %p299 = por %p297, %p298
      %p300 = scmp.ne.s32.totalorder %s289, %s292
      %p301 = scmp.eq.s32.totalorder %s24, 7
      %p302 = por %p300, %p301
      %p303 = scmp.ne.s32.totalorder %s292, %s293
      %p304 = scmp.eq.s32.totalorder %s24, 0
      %p305 = por %p303, %p304
      %p306 = scmp.ne.s32.totalorder %s292, %s293
      %p307 = scmp.eq.s32.totalorder %s25, 7
      %p308 = por %p306, %p307
      %p310 = scmp.ne.s32.totalorder %s293, %s309
      %p311 = scmp.eq.s32.totalorder %s25, 0
      %p312 = por %p310, %p311
      %p313 = scmp.le.s32.totalorder 1, %s19
      %p314 = scmp.lt.s32.totalorder %s19, 9
      %p315 = pnand %p313, %p314
      %p316 = pneg %p315
      // Predicated region
      $region9: #{phi_block.5} parent=5 // pred_check
        _
      $region10: #{phi_block.5} parent=5 // pred_check_branch
        %318 = sbr.rel (%p315) target = $region12
      $region11: #{phi_block.5} parent=5 // pred_region
        %s319 = ssub.s32 %s19, 1
        // Predicated region
        $region13: #{phi_block.5} parent=11 // pred_check
          %p320 = pneg %p115
        $region14: #{phi_block.5} parent=11 // pred_check_branch
          %322 = sbr.rel (%p320) target = $region16
        $region15: #{phi_block.5} parent=11 // pred_region
          _
        $region16: #{phi_block.5} parent=11 // pred_fallthru
          _
        // Predicated region
        $region17: #{phi_block.5} parent=11 // pred_check
          %p323 = pneg %p136
        $region18: #{phi_block.5} parent=11 // pred_check_branch
          %325 = sbr.rel (%p323) target = $region20
        $region19: #{phi_block.5} parent=11 // pred_region
          _
        $region20: #{phi_block.5} parent=11 // pred_fallthru
          _
        // Predicated region
        $region21: #{phi_block.5} parent=11 // pred_check
          %p326 = pneg %p157
        $region22: #{phi_block.5} parent=11 // pred_check_branch
          %328 = sbr.rel (%p326) target = $region24
        $region23: #{phi_block.5} parent=11 // pred_region
          _
        $region24: #{phi_block.5} parent=11 // pred_fallthru
          _
        // Predicated region
        $region25: #{phi_block.5} parent=11 // pred_check
          %p329 = pneg %p178
        $region26: #{phi_block.5} parent=11 // pred_check_branch
          %331 = sbr.rel (%p329) target = $region28
        $region27: #{phi_block.5} parent=11 // pred_region
          _
        $region28: #{phi_block.5} parent=11 // pred_fallthru
          _
        // Predicated region
        $region29: #{phi_block.5} parent=11 // pred_check
          %p332 = pneg %p277
        $region30: #{phi_block.5} parent=11 // pred_check_branch
          %334 = sbr.rel (%p332) target = $region32
        $region31: #{phi_block.5} parent=11 // pred_region
          _
        $region32: #{phi_block.5} parent=11 // pred_fallthru
          _
      $region12: #{phi_block.5} parent=5 // pred_fallthru
        _
      %p335 = scmp.lt.s32.totalorder %s19, 8
      // Predicated region
      $region33: #{phi_block.5} parent=5 // pred_check
        %p336 = pneg %p335
      $region34: #{phi_block.5} parent=5 // pred_check_branch
        %338 = sbr.rel (%p336) target = $region36
      $region35: #{phi_block.5} parent=5 // pred_region
        // Predicated region
        $region37: #{phi_block.5} parent=35 // pred_check
          %p339 = pneg %p60
        $region38: #{phi_block.5} parent=35 // pred_check_branch
          %341 = sbr.rel (%p339) target = $region40
        $region39: #{phi_block.5} parent=35 // pred_region
          %s342 = smul.u32 2, %s27
          %p343 = scmp.lt.s32.totalorder %s26, 1
          %s344 = scalar_select %p343, %s26, 1
          %p345 = scmp.lt.s32.totalorder %s342, 3
          %s346 = scalar_select %p345, %s342, 3
          %s347 = smul.addr %s344, 4
          %s348 = sadd.s32 %s346, %s347
          %s349 = smul.addr %s348, 8
          %s350 = scalar_lea.vmem %s0, %s349
          %s351 = smul.u32 2, %s27
        $region40: #{phi_block.5} parent=35 // pred_fallthru
          _
        // Predicated region
        $region41: #{phi_block.5} parent=35 // pred_check
          %p352 = pneg %p88
        $region42: #{phi_block.5} parent=35 // pred_check_branch
          %354 = sbr.rel (%p352) target = $region44
        $region43: #{phi_block.5} parent=35 // pred_region
          %s355 = smul.u32 2, %s27
          %p356 = scmp.lt.s32.totalorder %s26, 1
          %s357 = scalar_select %p356, %s26, 1
          %p358 = scmp.lt.s32.totalorder %s355, 3
          %s359 = scalar_select %p358, %s355, 3
          %s360 = smul.addr %s357, 4
          %s361 = sadd.s32 %s359, %s360
          %s362 = smul.addr %s361, 4
          %s363 = scalar_lea.vmem %s1, %s362
          %s364 = smul.u32 2, %s27
        $region44: #{phi_block.5} parent=35 // pred_fallthru
          _
        // Predicated region
        $region45: #{phi_block.5} parent=35 // pred_check
          %p365 = pneg %p198
        $region46: #{phi_block.5} parent=35 // pred_check_branch
          %367 = sbr.rel (%p365) target = $region48
        $region47: #{phi_block.5} parent=35 // pred_region
          %s368 = sand.u32 %s188, 1
          %s369 = sand.u32 %s188, 1
          %s370 = smul.addr %s369, 32
          %s371 = scalar_lea.vmem [#allocation4], %s370
          %s372 = smul.addr %s28, 4
          %s373 = scalar_lea.vmem %s6, %s372
          // Predicated region
          $region49: #{phi_block.5} parent=47 // pred_check
            _
          $region50: #{phi_block.5} parent=47 // pred_check_branch
            %375 = sbr.rel (0) target = $region52
          $region51: #{phi_block.5} parent=47 // pred_region
            // Predicated region
            $region53: #{phi_block.5} parent=51 // pred_check
              _
            $region54: #{phi_block.5} parent=51 // pred_check_branch
              %377 = sbr.rel target = $region56
            $region55: #{phi_block.5} parent=51 // pred_region
              // Predicated region
              $region68: #{phi_block.5} parent=55 // pred_check
                _
              $region69: #{phi_block.5} parent=55 // pred_check_branch
                %407 = sbr.rel (0) target = $region71
              $region70: #{phi_block.5} parent=55 // pred_region
                loop: start=0, step=1, limit=1
                $region72: #{phi_block.5} parent=70 // loop_pre_header
                  _
                $region73: #{phi_block.5} parent=70 // loop_header
                  %s409 = sphi 0, %s413
                  %p410 = scmp.ge.s32.totalorder %s409, 1
                  %s414 = sphi %s373, %s373
                  %s415 = sphi %s371, %s371
                $region74: #{phi_block.5} parent=70 // loop_header_branch
                  %412 = sbr.rel (%p410) target = $region78
                $region75: #{phi_block.5} parent=70 // loop_body
                  _
                $region76: #{phi_block.5} parent=70 // loop_footer
                  %s413 = sadd.s32 1, %s409
                $region77: #{phi_block.5} parent=70 // loop_footer_branch
                  %408 = sbr.rel target = $region73
                $region78: #{phi_block.5} parent=70 // loop_exit
                  _
                %s417 = ssub.s32 16, 1
                loop: start=0, step=1, limit=1
                $region79: #{phi_block.5} parent=70 // loop_pre_header
                  _
                $region80: #{phi_block.5} parent=70 // loop_header
                  %s419 = sphi 0, %s423
                  %p420 = scmp.ge.s32.totalorder %s419, 1
                  %s424 = sphi %s373, %s373
                  %s425 = sphi %s371, %s371
                $region81: #{phi_block.5} parent=70 // loop_header_branch
                  %422 = sbr.rel (%p420) target = $region85
                $region82: #{phi_block.5} parent=70 // loop_body
                  %v426 = vld [vmem:[%s424] sm:%s417]
                  %427 = vst [vmem:[%s425] sm:%s417] %v426
                  %v428 = vld [vmem:[%s424 + $0x8] sm:%s417]
                  %429 = vst [vmem:[%s425 + $0x4] sm:%s417] %v428
                  %v430 = vld [vmem:[%s424 + $0x10] sm:%s417]
                  %431 = vst [vmem:[%s425 + $0x8] sm:%s417] %v430
                  %v432 = vld [vmem:[%s424 + $0x18] sm:%s417]
                  %433 = vst [vmem:[%s425 + $0xc] sm:%s417] %v432
                  %v434 = vld [vmem:[%s424 + $0x20] sm:%s417]
                  %435 = vst [vmem:[%s425 + $0x10] sm:%s417] %v434
                  %v436 = vld [vmem:[%s424 + $0x28] sm:%s417]
                  %437 = vst [vmem:[%s425 + $0x14] sm:%s417] %v436
                  %v438 = vld [vmem:[%s424 + $0x30] sm:%s417]
                  %439 = vst [vmem:[%s425 + $0x18] sm:%s417] %v438
                  %v440 = vld [vmem:[%s424 + $0x38] sm:%s417]
                  %441 = vst [vmem:[%s425 + $0x1c] sm:%s417] %v440
                $region83: #{phi_block.5} parent=70 // loop_footer
                  %s423 = sadd.s32 1, %s419
                $region84: #{phi_block.5} parent=70 // loop_footer_branch
                  %418 = sbr.rel target = $region80
                $region85: #{phi_block.5} parent=70 // loop_exit
                  _
              $region71: #{phi_block.5} parent=55 // pred_fallthru
                _
            $region56: #{phi_block.5} parent=51 // pred_fallthru
              _
            // Predicated region
            $region57: #{phi_block.5} parent=51 // pred_check
              _
            $region58: #{phi_block.5} parent=51 // pred_check_branch
              %379 = sbr.rel (0) target = $region60
            $region59: #{phi_block.5} parent=51 // pred_region
              %s381 = ssub.s32 16, 1
              loop: start=0, step=1, limit=1
              $region61: #{phi_block.5} parent=59 // loop_pre_header
                _
              $region62: #{phi_block.5} parent=59 // loop_header
                %s383 = sphi 0, %s387
                %p384 = scmp.ge.s32.totalorder %s383, 1
                %s388 = sphi %s373, %s373
                %s389 = sphi %s371, %s371
              $region63: #{phi_block.5} parent=59 // loop_header_branch
                %386 = sbr.rel (%p384) target = $region67
              $region64: #{phi_block.5} parent=59 // loop_body
                %v390 = vld [vmem:[%s388] sm:%s381]
                %391 = vst [vmem:[%s389] sm:%s381] %v390
                %v392 = vld [vmem:[%s388 + $0x8] sm:%s381]
                %393 = vst [vmem:[%s389 + $0x4] sm:%s381] %v392
                %v394 = vld [vmem:[%s388 + $0x10] sm:%s381]
                %395 = vst [vmem:[%s389 + $0x8] sm:%s381] %v394
                %v396 = vld [vmem:[%s388 + $0x18] sm:%s381]
                %397 = vst [vmem:[%s389 + $0xc] sm:%s381] %v396
                %v398 = vld [vmem:[%s388 + $0x20] sm:%s381]
                %399 = vst [vmem:[%s389 + $0x10] sm:%s381] %v398
                %v400 = vld [vmem:[%s388 + $0x28] sm:%s381]
                %401 = vst [vmem:[%s389 + $0x14] sm:%s381] %v400
                %v402 = vld [vmem:[%s388 + $0x30] sm:%s381]
                %403 = vst [vmem:[%s389 + $0x18] sm:%s381] %v402
                %v404 = vld [vmem:[%s388 + $0x38] sm:%s381]
                %405 = vst [vmem:[%s389 + $0x1c] sm:%s381] %v404
              $region65: #{phi_block.5} parent=59 // loop_footer
                %s387 = sadd.s32 1, %s383
              $region66: #{phi_block.5} parent=59 // loop_footer_branch
                %382 = sbr.rel target = $region62
              $region67: #{phi_block.5} parent=59 // loop_exit
                _
            $region60: #{phi_block.5} parent=51 // pred_fallthru
              _
          $region52: #{phi_block.5} parent=47 // pred_fallthru
            _
          %442 = vnop
        $region48: #{phi_block.5} parent=35 // pred_fallthru
          _
        // Predicated region
        $region86: #{phi_block.5} parent=35 // pred_check
          %p443 = pneg %p224
        $region87: #{phi_block.5} parent=35 // pred_check_branch
          %445 = sbr.rel (%p443) target = $region89
        $region88: #{phi_block.5} parent=35 // pred_region
          %p446 = scmp.lt.s32.totalorder %s28, 1
          %s447 = scalar_select %p446, %s28, 1
          %s448 = scalar_lea.vmem %s7, %s447
        $region89: #{phi_block.5} parent=35 // pred_fallthru
          _
        // Predicated region
        $region90: #{phi_block.5} parent=35 // pred_check
          %p449 = pneg %p250
        $region91: #{phi_block.5} parent=35 // pred_check_branch
          %451 = sbr.rel (%p449) target = $region93
        $region92: #{phi_block.5} parent=35 // pred_region
          %s452 = smul.u32 16, %s28
          %p453 = scmp.lt.s32.totalorder %s452, 31
          %s454 = scalar_select %p453, %s452, 31
          %s455 = smul.addr %s454, 4
          %s456 = scalar_lea.vmem %s8, %s455
          %s457 = smul.u32 16, %s28
        $region93: #{phi_block.5} parent=35 // pred_fallthru
          _
      $region36: #{phi_block.5} parent=5 // pred_fallthru
        _
      %p458 = scmp.le.s32.totalorder 1, %s19
      %p459 = scmp.lt.s32.totalorder %s19, 9
      %p460 = pnand %p458, %p459
      %p461 = pneg %p460
      // Predicated region
      $region94: #{phi_block.5} parent=5 // pred_check
        _
      $region95: #{phi_block.5} parent=5 // pred_check_branch
        %463 = sbr.rel (%p460) target = $region97
      $region96: #{phi_block.5} parent=5 // pred_region
        %s464 = ssub.s32 %s19, 1
        %s465 = sand.u32 %s191, 1
        %s466 = sand.u32 %s191, 1
        %s467 = smul.addr %s466, 32
        %s468 = scalar_lea.vmem [#allocation4], %s467
        // Predicated region
        $region98: #{phi_block.5} parent=96 // pred_check
          %p469 = pneg %p204
        $region99: #{phi_block.5} parent=96 // pred_check_branch
          %471 = sbr.rel (%p469) target = $region101
        $region100: #{phi_block.5} parent=96 // pred_region
          _
        $region101: #{phi_block.5} parent=96 // pred_fallthru
          _
        %s472 = smul.u32 2, %s30
        %p473 = scmp.lt.s32.totalorder %s29, 1
        %s474 = scalar_select %p473, %s29, 1
        %p475 = scmp.lt.s32.totalorder %s472, 3
        %s476 = scalar_select %p475, %s472, 3
        %s477 = smul.addr %s474, 4
        %s478 = sadd.s32 %s476, %s477
        %s479 = smul.addr %s478, 8
        %s480 = scalar_lea.vmem %s0, %s479
        %p481 = pneg %p66
        %p482 = pneg %p63
        %s483 = smul.u32 2, %s30
        %p484 = scmp.lt.s32.totalorder %s29, 1
        %s485 = scalar_select %p484, %s29, 1
        %p486 = scmp.lt.s32.totalorder %s483, 3
        %s487 = scalar_select %p486, %s483, 3
        %s488 = smul.addr %s485, 4
        %s489 = sadd.s32 %s487, %s488
        %s490 = smul.addr %s489, 4
        %s491 = scalar_lea.vmem %s1, %s490
        %p492 = pneg %p94
        %p493 = pneg %p91
        %p494 = pneg %p115
        %p495 = pneg %p112
        %p496 = pneg %p136
        %p497 = pneg %p133
        %p498 = pneg %p157
        %p499 = pneg %p154
        %p500 = pneg %p178
        %p501 = pneg %p175
        %s502 = sand.u32 %s191, 1
        %s503 = sand.u32 %s191, 1
        %s504 = smul.addr %s503, 32
        %s505 = scalar_lea.vmem [#allocation4], %s504
        %p506 = pneg %p204
        %p507 = pneg %p201
        %p508 = scmp.lt.s32.totalorder %s31, 1
        %s509 = scalar_select %p508, %s31, 1
        %s510 = scalar_lea.vmem %s7, %s509
        %p511 = pneg %p230
        %p512 = pneg %p227
        %s513 = smul.u32 16, %s31
        %p514 = scmp.lt.s32.totalorder %s513, 31
        %s515 = scalar_select %p514, %s513, 31
        %s516 = smul.addr %s515, 4
        %s517 = scalar_lea.vmem %s8, %s516
        %p518 = pneg %p256
        %p519 = pneg %p253
        %p520 = pneg %p277
        %p521 = pneg %p274
        %p522 = pneg %p305
        %p523 = pneg %p302
        %s524 = sand.u32 %s292, 1
        %s525 = scalar_lea.sflag [#allocation6], %s524
        %s526 = sand.u32 %s292, 1
        %s527 = smul.addr %s526, 16
        %s528 = scalar_lea.vmem [#allocation5], %s527
        %s529 = smul.u32 2, %s30
        %p530 = scmp.lt.s32.totalorder %s29, 1
        %s531 = scalar_select %p530, %s29, 1
        %p532 = scmp.lt.s32.totalorder %s529, 3
        %s533 = scalar_select %p532, %s529, 3
        %s534 = smul.addr %s531, 4
        %s535 = sadd.s32 %s533, %s534
        %s536 = smul.addr %s535, 8
        %s537 = scalar_lea.vmem %s0, %s536
        %s538 = smul.u32 2, %s30
        %s539 = smul.u32 2, %s30
        %p540 = scmp.lt.s32.totalorder %s29, 1
        %s541 = scalar_select %p540, %s29, 1
        %p542 = scmp.lt.s32.totalorder %s539, 3
        %s543 = scalar_select %p542, %s539, 3
        %s544 = smul.addr %s541, 4
        %s545 = sadd.s32 %s543, %s544
        %s546 = smul.addr %s545, 4
        %s547 = scalar_lea.vmem %s1, %s546
        %s548 = smul.u32 2, %s30
        %p549 = scmp.lt.s32.totalorder %s31, 1
        %s550 = scalar_select %p549, %s31, 1
        %s551 = scalar_lea.vmem %s7, %s550
        %s552 = smul.u32 16, %s31
        %p553 = scmp.lt.s32.totalorder %s552, 31
        %s554 = scalar_select %p553, %s552, 31
        %s555 = smul.addr %s554, 4
        %s556 = scalar_lea.vmem %s8, %s555
        %s557 = smul.u32 16, %s31
        %s558 = smul.u32 2, %s30
        %p560 = scmp.eq.s32.totalorder %s31, 0
        // Predicated region
        $region102: #{phi_block.5} parent=96 // pred_check
          %p561 = pneg %p560
        $region103: #{phi_block.5} parent=96 // pred_check_branch
          %563 = sbr.rel (%p561) target = $region105
        $region104: #{phi_block.5} parent=96 // pred_region
          %v564 = vld [vmem:[%s537] sm:$0xff]
          %v565 = vld [vmem:[%s537 + $0x8] sm:$0xff]
          %vm566 = vcmask 523264
          %v567 = vsel %vm566, %v564, 0.0
          %568 = vadd.xlane.f32.xlu0 %v567
          %v569 = vpop.xlane.xlu0 %568
          %v570 = vsel %vm566, %v565, 0.0
          %571 = vadd.xlane.f32.xlu0 %v570
          %v572 = vpop.xlane.xlu0 %571
          %v573 = vrcp.pop 64.0
          %v574 = vmul.f32 64.0, %v573
          %v575 = vsub.f32 1.0, %v574
          %v576 = vmul.f32 %v573, %v575
          %v577 = vadd.f32 %v573, %v576
          %vm578 = vweird.f32 %v573
          %v579 = vsel %vm578, %v573, %v577
          %v580 = vmul.f32 %v569, %v579
          %v581 = vmul.f32 %v572, %v579
          %v582 = vsub.f32 %v564, %v580
          %v583 = vsub.f32 %v565, %v581
          %v584 = vmul.f32 %v582, %v582
          %v585 = vmul.f32 %v583, %v583
          %v586 = vsel %vm566, %v584, 0.0
          %587 = vadd.xlane.f32.xlu0 %v586
          %v588 = vpop.xlane.xlu0 %587
          %v589 = vsel %vm566, %v585, 0.0
          %590 = vadd.xlane.f32.xlu0 %v589
          %v591 = vpop.xlane.xlu0 %590
          %v592 = vmul.f32 %v588, %v579
          %v593 = vmul.f32 %v591, %v579
          %v594 = vadd.f32 %v592, 1e-05
          %v595 = vadd.f32 %v593, 1e-05
          %v596 = vrsqrt.pop %v594
          %v597 = vmul.f32 %v596, %v594
          %v598 = vmul.f32 %v597, %v596
          %v599 = vmul.f32 0.5, %v598
          %v600 = vsub.f32 1.5, %v599
          %v601 = vmul.f32 %v596, %v600
          %vm602 = vweird.f32 %v594
          %vm603 = vweird.f32 %v596
          %vm604 = vmor %vm602, %vm603
          %v605 = vsel %vm604, %v596, %v601
          %v606 = vrsqrt.pop %v595
          %v607 = vmul.f32 %v606, %v595
          %v608 = vmul.f32 %v607, %v606
          %v609 = vmul.f32 0.5, %v608
          %v610 = vsub.f32 1.5, %v609
          %v611 = vmul.f32 %v606, %v610
          %vm612 = vweird.f32 %v595
          %vm613 = vweird.f32 %v606
          %vm614 = vmor %vm612, %vm613
          %v615 = vsel %vm614, %v606, %v611
          %v616 = vmul.f32 %v582, %v605
          %v617 = vmul.f32 %v583, %v615
          %v618 = vld [vmem:[%s2] sm:$0x1]
          %v620 = vperm.slane %v618, 0
          %v622 = vmul.f32 %v616, %v620
          %v623 = vmul.f32 %v617, %v620
          %v624 = vld [vmem:[%s3] sm:$0x1]
          %v626 = vperm.slane %v624, 0
          %v628 = vadd.f32 %v622, %v626
          %v629 = vadd.f32 %v623, %v626
          %v630 = vpack.c.bf16 %v628, %v628
          %v631 = vpack.c.bf16 %v629, %v629
          %vm632 = vcmask 519168
          %633 = vst.msk [vmem:[#allocation3] sm:$0xf] %vm632, %v630
          %634 = vst.msk [vmem:[#allocation3 + $0x4] sm:$0xf] %vm632, %v631
          %v635 = vld [vmem:[%s547] sm:$0xf]
          %v636 = vld [vmem:[%s547 + $0x4] sm:$0xf]
          %v637 = vld [vmem:[%s4] sm:$0xf]
          %v638 = vld [vmem:[%s4 + $0x4] sm:$0xf]
          %v639 = vld [vmem:[%s4 + $0x8] sm:$0xf]
          %v640 = vld [vmem:[%s4 + $0xc] sm:$0xf]
          %v641 = vld [vmem:[%s4 + $0x10] sm:$0xf]
          %v642 = vld [vmem:[%s4 + $0x14] sm:$0xf]
          %v643 = vld [vmem:[%s4 + $0x18] sm:$0xf]
          %v644 = vld [vmem:[%s4 + $0x1c] sm:$0xf]
          %v645 = vld [vmem:[%s5] sm:$0x1]
          %v647 = vperm.slane %v645, 0
          %v651 = vunpack.c.l.b16 %v635
          %v652 = vunpack.c.l.b16 %v636
          %v653 = vpack.c.b16 %v652, %v651
          %v662 = vunpack.c.l.b16 %v637
          %v663 = vunpack.c.l.b16 %v638
          %v664 = vunpack.c.l.b16 %v639
          %v665 = vunpack.c.l.b16 %v640
          %v666 = vunpack.c.l.b16 %v641
          %v667 = vunpack.c.l.b16 %v642
          %v668 = vunpack.c.l.b16 %v643
          %v669 = vunpack.c.l.b16 %v644
          %v670 = vpack.c.b16 %v663, %v662
          %v671 = vpack.c.b16 %v665, %v664
          %v672 = vpack.c.b16 %v667, %v666
          %v673 = vpack.c.b16 %v669, %v668
          %v679 = vsel %vm566, %v653, 0
          %681 = vmatpush.bf16.msra.mxu0 0
          %682 = vmatpush.bf16.msra.mxu0 0
          %683 = vmatpush.bf16.msra.mxu0 0
          %684 = vmatpush.bf16.msra.mxu0 0
          %685 = vmatpush.bf16.msra.mxu0 %v673
          %686 = vmatpush.bf16.msra.mxu0 %v672
          %687 = vmatpush.bf16.msra.mxu0 %v671
          %688 = vmatpush.bf16.msra.mxu0 %v670
          %689 = vmatmul.bf16.gmra.mxu0 %v679
          %v690 = vpop.f32.mrf.mxu0
          %v691 = vadd.f32 %v647, %v690
          %v692 = vpop.f32.mrf.mxu0
          %v693 = vadd.f32 %v647, %v692
          %694 = vdwg.mxu0
          %v695 = vadd.f32 %v691, %v564
          %v696 = vadd.f32 %v693, %v565
          %v697 = vld [vmem:[%s9] sm:$0x1]
          %v699 = vperm.slane %v697, 0
          %v701 = vadd.f32 %v695, %v699
          %v702 = vadd.f32 %v696, %v699
          %703 = vst.msk [vmem:[#allocation2] sm:$0xff] %vm566, %v701
          %704 = vst.msk [vmem:[#allocation2 + $0x8] sm:$0xff] %vm566, %v702
        $region105: #{phi_block.5} parent=96 // pred_fallthru
          _
        %v705 = vld [vmem:[#allocation3] sm:$0xf]
        %v706 = vld [vmem:[#allocation3 + $0x4] sm:$0xf]
        %v707 = vld [vmem:[%s468] sm:$0xf]
        %v708 = vld [vmem:[%s468 + $0x4] sm:$0xf]
        %v709 = vld [vmem:[%s468 + $0x8] sm:$0xf]
        %v710 = vld [vmem:[%s468 + $0xc] sm:$0xf]
        %v711 = vld [vmem:[%s468 + $0x10] sm:$0xf]
        %v712 = vld [vmem:[%s468 + $0x14] sm:$0xf]
        %v713 = vld [vmem:[%s468 + $0x18] sm:$0xf]
        %v714 = vld [vmem:[%s468 + $0x1c] sm:$0xf]
        %v715 = vld [vmem:[%s551] sm:$0x1]
        %v717 = vperm.slane %v715, 0
        %v721 = vunpack.c.l.b16 %v705
        %v722 = vunpack.c.l.b16 %v706
        %v723 = vpack.c.b16 %v722, %v721
        %v732 = vunpack.c.l.b16 %v707
        %v733 = vunpack.c.l.b16 %v708
        %v734 = vunpack.c.l.b16 %v709
        %v735 = vunpack.c.l.b16 %v710
        %v736 = vunpack.c.l.b16 %v711
        %v737 = vunpack.c.l.b16 %v712
        %v738 = vunpack.c.l.b16 %v713
        %v739 = vunpack.c.l.b16 %v714
        %v740 = vpack.c.b16 %v733, %v732
        %v741 = vpack.c.b16 %v735, %v734
        %v742 = vpack.c.b16 %v737, %v736
        %v743 = vpack.c.b16 %v739, %v738
        %vm748 = vcmask 523264
        %v750 = vsel %vm748, %v723, 0
        %752 = vmatpush.bf16.msra.mxu0 0
        %753 = vmatpush.bf16.msra.mxu0 0
        %754 = vmatpush.bf16.msra.mxu0 0
        %755 = vmatpush.bf16.msra.mxu0 0
        %756 = vmatpush.bf16.msra.mxu0 %v743
        %757 = vmatpush.bf16.msra.mxu0 %v742
        %758 = vmatpush.bf16.msra.mxu0 %v741
        %759 = vmatpush.bf16.msra.mxu0 %v740
        %760 = vmatmul.bf16.gmra.mxu0 %v750
        %v761 = vpop.f32.mrf.mxu0
        %v762 = vadd.f32 %v717, %v761
        %v763 = vpop.f32.mrf.mxu0
        %v764 = vadd.f32 %v717, %v763
        %765 = vdwg.mxu0
        %v766 = vmul.f32 %v762, 0.5
        %v767 = vmul.f32 %v764, 0.5
        %v768 = vmul.f32 %v762, %v762
        %v769 = vmul.f32 %v764, %v764
        %v770 = vmul.f32 %v768, %v762
        %v771 = vmul.f32 %v769, %v764
        %v772 = vmul.f32 %v770, 0.044715
        %v773 = vmul.f32 %v771, 0.044715
        %v774 = vadd.f32 %v762, %v772
        %v775 = vadd.f32 %v764, %v773
        %v776 = vmul.f32 %v774, 0.7978846
        %v777 = vmul.f32 %v775, 0.7978846
        %v778 = vtanh.pop %v776
        %v779 = vtanh.pop %v777
        %v780 = vadd.f32 %v778, 1.0
        %v781 = vadd.f32 %v779, 1.0
        %v782 = vmul.f32 %v766, %v780
        %v783 = vmul.f32 %v767, %v781
        %v784 = vpack.c.bf16 %v783, %v782
        %v785 = vld [vmem:[#allocation2] sm:$0xff]
        %v786 = vld [vmem:[#allocation2 + $0x8] sm:$0xff]
        %v787 = vld [vmem:[%s556] sm:$0xf]
        %v788 = vld [vmem:[%s556 + $0x4] sm:$0xf]
        %v789 = vld [vmem:[%s556 + $0x8] sm:$0xf]
        %v790 = vld [vmem:[%s556 + $0xc] sm:$0xf]
        %v791 = vld [vmem:[%s556 + $0x10] sm:$0xf]
        %v792 = vld [vmem:[%s556 + $0x14] sm:$0xf]
        %v793 = vld [vmem:[%s556 + $0x18] sm:$0xf]
        %v794 = vld [vmem:[%s556 + $0x1c] sm:$0xf]
        %v795 = vld [vmem:[%s556 + $0x20] sm:$0xf]
        %v796 = vld [vmem:[%s556 + $0x24] sm:$0xf]
        %v797 = vld [vmem:[%s556 + $0x28] sm:$0xf]
        %v798 = vld [vmem:[%s556 + $0x2c] sm:$0xf]
        %v799 = vld [vmem:[%s556 + $0x30] sm:$0xf]
        %v800 = vld [vmem:[%s556 + $0x34] sm:$0xf]
        %v801 = vld [vmem:[%s556 + $0x38] sm:$0xf]
        %v802 = vld [vmem:[%s556 + $0x3c] sm:$0xf]
        %v819 = vunpack.c.l.b16 %v787
        %v820 = vunpack.c.l.b16 %v788
        %v821 = vunpack.c.l.b16 %v789
        %v822 = vunpack.c.l.b16 %v790
        %v823 = vunpack.c.l.b16 %v791
        %v824 = vunpack.c.l.b16 %v792
        %v825 = vunpack.c.l.b16 %v793
        %v826 = vunpack.c.l.b16 %v794
        %v827 = vunpack.c.l.b16 %v795
        %v828 = vunpack.c.l.b16 %v796
        %v829 = vunpack.c.l.b16 %v797
        %v830 = vunpack.c.l.b16 %v798
        %v831 = vunpack.c.l.b16 %v799
        %v832 = vunpack.c.l.b16 %v800
        %v833 = vunpack.c.l.b16 %v801
        %v834 = vunpack.c.l.b16 %v802
        %v835 = vpack.c.b16 %v820, %v819
        %v836 = vpack.c.b16 %v822, %v821
        %v837 = vpack.c.b16 %v824, %v823
        %v838 = vpack.c.b16 %v826, %v825
        %v839 = vpack.c.b16 %v828, %v827
        %v840 = vpack.c.b16 %v830, %v829
        %v841 = vpack.c.b16 %v832, %v831
        %v842 = vpack.c.b16 %v834, %v833
        %851 = vmatpush.bf16.msra.mxu0 %v842
        %852 = vmatpush.bf16.msra.mxu0 %v841
        %853 = vmatpush.bf16.msra.mxu0 %v840
        %854 = vmatpush.bf16.msra.mxu0 %v839
        %855 = vmatpush.bf16.msra.mxu0 %v838
        %856 = vmatpush.bf16.msra.mxu0 %v837
        %857 = vmatpush.bf16.msra.mxu0 %v836
        %858 = vmatpush.bf16.msra.mxu0 %v835
        %859 = vmatmul.bf16.gmra.mxu0 %v784
        %v860 = vpop.f32.mrf.mxu0
        %v861 = vadd.f32 0.0, %v860
        %v862 = vpop.f32.mrf.mxu0
        %v863 = vadd.f32 0.0, %v862
        %864 = vdwg.mxu0
        %v865 = vadd.f32 %v785, %v861
        %v866 = vadd.f32 %v786, %v863
        %867 = vst.msk [vmem:[#allocation2] sm:$0xff] %vm748, %v865
        %868 = vst.msk [vmem:[#allocation2 + $0x8] sm:$0xff] %vm748, %v866
        %p869 = scmp.eq.s32.totalorder %s31, 1
        // Predicated region
        $region106: #{phi_block.5} parent=96 // pred_check
          %p870 = pneg %p869
        $region107: #{phi_block.5} parent=96 // pred_check_branch
          %872 = sbr.rel (%p870) target = $region109
        $region108: #{phi_block.5} parent=96 // pred_region
          %v873 = vld [vmem:[#allocation2] sm:$0xff]
          %v874 = vld [vmem:[#allocation2 + $0x8] sm:$0xff]
          %875 = vst.msk [vmem:[%s528] sm:$0xff] %vm748, %v873
          %876 = vst.msk [vmem:[%s528 + $0x8] sm:$0xff] %vm748, %v874
        $region109: #{phi_block.5} parent=96 // pred_fallthru
          _
        %s877 = sand.u32 %s292, 1
        %s878 = scalar_lea.sflag [#allocation6], %s877
        %s879 = sand.u32 %s292, 1
        %s880 = smul.addr %s879, 16
        %s881 = scalar_lea.vmem [#allocation5], %s880
        // Predicated region
        $region110: #{phi_block.5} parent=96 // pred_check
          %p882 = pneg %p302
        $region111: #{phi_block.5} parent=96 // pred_check_branch
          %884 = sbr.rel (%p882) target = $region113
        $region112: #{phi_block.5} parent=96 // pred_region
          %s885 = smul.u32 2, %s30
          %887 = vsyncadd %s878, 0
          %s888 = smul.addr %s29, 4
          %s889 = sadd.s32 %s885, %s888
          %s890 = smul.addr %s889, 8
          %s891 = scalar_lea.hbm %s10, %s890
          %s892 = sshll.u32 %s881, 4
          %s893 = int_to_ptr.vmem [resolvable:$true] %s892
          %s894 = sshll.u32 %s891, 4
          %s895 = int_to_ptr.hbm [resolvable:$true] %s894
          %900 = dma.vmem_to_hbm [thread:$0]  %s893, 256, %s895, %s878, 128, 128, 8
        $region113: #{phi_block.5} parent=96 // pred_fallthru
          _
      $region97: #{phi_block.5} parent=5 // pred_fallthru
        _
      %p901 = scmp.le.s32.totalorder 2, %s19
      // Predicated region
      $region114: #{phi_block.5} parent=5 // pred_check
        %p902 = pneg %p901
      $region115: #{phi_block.5} parent=5 // pred_check_branch
        %904 = sbr.rel (%p902) target = $region117
      $region116: #{phi_block.5} parent=5 // pred_region
        %s905 = ssub.s32 %s19, 2
        // Predicated region
        $region118: #{phi_block.5} parent=116 // pred_check
          %p906 = pneg %p308
        $region119: #{phi_block.5} parent=116 // pred_check_branch
          %908 = sbr.rel (%p906) target = $region121
        $region120: #{phi_block.5} parent=116 // pred_region
          %s909 = sand.u32 %s293, 1
          %s910 = scalar_lea.sflag [#allocation6], %s909
          %s911 = sand.u32 %s293, 1
          %s912 = smul.addr %s911, 16
          %s913 = scalar_lea.vmem [#allocation5], %s912
          %915 = dma.done %s910, 256
        $region121: #{phi_block.5} parent=116 // pred_fallthru
          _
      $region117: #{phi_block.5} parent=5 // pred_fallthru
        _
    $region6: #{phi_block.5} parent=1 // loop_footer
      %s23 = sadd.s32 1, %s19
    $region7: #{phi_block.5} parent=1 // loop_footer_branch
      %18 = sbr.rel target = $region3
    $region8: #{phi_block.5} parent=1 // loop_exit
      _
    %916 = vsyncpa [#allocation6], 1
    %s917 = scalar_lea.sflag [#allocation6], 1
    %918 = vsyncpa %s917, 1

</llo_original>
